<compile_context>
chip_gen: v5e
topology: v5e:2x2
jax: 0.10.0
libtpu: 0.0.40
codegen_flags: <defaults>
</compile_context>

<pallas_src>
import numpy as np
import jax
import jax.numpy as jnp
from jax.experimental import pallas as pl
from jax.experimental.pallas import tpu as pltpu

# ---------------- config consistent with the module ----------------
B = 2                          # batch
H = W = 8                      # spatial
C = 32                         # input_dim == output_dim
HEAD_DIM = 8
N_HEADS = C // HEAD_DIM        # 4
WIN = 4                        # window_size
NP_TOK = WIN * WIN             # tokens per window (16)
NW = (H // WIN) * (W // WIN)   # windows per image (4)
NTOK = NW * NP_TOK             # tokens per image (64)
MTOK = B * NTOK                # tokens per kernel step (128) -> full MXU M-dim
SHIFT = WIN // 2
SCALE = HEAD_DIM ** (-0.5)
HIDDEN = 4 * C
EPS = 1e-5
BLOCK_TYPE = "SW"              # 'W' or 'SW' (SW exercises roll + attention mask)


# ---------------- in-kernel helpers ----------------
def _normalize(x):
    # LayerNorm without affine (gamma/beta are folded into the next linear layer).
    mu = jnp.mean(x, axis=-1, keepdims=True)
    var = jnp.mean((x - mu) * (x - mu), axis=-1, keepdims=True)
    return (x - mu) * jax.lax.rsqrt(var + EPS)


# ---------------- fused Block kernel: both images in one step ----------------
def block_kernel(x_ref, bias_ref, wqkv_ref, bqkv_ref, wo_ref, bo_ref,
                 w1_ref, b1_ref, w2_ref, b2_ref, o_ref):
    x = x_ref[...]                                          # [MTOK, C] f32 (window-major tokens, 2 images)

    # ---- attention branch: LN1 (affine folded) + QKV + MHSA + out-proj + residual
    xn = _normalize(x).astype(jnp.bfloat16)
    qkv = jnp.dot(xn, wqkv_ref[...],
                  preferred_element_type=jnp.float32) + bqkv_ref[...]   # [MTOK, 3C] f32

    y_attn = jnp.zeros((MTOK, C), jnp.float32)
    for h in range(N_HEADS):                                # static unroll over heads
        qh = qkv[:, h * HEAD_DIM:(h + 1) * HEAD_DIM].astype(jnp.bfloat16)          # scale pre-folded
        kh = qkv[:, C + h * HEAD_DIM:C + (h + 1) * HEAD_DIM].astype(jnp.bfloat16)
        vh = qkv[:, 2 * C + h * HEAD_DIM:2 * C + (h + 1) * HEAD_DIM].astype(jnp.bfloat16)
        # NT matmul: contract last dim of both (no explicit transpose of kh).
        # bias_ref[h] is block-diagonal (per window, per image) with -1e30 on
        # cross-window / cross-image entries -> exactly per-window attention.
        sim = jax.lax.dot_general(qh, kh, (((1,), (1,)), ((), ())),
                                  preferred_element_type=jnp.float32)              # [MTOK, MTOK]
        sim = sim + bias_ref[h]
        m = jnp.max(sim, axis=-1, keepdims=True)
        p = jnp.exp(sim - m)
        p = p * pl.reciprocal(jnp.sum(p, axis=-1, keepdims=True), approx=True)
        # Associativity: (p @ v_h) @ Wo_rows_h == p @ (v_h @ Wo_rows_h).
        # Wo row slice is sublane-aligned; P-matmul output is 32 lanes wide.
        vwo = jnp.dot(vh, wo_ref[h * HEAD_DIM:(h + 1) * HEAD_DIM, :],
                      preferred_element_type=jnp.float32).astype(jnp.bfloat16)     # [MTOK, C]
        y_attn = y_attn + jnp.dot(p.astype(jnp.bfloat16), vwo,
                                  preferred_element_type=jnp.float32)

    y = x + y_attn + bo_ref[...]

    # ---- MLP branch: LN2 (affine folded) + Linear(C,4C) + GELU + Linear(4C,C) + residual
    yn = _normalize(y).astype(jnp.bfloat16)
    hid = jnp.dot(yn, w1_ref[...], preferred_element_type=jnp.float32) + b1_ref[...]
    # TODO(synk): tanh-approx GELU (EUP tanh); PyTorch nn.GELU() default is exact erf.
    hid = jax.nn.gelu(hid, approximate=True)
    out = jnp.dot(hid.astype(jnp.bfloat16), w2_ref[...],
                  preferred_element_type=jnp.float32) + b2_ref[...]
    # TODO(synk): output last dim is C=32 (<128 lanes -> masked vst); lane-dense
    # repack crosses the (8,128) tile and is not worth it at 16 KiB output size.
    o_ref[...] = y + out


def fused_block(xw, prep):
    """xw: [B*NTOK, C] f32 tokens in (image, window, in-window) order."""
    vmem = pl.BlockSpec(memory_space=pltpu.MemorySpace.VMEM)
    return pl.pallas_call(
        block_kernel,
        out_shape=jax.ShapeDtypeStruct(xw.shape, xw.dtype),
        in_specs=[vmem] * 10,          # everything is tiny (<0.5 MiB total): whole arrays in VMEM, no grid
        out_specs=vmem,
    )(xw, prep["bias"], prep["wqkv"], prep["bqkv"], prep["wo"], prep["bo"],
      prep["w1"], prep["b1"], prep["w2"], prep["b2"])


# ---------------- one-time host-side precompute ----------------
def relative_embedding(rel_params):
    # rel_params: [N_HEADS, 2*WIN-1, 2*WIN-1] -> [N_HEADS, NP_TOK, NP_TOK]
    cord = np.array([[i, j] for i in range(WIN) for j in range(WIN)])
    relation = cord[:, None, :] - cord[None, :, :] + WIN - 1
    return rel_params[:, relation[:, :, 0], relation[:, :, 1]]


def generate_mask_bias(block_type):
    hw, ww = H // WIN, W // WIN
    mask = np.zeros((hw, ww, WIN, WIN, WIN, WIN), dtype=bool)
    if block_type != "W":
        s = WIN - SHIFT
        mask[-1, :, :s, :, s:, :] = True
        mask[-1, :, s:, :, :s, :] = True
        mask[:, -1, :, :s, :, s:] = True
        mask[:, -1, :, s:, :, :s] = True
    mask = mask.reshape(NW, NP_TOK, NP_TOK)
    # -1e30 additive mask (not -inf): safe because every row keeps its in-window
    # (diagonal-block) entries unmasked in Swin SW masks, so softmax rows always
    # have finite entries.  Representable in bf16.
    return np.where(mask, -1e30, 0.0).astype(np.float32)


def token_permutation(block_type):
    """Combined cyclic-shift + window-partition permutation (and its inverse)
    as flat pixel-index gathers: one gather before the kernel, one after."""
    shift = SHIFT if block_type != "W" else 0
    hw, ww = H // WIN, W // WIN
    perm = np.zeros(NTOK, dtype=np.int32)
    t = 0
    for w1 in range(hw):
        for w2 in range(ww):
            for p1 in range(WIN):
                for p2 in range(WIN):
                    hs = (w1 * WIN + p1 + shift) % H       # torch.roll(-shift)
                    ws = (w2 * WIN + p2 + shift) % W
                    perm[t] = hs * W + ws
                    t += 1
    inv = np.zeros(H * W, dtype=np.int32)
    inv[perm] = np.arange(NTOK, dtype=np.int32)
    return perm, inv


def prepare_params(raw, block_type):
    """Fold LN affine + attention scale into weights, pre-combine rel-pos bias
    with the SW mask (and cross-image masking) into one block-diagonal
    [N_HEADS, MTOK, MTOK] bf16 bias, cast matmul weights to bf16, precompute
    the token permutation.  Runs once at init."""
    f32 = np.float32
    g1 = np.asarray(raw["g1"], f32).reshape(C)
    b1 = np.asarray(raw["b1"], f32).reshape(C)
    g2 = np.asarray(raw["g2"], f32).reshape(C)
    b2 = np.asarray(raw["b2"], f32).reshape(C)
    wqkv = np.asarray(raw["wqkv"], f32)
    bqkv = np.asarray(raw["bqkv"], f32).reshape(3 * C)
    wo = np.asarray(raw["wo"], f32)
    bo = np.asarray(raw["bo"], f32).reshape(C)
    w1 = np.asarray(raw["w1"], f32)
    bb1 = np.asarray(raw["bb1"], f32).reshape(HIDDEN)
    w2 = np.asarray(raw["w2"], f32)
    bb2 = np.asarray(raw["bb2"], f32).reshape(C)

    # LN(x)W + c = normalize(x) @ (diag(g) W) + (b @ W + c)
    wqkv_f = g1[:, None] * wqkv
    bqkv_f = bqkv + b1 @ wqkv
    w1_f = g2[:, None] * w1
    bb1_f = bb1 + b2 @ w1
    # fold 1/sqrt(head_dim) into the q columns of the QKV projection
    wqkv_f[:, :C] *= SCALE
    bqkv_f[:C] *= SCALE

    rel = relative_embedding(np.asarray(raw["rel"], f32))     # [N_HEADS, NP, NP]
    mask = generate_mask_bias(block_type)                     # [NW, NP, NP] additive
    bias = np.full((N_HEADS, MTOK, MTOK), -1e30, dtype=f32)   # cross-window / cross-image masked
    for img in range(B):
        for w in range(NW):
            off = img * NTOK + w * NP_TOK
            sl = slice(off, off + NP_TOK)
            bias[:, sl, sl] = rel + mask[w][None, :, :]

    perm, inv = token_permutation(block_type)

    return dict(
        bias=jnp.asarray(bias, jnp.bfloat16),                 # bf16: halves the largest operand
        wqkv=jnp.asarray(wqkv_f, jnp.bfloat16),
        bqkv=jnp.asarray(bqkv_f.reshape(1, 3 * C), jnp.float32),
        wo=jnp.asarray(wo, jnp.bfloat16),
        bo=jnp.asarray(bo.reshape(1, C), jnp.float32),
        w1=jnp.asarray(w1_f, jnp.bfloat16),
        b1=jnp.asarray(bb1_f.reshape(1, HIDDEN), jnp.float32),
        w2=jnp.asarray(w2, jnp.bfloat16),
        b2=jnp.asarray(bb2.reshape(1, C), jnp.float32),
        perm=jnp.asarray(perm, jnp.int32),
        inv_perm=jnp.asarray(inv, jnp.int32),
    )


# ---------------- forward (one gather on each side of the fused kernel) ----------------
def block_forward(x, prep):
    b, h, w, c = x.shape
    x_flat = x.reshape(b, h * w, c)
    # combined cyclic shift + window partition = one token-gather
    xw = jnp.take(x_flat, prep["perm"], axis=1).reshape(b * NTOK, c)
    yw = fused_block(xw, prep)     # xw + attn(ln1), then + mlp(ln2), fused
    # inverse permutation (reverse window partition + reverse shift) = one gather
    y = jnp.take(yw.reshape(b, NTOK, c), prep["inv_perm"], axis=1).reshape(b, h, w, c)
    return y


# ---------------- deterministic synthetic parameters ----------------
def init_raw_params(key):
    ks = jax.random.split(key, 6)
    nrm = lambda k, shape: (0.02 * jax.random.normal(k, shape)).astype(jnp.float32)
    return dict(
        g1=jnp.ones((C,), jnp.float32), b1=jnp.zeros((C,), jnp.float32),
        g2=jnp.ones((C,), jnp.float32), b2=jnp.zeros((C,), jnp.float32),
        wqkv=nrm(ks[0], (C, 3 * C)), bqkv=jnp.zeros((3 * C,), jnp.float32),
        wo=nrm(ks[1], (C, C)), bo=jnp.zeros((C,), jnp.float32),
        rel=nrm(ks[2], (N_HEADS, 2 * WIN - 1, 2 * WIN - 1)),
        w1=nrm(ks[3], (C, HIDDEN)), bb1=jnp.zeros((HIDDEN,), jnp.float32),
        w2=nrm(ks[4], (HIDDEN, C)), bb2=jnp.zeros((C,), jnp.float32),
    )


if __name__ == "__main__":
    key = jax.random.PRNGKey(0)
    pkey, xkey = jax.random.split(key)
    raw = init_raw_params(pkey)
    prep = prepare_params(raw, BLOCK_TYPE)     # one-time fold / bias / permutation precompute
    x = jax.random.normal(xkey, (B, H, W, C), dtype=jnp.float32)

    out = block_forward(x, prep)
    out = jax.block_until_ready(out)
    assert out.shape == (B, H, W, C) and out.dtype == jnp.float32
    assert bool(jnp.all(jnp.isfinite(out)))
    print("KERNEL_OK")
</pallas_src>

<mosaic_0001>
module attributes {stable_mosaic.version = 11 : i64} {
  func.func @block_kernel(%arg0: memref<128x32xf32, #tpu.memory_space<vmem>>, %arg1: memref<4x128x128xbf16, #tpu.memory_space<vmem>>, %arg2: memref<32x96xbf16, #tpu.memory_space<vmem>>, %arg3: memref<1x96xf32, #tpu.memory_space<vmem>>, %arg4: memref<32x32xbf16, #tpu.memory_space<vmem>>, %arg5: memref<1x32xf32, #tpu.memory_space<vmem>>, %arg6: memref<32x128xbf16, #tpu.memory_space<vmem>>, %arg7: memref<1x128xf32, #tpu.memory_space<vmem>>, %arg8: memref<128x32xbf16, #tpu.memory_space<vmem>>, %arg9: memref<1x32xf32, #tpu.memory_space<vmem>>, %arg10: memref<128x32xf32, #tpu.memory_space<vmem>>) attributes {dimension_semantics = [], scalar_prefetch = 0 : i64, scratch_operands = 0 : i64, tpu.core_type = #tpu.core_type<tc>} {
    %c0 = arith.constant 0 : index
    %c0_0 = arith.constant 0 : index
    %0 = vector.load %arg0[%c0, %c0_0] : memref<128x32xf32, #tpu.memory_space<vmem>>, vector<128x32xf32>
    %cst = arith.constant dense<0.000000e+00> : vector<128xf32>
    %1 = vector.multi_reduction <add>, %0, %cst [1] : vector<128x32xf32> to vector<128xf32>
    %2 = vector.shape_cast %1 : vector<128xf32> to vector<128x1xf32>
    %cst_1 = arith.constant 3.200000e+01 : f32
    %3 = vector.broadcast %cst_1 : f32 to vector<128x1xf32>
    %4 = arith.divf %2, %3 : vector<128x1xf32>
    %5 = vector.broadcast %4 : vector<128x1xf32> to vector<128x32xf32>
    %6 = arith.subf %0, %5 : vector<128x32xf32>
    %7 = vector.broadcast %4 : vector<128x1xf32> to vector<128x32xf32>
    %8 = arith.subf %0, %7 : vector<128x32xf32>
    %9 = arith.mulf %6, %8 : vector<128x32xf32>
    %cst_2 = arith.constant dense<0.000000e+00> : vector<128xf32>
    %10 = vector.multi_reduction <add>, %9, %cst_2 [1] : vector<128x32xf32> to vector<128xf32>
    %11 = vector.shape_cast %10 : vector<128xf32> to vector<128x1xf32>
    %cst_3 = arith.constant 3.200000e+01 : f32
    %12 = vector.broadcast %cst_3 : f32 to vector<128x1xf32>
    %13 = arith.divf %11, %12 : vector<128x1xf32>
    %14 = vector.broadcast %4 : vector<128x1xf32> to vector<128x32xf32>
    %15 = arith.subf %0, %14 : vector<128x32xf32>
    %cst_4 = arith.constant 9.99999974E-6 : f32
    %16 = vector.broadcast %cst_4 : f32 to vector<128x1xf32>
    %17 = arith.addf %13, %16 : vector<128x1xf32>
    %18 = math.rsqrt %17 : vector<128x1xf32>
    %19 = vector.broadcast %18 : vector<128x1xf32> to vector<128x32xf32>
    %20 = arith.mulf %15, %19 : vector<128x32xf32>
    %21 = arith.truncf %20 : vector<128x32xf32> to vector<128x32xbf16>
    %c0_5 = arith.constant 0 : index
    %c0_6 = arith.constant 0 : index
    %22 = vector.load %arg2[%c0_5, %c0_6] : memref<32x96xbf16, #tpu.memory_space<vmem>>, vector<32x96xbf16>
    %cst_7 = arith.constant dense<0.000000e+00> : vector<128x96xf32>
    %23 = tpu.matmul %21, %22, %cst_7 {dimension_numbers = #tpu.dot_dimension_numbers<[1], [0], [0], [1], [0, 0, 1, 1], [], []>} : vector<128x32xbf16>, vector<32x96xbf16>, vector<128x96xf32> -> vector<128x96xf32>
    %c0_8 = arith.constant 0 : index
    %c0_9 = arith.constant 0 : index
    %24 = vector.load %arg3[%c0_8, %c0_9] : memref<1x96xf32, #tpu.memory_space<vmem>>, vector<1x96xf32>
    %25 = vector.broadcast %24 : vector<1x96xf32> to vector<128x96xf32>
    %26 = arith.addf %23, %25 : vector<128x96xf32>
    %cst_10 = arith.constant 0.000000e+00 : f32
    %27 = vector.broadcast %cst_10 : f32 to vector<128x32xf32>
    %28 = vector.extract_strided_slice %26 {offsets = [0, 0], sizes = [128, 8], strides = [1, 1]} : vector<128x96xf32> to vector<128x8xf32>
    %29 = arith.truncf %28 : vector<128x8xf32> to vector<128x8xbf16>
    %30 = vector.extract_strided_slice %26 {offsets = [0, 32], sizes = [128, 8], strides = [1, 1]} : vector<128x96xf32> to vector<128x8xf32>
    %31 = arith.truncf %30 : vector<128x8xf32> to vector<128x8xbf16>
    %32 = vector.extract_strided_slice %26 {offsets = [0, 64], sizes = [128, 8], strides = [1, 1]} : vector<128x96xf32> to vector<128x8xf32>
    %33 = arith.truncf %32 : vector<128x8xf32> to vector<128x8xbf16>
    %cst_11 = arith.constant dense<0.000000e+00> : vector<128x128xf32>
    %34 = tpu.matmul %29, %31, %cst_11 {dimension_numbers = #tpu.dot_dimension_numbers<[1], [1], [0], [0], [0, 0, 1, 0], [], []>} : vector<128x8xbf16>, vector<128x8xbf16>, vector<128x128xf32> -> vector<128x128xf32>
    %c0_12 = arith.constant 0 : index
    %c0_13 = arith.constant 0 : index
    %c0_14 = arith.constant 0 : index
    %35 = vector.load %arg1[%c0_12, %c0_13, %c0_14] : memref<4x128x128xbf16, #tpu.memory_space<vmem>>, vector<1x128x128xbf16>
    %36 = vector.shape_cast %35 : vector<1x128x128xbf16> to vector<128x128xbf16>
    %37 = arith.extf %36 : vector<128x128xbf16> to vector<128x128xf32>
    %38 = arith.addf %34, %37 : vector<128x128xf32>
    %cst_15 = arith.constant dense<0xFF800000> : vector<128xf32>
    %39 = vector.multi_reduction <maximumf>, %38, %cst_15 [1] : vector<128x128xf32> to vector<128xf32>
    %40 = vector.shape_cast %39 : vector<128xf32> to vector<128x1xf32>
    %41 = vector.broadcast %40 : vector<128x1xf32> to vector<128x128xf32>
    %42 = arith.subf %38, %41 : vector<128x128xf32>
    %43 = math.exp %42 : vector<128x128xf32>
    %cst_16 = arith.constant dense<0.000000e+00> : vector<128xf32>
    %44 = vector.multi_reduction <add>, %43, %cst_16 [1] : vector<128x128xf32> to vector<128xf32>
    %45 = vector.shape_cast %44 : vector<128xf32> to vector<128x1xf32>
    %46 = tpu.reciprocal %45 {approx = true} : vector<128x1xf32> -> vector<128x1xf32>
    %47 = vector.broadcast %46 : vector<128x1xf32> to vector<128x128xf32>
    %48 = arith.mulf %43, %47 : vector<128x128xf32>
    %c0_17 = arith.constant 0 : index
    %c0_18 = arith.constant 0 : index
    %49 = vector.load %arg4[%c0_17, %c0_18] : memref<32x32xbf16, #tpu.memory_space<vmem>>, vector<8x32xbf16>
    %cst_19 = arith.constant dense<0.000000e+00> : vector<128x32xf32>
    %50 = tpu.matmul %33, %49, %cst_19 {dimension_numbers = #tpu.dot_dimension_numbers<[1], [0], [0], [1], [0, 0, 1, 1], [], []>} : vector<128x8xbf16>, vector<8x32xbf16>, vector<128x32xf32> -> vector<128x32xf32>
    %51 = arith.truncf %50 : vector<128x32xf32> to vector<128x32xbf16>
    %52 = arith.truncf %48 : vector<128x128xf32> to vector<128x128xbf16>
    %cst_20 = arith.constant dense<0.000000e+00> : vector<128x32xf32>
    %53 = tpu.matmul %52, %51, %cst_20 {dimension_numbers = #tpu.dot_dimension_numbers<[1], [0], [0], [1], [0, 0, 1, 1], [], []>} : vector<128x128xbf16>, vector<128x32xbf16>, vector<128x32xf32> -> vector<128x32xf32>
    %54 = arith.addf %27, %53 : vector<128x32xf32>
    %55 = vector.extract_strided_slice %26 {offsets = [0, 8], sizes = [128, 8], strides = [1, 1]} : vector<128x96xf32> to vector<128x8xf32>
    %56 = arith.truncf %55 : vector<128x8xf32> to vector<128x8xbf16>
    %57 = vector.extract_strided_slice %26 {offsets = [0, 40], sizes = [128, 8], strides = [1, 1]} : vector<128x96xf32> to vector<128x8xf32>
    %58 = arith.truncf %57 : vector<128x8xf32> to vector<128x8xbf16>
    %59 = vector.extract_strided_slice %26 {offsets = [0, 72], sizes = [128, 8], strides = [1, 1]} : vector<128x96xf32> to vector<128x8xf32>
    %60 = arith.truncf %59 : vector<128x8xf32> to vector<128x8xbf16>
    %cst_21 = arith.constant dense<0.000000e+00> : vector<128x128xf32>
    %61 = tpu.matmul %56, %58, %cst_21 {dimension_numbers = #tpu.dot_dimension_numbers<[1], [1], [0], [0], [0, 0, 1, 0], [], []>} : vector<128x8xbf16>, vector<128x8xbf16>, vector<128x128xf32> -> vector<128x128xf32>
    %c1 = arith.constant 1 : index
    %c0_22 = arith.constant 0 : index
    %c0_23 = arith.constant 0 : index
    %62 = vector.load %arg1[%c1, %c0_22, %c0_23] : memref<4x128x128xbf16, #tpu.memory_space<vmem>>, vector<1x128x128xbf16>
    %63 = vector.shape_cast %62 : vector<1x128x128xbf16> to vector<128x128xbf16>
    %64 = arith.extf %63 : vector<128x128xbf16> to vector<128x128xf32>
    %65 = arith.addf %61, %64 : vector<128x128xf32>
    %cst_24 = arith.constant dense<0xFF800000> : vector<128xf32>
    %66 = vector.multi_reduction <maximumf>, %65, %cst_24 [1] : vector<128x128xf32> to vector<128xf32>
    %67 = vector.shape_cast %66 : vector<128xf32> to vector<128x1xf32>
    %68 = vector.broadcast %67 : vector<128x1xf32> to vector<128x128xf32>
    %69 = arith.subf %65, %68 : vector<128x128xf32>
    %70 = math.exp %69 : vector<128x128xf32>
    %cst_25 = arith.constant dense<0.000000e+00> : vector<128xf32>
    %71 = vector.multi_reduction <add>, %70, %cst_25 [1] : vector<128x128xf32> to vector<128xf32>
    %72 = vector.shape_cast %71 : vector<128xf32> to vector<128x1xf32>
    %73 = tpu.reciprocal %72 {approx = true} : vector<128x1xf32> -> vector<128x1xf32>
    %74 = vector.broadcast %73 : vector<128x1xf32> to vector<128x128xf32>
    %75 = arith.mulf %70, %74 : vector<128x128xf32>
    %c8 = arith.constant 8 : index
    %c0_26 = arith.constant 0 : index
    %76 = vector.load %arg4[%c8, %c0_26] : memref<32x32xbf16, #tpu.memory_space<vmem>>, vector<8x32xbf16>
    %cst_27 = arith.constant dense<0.000000e+00> : vector<128x32xf32>
    %77 = tpu.matmul %60, %76, %cst_27 {dimension_numbers = #tpu.dot_dimension_numbers<[1], [0], [0], [1], [0, 0, 1, 1], [], []>} : vector<128x8xbf16>, vector<8x32xbf16>, vector<128x32xf32> -> vector<128x32xf32>
    %78 = arith.truncf %77 : vector<128x32xf32> to vector<128x32xbf16>
    %79 = arith.truncf %75 : vector<128x128xf32> to vector<128x128xbf16>
    %cst_28 = arith.constant dense<0.000000e+00> : vector<128x32xf32>
    %80 = tpu.matmul %79, %78, %cst_28 {dimension_numbers = #tpu.dot_dimension_numbers<[1], [0], [0], [1], [0, 0, 1, 1], [], []>} : vector<128x128xbf16>, vector<128x32xbf16>, vector<128x32xf32> -> vector<128x32xf32>
    %81 = arith.addf %54, %80 : vector<128x32xf32>
    %82 = vector.extract_strided_slice %26 {offsets = [0, 16], sizes = [128, 8], strides = [1, 1]} : vector<128x96xf32> to vector<128x8xf32>
    %83 = arith.truncf %82 : vector<128x8xf32> to vector<128x8xbf16>
    %84 = vector.extract_strided_slice %26 {offsets = [0, 48], sizes = [128, 8], strides = [1, 1]} : vector<128x96xf32> to vector<128x8xf32>
    %85 = arith.truncf %84 : vector<128x8xf32> to vector<128x8xbf16>
    %86 = vector.extract_strided_slice %26 {offsets = [0, 80], sizes = [128, 8], strides = [1, 1]} : vector<128x96xf32> to vector<128x8xf32>
    %87 = arith.truncf %86 : vector<128x8xf32> to vector<128x8xbf16>
    %cst_29 = arith.constant dense<0.000000e+00> : vector<128x128xf32>
    %88 = tpu.matmul %83, %85, %cst_29 {dimension_numbers = #tpu.dot_dimension_numbers<[1], [1], [0], [0], [0, 0, 1, 0], [], []>} : vector<128x8xbf16>, vector<128x8xbf16>, vector<128x128xf32> -> vector<128x128xf32>
    %c2 = arith.constant 2 : index
    %c0_30 = arith.constant 0 : index
    %c0_31 = arith.constant 0 : index
    %89 = vector.load %arg1[%c2, %c0_30, %c0_31] : memref<4x128x128xbf16, #tpu.memory_space<vmem>>, vector<1x128x128xbf16>
    %90 = vector.shape_cast %89 : vector<1x128x128xbf16> to vector<128x128xbf16>
    %91 = arith.extf %90 : vector<128x128xbf16> to vector<128x128xf32>
    %92 = arith.addf %88, %91 : vector<128x128xf32>
    %cst_32 = arith.constant dense<0xFF800000> : vector<128xf32>
    %93 = vector.multi_reduction <maximumf>, %92, %cst_32 [1] : vector<128x128xf32> to vector<128xf32>
    %94 = vector.shape_cast %93 : vector<128xf32> to vector<128x1xf32>
    %95 = vector.broadcast %94 : vector<128x1xf32> to vector<128x128xf32>
    %96 = arith.subf %92, %95 : vector<128x128xf32>
    %97 = math.exp %96 : vector<128x128xf32>
    %cst_33 = arith.constant dense<0.000000e+00> : vector<128xf32>
    %98 = vector.multi_reduction <add>, %97, %cst_33 [1] : vector<128x128xf32> to vector<128xf32>
    %99 = vector.shape_cast %98 : vector<128xf32> to vector<128x1xf32>
    %100 = tpu.reciprocal %99 {approx = true} : vector<128x1xf32> -> vector<128x1xf32>
    %101 = vector.broadcast %100 : vector<128x1xf32> to vector<128x128xf32>
    %102 = arith.mulf %97, %101 : vector<128x128xf32>
    %c16 = arith.constant 16 : index
    %c0_34 = arith.constant 0 : index
    %103 = vector.load %arg4[%c16, %c0_34] : memref<32x32xbf16, #tpu.memory_space<vmem>>, vector<8x32xbf16>
    %cst_35 = arith.constant dense<0.000000e+00> : vector<128x32xf32>
    %104 = tpu.matmul %87, %103, %cst_35 {dimension_numbers = #tpu.dot_dimension_numbers<[1], [0], [0], [1], [0, 0, 1, 1], [], []>} : vector<128x8xbf16>, vector<8x32xbf16>, vector<128x32xf32> -> vector<128x32xf32>
    %105 = arith.truncf %104 : vector<128x32xf32> to vector<128x32xbf16>
    %106 = arith.truncf %102 : vector<128x128xf32> to vector<128x128xbf16>
    %cst_36 = arith.constant dense<0.000000e+00> : vector<128x32xf32>
    %107 = tpu.matmul %106, %105, %cst_36 {dimension_numbers = #tpu.dot_dimension_numbers<[1], [0], [0], [1], [0, 0, 1, 1], [], []>} : vector<128x128xbf16>, vector<128x32xbf16>, vector<128x32xf32> -> vector<128x32xf32>
    %108 = arith.addf %81, %107 : vector<128x32xf32>
    %109 = vector.extract_strided_slice %26 {offsets = [0, 24], sizes = [128, 8], strides = [1, 1]} : vector<128x96xf32> to vector<128x8xf32>
    %110 = arith.truncf %109 : vector<128x8xf32> to vector<128x8xbf16>
    %111 = vector.extract_strided_slice %26 {offsets = [0, 56], sizes = [128, 8], strides = [1, 1]} : vector<128x96xf32> to vector<128x8xf32>
    %112 = arith.truncf %111 : vector<128x8xf32> to vector<128x8xbf16>
    %113 = vector.extract_strided_slice %26 {offsets = [0, 88], sizes = [128, 8], strides = [1, 1]} : vector<128x96xf32> to vector<128x8xf32>
    %114 = arith.truncf %113 : vector<128x8xf32> to vector<128x8xbf16>
    %cst_37 = arith.constant dense<0.000000e+00> : vector<128x128xf32>
    %115 = tpu.matmul %110, %112, %cst_37 {dimension_numbers = #tpu.dot_dimension_numbers<[1], [1], [0], [0], [0, 0, 1, 0], [], []>} : vector<128x8xbf16>, vector<128x8xbf16>, vector<128x128xf32> -> vector<128x128xf32>
    %c3 = arith.constant 3 : index
    %c0_38 = arith.constant 0 : index
    %c0_39 = arith.constant 0 : index
    %116 = vector.load %arg1[%c3, %c0_38, %c0_39] : memref<4x128x128xbf16, #tpu.memory_space<vmem>>, vector<1x128x128xbf16>
    %117 = vector.shape_cast %116 : vector<1x128x128xbf16> to vector<128x128xbf16>
    %118 = arith.extf %117 : vector<128x128xbf16> to vector<128x128xf32>
    %119 = arith.addf %115, %118 : vector<128x128xf32>
    %cst_40 = arith.constant dense<0xFF800000> : vector<128xf32>
    %120 = vector.multi_reduction <maximumf>, %119, %cst_40 [1] : vector<128x128xf32> to vector<128xf32>
    %121 = vector.shape_cast %120 : vector<128xf32> to vector<128x1xf32>
    %122 = vector.broadcast %121 : vector<128x1xf32> to vector<128x128xf32>
    %123 = arith.subf %119, %122 : vector<128x128xf32>
    %124 = math.exp %123 : vector<128x128xf32>
    %cst_41 = arith.constant dense<0.000000e+00> : vector<128xf32>
    %125 = vector.multi_reduction <add>, %124, %cst_41 [1] : vector<128x128xf32> to vector<128xf32>
    %126 = vector.shape_cast %125 : vector<128xf32> to vector<128x1xf32>
    %127 = tpu.reciprocal %126 {approx = true} : vector<128x1xf32> -> vector<128x1xf32>
    %128 = vector.broadcast %127 : vector<128x1xf32> to vector<128x128xf32>
    %129 = arith.mulf %124, %128 : vector<128x128xf32>
    %c24 = arith.constant 24 : index
    %c0_42 = arith.constant 0 : index
    %130 = vector.load %arg4[%c24, %c0_42] : memref<32x32xbf16, #tpu.memory_space<vmem>>, vector<8x32xbf16>
    %cst_43 = arith.constant dense<0.000000e+00> : vector<128x32xf32>
    %131 = tpu.matmul %114, %130, %cst_43 {dimension_numbers = #tpu.dot_dimension_numbers<[1], [0], [0], [1], [0, 0, 1, 1], [], []>} : vector<128x8xbf16>, vector<8x32xbf16>, vector<128x32xf32> -> vector<128x32xf32>
    %132 = arith.truncf %131 : vector<128x32xf32> to vector<128x32xbf16>
    %133 = arith.truncf %129 : vector<128x128xf32> to vector<128x128xbf16>
    %cst_44 = arith.constant dense<0.000000e+00> : vector<128x32xf32>
    %134 = tpu.matmul %133, %132, %cst_44 {dimension_numbers = #tpu.dot_dimension_numbers<[1], [0], [0], [1], [0, 0, 1, 1], [], []>} : vector<128x128xbf16>, vector<128x32xbf16>, vector<128x32xf32> -> vector<128x32xf32>
    %135 = arith.addf %108, %134 : vector<128x32xf32>
    %136 = arith.addf %0, %135 : vector<128x32xf32>
    %c0_45 = arith.constant 0 : index
    %c0_46 = arith.constant 0 : index
    %137 = vector.load %arg5[%c0_45, %c0_46] : memref<1x32xf32, #tpu.memory_space<vmem>>, vector<1x32xf32>
    %138 = vector.broadcast %137 : vector<1x32xf32> to vector<128x32xf32>
    %139 = arith.addf %136, %138 : vector<128x32xf32>
    %cst_47 = arith.constant dense<0.000000e+00> : vector<128xf32>
    %140 = vector.multi_reduction <add>, %139, %cst_47 [1] : vector<128x32xf32> to vector<128xf32>
    %141 = vector.shape_cast %140 : vector<128xf32> to vector<128x1xf32>
    %cst_48 = arith.constant 3.200000e+01 : f32
    %142 = vector.broadcast %cst_48 : f32 to vector<128x1xf32>
    %143 = arith.divf %141, %142 : vector<128x1xf32>
    %144 = vector.broadcast %143 : vector<128x1xf32> to vector<128x32xf32>
    %145 = arith.subf %139, %144 : vector<128x32xf32>
    %146 = vector.broadcast %143 : vector<128x1xf32> to vector<128x32xf32>
    %147 = arith.subf %139, %146 : vector<128x32xf32>
    %148 = arith.mulf %145, %147 : vector<128x32xf32>
    %cst_49 = arith.constant dense<0.000000e+00> : vector<128xf32>
    %149 = vector.multi_reduction <add>, %148, %cst_49 [1] : vector<128x32xf32> to vector<128xf32>
    %150 = vector.shape_cast %149 : vector<128xf32> to vector<128x1xf32>
    %cst_50 = arith.constant 3.200000e+01 : f32
    %151 = vector.broadcast %cst_50 : f32 to vector<128x1xf32>
    %152 = arith.divf %150, %151 : vector<128x1xf32>
    %153 = vector.broadcast %143 : vector<128x1xf32> to vector<128x32xf32>
    %154 = arith.subf %139, %153 : vector<128x32xf32>
    %cst_51 = arith.constant 9.99999974E-6 : f32
    %155 = vector.broadcast %cst_51 : f32 to vector<128x1xf32>
    %156 = arith.addf %152, %155 : vector<128x1xf32>
    %157 = math.rsqrt %156 : vector<128x1xf32>
    %158 = vector.broadcast %157 : vector<128x1xf32> to vector<128x32xf32>
    %159 = arith.mulf %154, %158 : vector<128x32xf32>
    %160 = arith.truncf %159 : vector<128x32xf32> to vector<128x32xbf16>
    %c0_52 = arith.constant 0 : index
    %c0_53 = arith.constant 0 : index
    %161 = vector.load %arg6[%c0_52, %c0_53] : memref<32x128xbf16, #tpu.memory_space<vmem>>, vector<32x128xbf16>
    %cst_54 = arith.constant dense<0.000000e+00> : vector<128x128xf32>
    %162 = tpu.matmul %160, %161, %cst_54 {dimension_numbers = #tpu.dot_dimension_numbers<[1], [0], [0], [1], [0, 0, 1, 1], [], []>} : vector<128x32xbf16>, vector<32x128xbf16>, vector<128x128xf32> -> vector<128x128xf32>
    %c0_55 = arith.constant 0 : index
    %c0_56 = arith.constant 0 : index
    %163 = vector.load %arg7[%c0_55, %c0_56] : memref<1x128xf32, #tpu.memory_space<vmem>>, vector<1x128xf32>
    %164 = vector.broadcast %163 : vector<1x128xf32> to vector<128x128xf32>
    %165 = arith.addf %162, %164 : vector<128x128xf32>
    %166 = arith.mulf %165, %165 : vector<128x128xf32>
    %167 = arith.mulf %165, %166 : vector<128x128xf32>
    %cst_57 = arith.constant 4.471500e-02 : f32
    %168 = vector.broadcast %cst_57 : f32 to vector<128x128xf32>
    %169 = arith.mulf %168, %167 : vector<128x128xf32>
    %170 = arith.addf %165, %169 : vector<128x128xf32>
    %cst_58 = arith.constant 0.797884583 : f32
    %171 = vector.broadcast %cst_58 : f32 to vector<128x128xf32>
    %172 = arith.mulf %171, %170 : vector<128x128xf32>
    %173 = math.tanh %172 : vector<128x128xf32>
    %cst_59 = arith.constant 1.000000e+00 : f32
    %174 = vector.broadcast %cst_59 : f32 to vector<128x128xf32>
    %175 = arith.addf %174, %173 : vector<128x128xf32>
    %cst_60 = arith.constant 5.000000e-01 : f32
    %176 = vector.broadcast %cst_60 : f32 to vector<128x128xf32>
    %177 = arith.mulf %176, %175 : vector<128x128xf32>
    %178 = arith.mulf %165, %177 : vector<128x128xf32>
    %179 = arith.truncf %178 : vector<128x128xf32> to vector<128x128xbf16>
    %c0_61 = arith.constant 0 : index
    %c0_62 = arith.constant 0 : index
    %180 = vector.load %arg8[%c0_61, %c0_62] : memref<128x32xbf16, #tpu.memory_space<vmem>>, vector<128x32xbf16>
    %cst_63 = arith.constant dense<0.000000e+00> : vector<128x32xf32>
    %181 = tpu.matmul %179, %180, %cst_63 {dimension_numbers = #tpu.dot_dimension_numbers<[1], [0], [0], [1], [0, 0, 1, 1], [], []>} : vector<128x128xbf16>, vector<128x32xbf16>, vector<128x32xf32> -> vector<128x32xf32>
    %c0_64 = arith.constant 0 : index
    %c0_65 = arith.constant 0 : index
    %182 = vector.load %arg9[%c0_64, %c0_65] : memref<1x32xf32, #tpu.memory_space<vmem>>, vector<1x32xf32>
    %183 = vector.broadcast %182 : vector<1x32xf32> to vector<128x32xf32>
    %184 = arith.addf %181, %183 : vector<128x32xf32>
    %185 = arith.addf %139, %184 : vector<128x32xf32>
    %c0_66 = arith.constant 0 : index
    %c0_67 = arith.constant 0 : index
    %186 = vector.load %arg10[%c0_66, %c0_67] : memref<128x32xf32, #tpu.memory_space<vmem>>, vector<128x32xf32>
    tpu.vector_store %arg10[%c0_66, %c0_67], %185 {strides = array<i32>} : memref<128x32xf32, #tpu.memory_space<vmem>>, vector<128x32xf32>,
    return
  }
}

</mosaic_0001>

<llo_original>
// kernel: tpu_custom_call.1
$region0: #{tpu_custom_call.1}
  #allocation0 [shape = 'u32[]', space=smem, size = 0x4, offset = 0x4, fixed_abs, tag = 'smem constant byte address 0x4 - core index']
  #allocation1 [shape = 'u32[72,128]{1,0:T(1,128)}', space=vmem, size = 0x9000, scoped, tag = 'internal scratch']
  %s0 = inlined_call_operand.vmem [shape: f32[128,32], index: 0, kind: input, shape index: {}]
  %s1 = inlined_call_operand.hbm [shape: bf16[4,128,128], index: 1, kind: input, shape index: {}]
  %s2 = inlined_call_operand.vmem [shape: bf16[32,96], index: 2, kind: input, shape index: {}]
  %s3 = inlined_call_operand.vmem [shape: f32[1,96], index: 3, kind: input, shape index: {}]
  %s4 = inlined_call_operand.vmem [shape: bf16[32,32], index: 4, kind: input, shape index: {}]
  %s5 = inlined_call_operand.vmem [shape: f32[1,32], index: 5, kind: input, shape index: {}]
  %s6 = inlined_call_operand.vmem [shape: bf16[32,128], index: 6, kind: input, shape index: {}]
  %s7 = inlined_call_operand.vmem [shape: f32[1,128], index: 7, kind: input, shape index: {}]
  %s8 = inlined_call_operand.vmem [shape: bf16[128,32], index: 8, kind: input, shape index: {}]
  %s9 = inlined_call_operand.vmem [shape: f32[1,32], index: 9, kind: input, shape index: {}]
  %s10 = inlined_call_operand.vmem [shape: f32[128,32], index: 10, kind: output, shape index: {}]
  %s11 = sld [smem:[#allocation0]]
  $region54: #{tpu_custom_call.1} parent=0
    _
  %s13 = ssub.s32 1, %s11
  %s14 = scalar_select 0, %s13, %s11
  $region1: #{tpu_custom_call.1} parent=0
    #allocation2 [shape = 'u8[131072]{0}', space=vmem, size = 0x20000, scoped, tag = 'input window, operand 1, single buffered']
    #allocation3 [shape = 's32[1]{0}', space=sflag, size = 0x4, scoped, tag = 'scoped memory for tpu_custom_call.1']
    %15 = vsyncpa [#allocation3], 0
    // Predicated region
    $region2: #{tpu_custom_call.1} parent=1 // pred_check
      _
    $region3: #{tpu_custom_call.1} parent=1 // pred_check_branch
      %17 = sbr.rel (0) target = $region5
    $region4: #{tpu_custom_call.1} parent=1 // pred_region
      _
    $region5: #{tpu_custom_call.1} parent=1 // pred_fallthru
      _
    // Predicated region
    $region6: #{tpu_custom_call.1} parent=1 // pred_check
      _
    $region7: #{tpu_custom_call.1} parent=1 // pred_check_branch
      %19 = sbr.rel (0) target = $region9
    $region8: #{tpu_custom_call.1} parent=1 // pred_region
      %21 = vsyncadd [#allocation3], 0
      %s22 = sshll.u32 %s1, 4
      %s23 = int_to_ptr.hbm [resolvable:$true] %s22
      %s24 = sshll.u32 [#allocation2], 4
      %s25 = int_to_ptr.vmem [resolvable:$true] %s24
      %30 = dma.hbm_to_vmem [thread:$0]  %s23, 4096, %s25, [#allocation3], 64, 64, 4
    $region9: #{tpu_custom_call.1} parent=1 // pred_fallthru
      _
    // Predicated region
    $region10: #{tpu_custom_call.1} parent=1 // pred_check
      _
    $region11: #{tpu_custom_call.1} parent=1 // pred_check_branch
      %32 = sbr.rel (0) target = $region13
    $region12: #{tpu_custom_call.1} parent=1 // pred_region
      _
    $region13: #{tpu_custom_call.1} parent=1 // pred_fallthru
      _
    // Predicated region
    $region14: #{tpu_custom_call.1} parent=1 // pred_check
      _
    $region15: #{tpu_custom_call.1} parent=1 // pred_check_branch
      %34 = sbr.rel (0) target = $region17
    $region16: #{tpu_custom_call.1} parent=1 // pred_region
      _
    $region17: #{tpu_custom_call.1} parent=1 // pred_fallthru
      _
    // Predicated region
    $region18: #{tpu_custom_call.1} parent=1 // pred_check
      _
    $region19: #{tpu_custom_call.1} parent=1 // pred_check_branch
      %36 = sbr.rel (0) target = $region21
    $region20: #{tpu_custom_call.1} parent=1 // pred_region
      _
    $region21: #{tpu_custom_call.1} parent=1 // pred_fallthru
      _
    // Predicated region
    $region22: #{tpu_custom_call.1} parent=1 // pred_check
      _
    $region23: #{tpu_custom_call.1} parent=1 // pred_check_branch
      %38 = sbr.rel (0) target = $region25
    $region24: #{tpu_custom_call.1} parent=1 // pred_region
      _
    $region25: #{tpu_custom_call.1} parent=1 // pred_fallthru
      _
    // Predicated region
    $region26: #{tpu_custom_call.1} parent=1 // pred_check
      _
    $region27: #{tpu_custom_call.1} parent=1 // pred_check_branch
      %40 = sbr.rel (0) target = $region29
    $region28: #{tpu_custom_call.1} parent=1 // pred_region
      _
    $region29: #{tpu_custom_call.1} parent=1 // pred_fallthru
      _
    // Predicated region
    $region30: #{tpu_custom_call.1} parent=1 // pred_check
      _
    $region31: #{tpu_custom_call.1} parent=1 // pred_check_branch
      %42 = sbr.rel (0) target = $region33
    $region32: #{tpu_custom_call.1} parent=1 // pred_region
      _
    $region33: #{tpu_custom_call.1} parent=1 // pred_fallthru
      _
    // Predicated region
    $region34: #{tpu_custom_call.1} parent=1 // pred_check
      _
    $region35: #{tpu_custom_call.1} parent=1 // pred_check_branch
      %44 = sbr.rel (0) target = $region37
    $region36: #{tpu_custom_call.1} parent=1 // pred_region
      _
    $region37: #{tpu_custom_call.1} parent=1 // pred_fallthru
      _
    // Predicated region
    $region38: #{tpu_custom_call.1} parent=1 // pred_check
      _
    $region39: #{tpu_custom_call.1} parent=1 // pred_check_branch
      %46 = sbr.rel (0) target = $region41
    $region40: #{tpu_custom_call.1} parent=1 // pred_region
      _
    $region41: #{tpu_custom_call.1} parent=1 // pred_fallthru
      _
    // Predicated region
    $region42: #{tpu_custom_call.1} parent=1 // pred_check
      _
    $region43: #{tpu_custom_call.1} parent=1 // pred_check_branch
      %48 = sbr.rel (0) target = $region45
    $region44: #{tpu_custom_call.1} parent=1 // pred_region
      %50 = dma.done [#allocation3], 4096
    $region45: #{tpu_custom_call.1} parent=1 // pred_fallthru
      _
    %v52 = vld [vmem:[%s0] sm:$0xff]
    %v53 = vld [vmem:[%s0 + $0x8] sm:$0xff]
    %v54 = vld [vmem:[%s0 + $0x10] sm:$0xff]
    %v55 = vld [vmem:[%s0 + $0x18] sm:$0xff]
    %v56 = vld [vmem:[%s0 + $0x20] sm:$0xff]
    %v57 = vld [vmem:[%s0 + $0x28] sm:$0xff]
    %v58 = vld [vmem:[%s0 + $0x30] sm:$0xff]
    %v59 = vld [vmem:[%s0 + $0x38] sm:$0xff]
    %v60 = vld [vmem:[%s0 + $0x40] sm:$0xff]
    %v61 = vld [vmem:[%s0 + $0x48] sm:$0xff]
    %v62 = vld [vmem:[%s0 + $0x50] sm:$0xff]
    %v63 = vld [vmem:[%s0 + $0x58] sm:$0xff]
    %v64 = vld [vmem:[%s0 + $0x60] sm:$0xff]
    %v65 = vld [vmem:[%s0 + $0x68] sm:$0xff]
    %v66 = vld [vmem:[%s0 + $0x70] sm:$0xff]
    %v67 = vld [vmem:[%s0 + $0x78] sm:$0xff]
    %vm68 = vcmask 261120
    %v69 = vsel %vm68, %v52, 0.0
    %70 = vadd.xlane.f32.xlu0 %v69
    %v71 = vpop.xlane.xlu0 %70
    %v72 = vsel %vm68, %v53, 0.0
    %73 = vadd.xlane.f32.xlu0 %v72
    %v74 = vpop.xlane.xlu0 %73
    %v75 = vsel %vm68, %v54, 0.0
    %76 = vadd.xlane.f32.xlu0 %v75
    %v77 = vpop.xlane.xlu0 %76
    %v78 = vsel %vm68, %v55, 0.0
    %79 = vadd.xlane.f32.xlu0 %v78
    %v80 = vpop.xlane.xlu0 %79
    %v81 = vsel %vm68, %v56, 0.0
    %82 = vadd.xlane.f32.xlu0 %v81
    %v83 = vpop.xlane.xlu0 %82
    %v84 = vsel %vm68, %v57, 0.0
    %85 = vadd.xlane.f32.xlu0 %v84
    %v86 = vpop.xlane.xlu0 %85
    %v87 = vsel %vm68, %v58, 0.0
    %88 = vadd.xlane.f32.xlu0 %v87
    %v89 = vpop.xlane.xlu0 %88
    %v90 = vsel %vm68, %v59, 0.0
    %91 = vadd.xlane.f32.xlu0 %v90
    %v92 = vpop.xlane.xlu0 %91
    %v93 = vsel %vm68, %v60, 0.0
    %94 = vadd.xlane.f32.xlu0 %v93
    %v95 = vpop.xlane.xlu0 %94
    %v96 = vsel %vm68, %v61, 0.0
    %97 = vadd.xlane.f32.xlu0 %v96
    %v98 = vpop.xlane.xlu0 %97
    %v99 = vsel %vm68, %v62, 0.0
    %100 = vadd.xlane.f32.xlu0 %v99
    %v101 = vpop.xlane.xlu0 %100
    %v102 = vsel %vm68, %v63, 0.0
    %103 = vadd.xlane.f32.xlu0 %v102
    %v104 = vpop.xlane.xlu0 %103
    %v105 = vsel %vm68, %v64, 0.0
    %106 = vadd.xlane.f32.xlu0 %v105
    %v107 = vpop.xlane.xlu0 %106
    %v108 = vsel %vm68, %v65, 0.0
    %109 = vadd.xlane.f32.xlu0 %v108
    %v110 = vpop.xlane.xlu0 %109
    %v111 = vsel %vm68, %v66, 0.0
    %112 = vadd.xlane.f32.xlu0 %v111
    %v113 = vpop.xlane.xlu0 %112
    %v114 = vsel %vm68, %v67, 0.0
    %115 = vadd.xlane.f32.xlu0 %v114
    %v116 = vpop.xlane.xlu0 %115
    %v117 = vrcp.pop 32.0
    %v118 = vmul.f32 32.0, %v117
    %v119 = vsub.f32 1.0, %v118
    %v120 = vmul.f32 %v117, %v119
    %v121 = vadd.f32 %v117, %v120
    %vm122 = vweird.f32 %v117
    %v123 = vsel %vm122, %v117, %v121
    %v124 = vmul.f32 %v71, %v123
    %v125 = vmul.f32 %v74, %v123
    %v126 = vmul.f32 %v77, %v123
    %v127 = vmul.f32 %v80, %v123
    %v128 = vmul.f32 %v83, %v123
    %v129 = vmul.f32 %v86, %v123
    %v130 = vmul.f32 %v89, %v123
    %v131 = vmul.f32 %v92, %v123
    %v132 = vmul.f32 %v95, %v123
    %v133 = vmul.f32 %v98, %v123
    %v134 = vmul.f32 %v101, %v123
    %v135 = vmul.f32 %v104, %v123
    %v136 = vmul.f32 %v107, %v123
    %v137 = vmul.f32 %v110, %v123
    %v138 = vmul.f32 %v113, %v123
    %v139 = vmul.f32 %v116, %v123
    %v140 = vsub.f32 %v52, %v124
    %v141 = vsub.f32 %v53, %v125
    %v142 = vsub.f32 %v54, %v126
    %v143 = vsub.f32 %v55, %v127
    %v144 = vsub.f32 %v56, %v128
    %v145 = vsub.f32 %v57, %v129
    %v146 = vsub.f32 %v58, %v130
    %v147 = vsub.f32 %v59, %v131
    %v148 = vsub.f32 %v60, %v132
    %v149 = vsub.f32 %v61, %v133
    %v150 = vsub.f32 %v62, %v134
    %v151 = vsub.f32 %v63, %v135
    %v152 = vsub.f32 %v64, %v136
    %v153 = vsub.f32 %v65, %v137
    %v154 = vsub.f32 %v66, %v138
    %v155 = vsub.f32 %v67, %v139
    %v156 = vmul.f32 %v140, %v140
    %v157 = vmul.f32 %v141, %v141
    %v158 = vmul.f32 %v142, %v142
    %v159 = vmul.f32 %v143, %v143
    %v160 = vmul.f32 %v144, %v144
    %v161 = vmul.f32 %v145, %v145
    %v162 = vmul.f32 %v146, %v146
    %v163 = vmul.f32 %v147, %v147
    %v164 = vmul.f32 %v148, %v148
    %v165 = vmul.f32 %v149, %v149
    %v166 = vmul.f32 %v150, %v150
    %v167 = vmul.f32 %v151, %v151
    %v168 = vmul.f32 %v152, %v152
    %v169 = vmul.f32 %v153, %v153
    %v170 = vmul.f32 %v154, %v154
    %v171 = vmul.f32 %v155, %v155
    %v172 = vsel %vm68, %v156, 0.0
    %173 = vadd.xlane.f32.xlu0 %v172
    %v174 = vpop.xlane.xlu0 %173
    %v175 = vsel %vm68, %v157, 0.0
    %176 = vadd.xlane.f32.xlu0 %v175
    %v177 = vpop.xlane.xlu0 %176
    %v178 = vsel %vm68, %v158, 0.0
    %179 = vadd.xlane.f32.xlu0 %v178
    %v180 = vpop.xlane.xlu0 %179
    %v181 = vsel %vm68, %v159, 0.0
    %182 = vadd.xlane.f32.xlu0 %v181
    %v183 = vpop.xlane.xlu0 %182
    %v184 = vsel %vm68, %v160, 0.0
    %185 = vadd.xlane.f32.xlu0 %v184
    %v186 = vpop.xlane.xlu0 %185
    %v187 = vsel %vm68, %v161, 0.0
    %188 = vadd.xlane.f32.xlu0 %v187
    %v189 = vpop.xlane.xlu0 %188
    %v190 = vsel %vm68, %v162, 0.0
    %191 = vadd.xlane.f32.xlu0 %v190
    %v192 = vpop.xlane.xlu0 %191
    %v193 = vsel %vm68, %v163, 0.0
    %194 = vadd.xlane.f32.xlu0 %v193
    %v195 = vpop.xlane.xlu0 %194
    %v196 = vsel %vm68, %v164, 0.0
    %197 = vadd.xlane.f32.xlu0 %v196
    %v198 = vpop.xlane.xlu0 %197
    %v199 = vsel %vm68, %v165, 0.0
    %200 = vadd.xlane.f32.xlu0 %v199
    %v201 = vpop.xlane.xlu0 %200
    %v202 = vsel %vm68, %v166, 0.0
    %203 = vadd.xlane.f32.xlu0 %v202
    %v204 = vpop.xlane.xlu0 %203
    %v205 = vsel %vm68, %v167, 0.0
    %206 = vadd.xlane.f32.xlu0 %v205
    %v207 = vpop.xlane.xlu0 %206
    %v208 = vsel %vm68, %v168, 0.0
    %209 = vadd.xlane.f32.xlu0 %v208
    %v210 = vpop.xlane.xlu0 %209
    %v211 = vsel %vm68, %v169, 0.0
    %212 = vadd.xlane.f32.xlu0 %v211
    %v213 = vpop.xlane.xlu0 %212
    %v214 = vsel %vm68, %v170, 0.0
    %215 = vadd.xlane.f32.xlu0 %v214
    %v216 = vpop.xlane.xlu0 %215
    %v217 = vsel %vm68, %v171, 0.0
    %218 = vadd.xlane.f32.xlu0 %v217
    %v219 = vpop.xlane.xlu0 %218
    %v220 = vmul.f32 %v174, %v123
    %v221 = vmul.f32 %v177, %v123
    %v222 = vmul.f32 %v180, %v123
    %v223 = vmul.f32 %v183, %v123
    %v224 = vmul.f32 %v186, %v123
    %v225 = vmul.f32 %v189, %v123
    %v226 = vmul.f32 %v192, %v123
    %v227 = vmul.f32 %v195, %v123
    %v228 = vmul.f32 %v198, %v123
    %v229 = vmul.f32 %v201, %v123
    %v230 = vmul.f32 %v204, %v123
    %v231 = vmul.f32 %v207, %v123
    %v232 = vmul.f32 %v210, %v123
    %v233 = vmul.f32 %v213, %v123
    %v234 = vmul.f32 %v216, %v123
    %v235 = vmul.f32 %v219, %v123
    %v236 = vadd.f32 %v220, 1e-05
    %v237 = vadd.f32 %v221, 1e-05
    %v238 = vadd.f32 %v222, 1e-05
    %v239 = vadd.f32 %v223, 1e-05
    %v240 = vadd.f32 %v224, 1e-05
    %v241 = vadd.f32 %v225, 1e-05
    %v242 = vadd.f32 %v226, 1e-05
    %v243 = vadd.f32 %v227, 1e-05
    %v244 = vadd.f32 %v228, 1e-05
    %v245 = vadd.f32 %v229, 1e-05
    %v246 = vadd.f32 %v230, 1e-05
    %v247 = vadd.f32 %v231, 1e-05
    %v248 = vadd.f32 %v232, 1e-05
    %v249 = vadd.f32 %v233, 1e-05
    %v250 = vadd.f32 %v234, 1e-05
    %v251 = vadd.f32 %v235, 1e-05
    %v252 = vrsqrt.pop %v236
    %v253 = vmul.f32 %v252, %v236
    %v254 = vmul.f32 %v253, %v252
    %v255 = vmul.f32 0.5, %v254
    %v256 = vsub.f32 1.5, %v255
    %v257 = vmul.f32 %v252, %v256
    %vm258 = vweird.f32 %v236
    %vm259 = vweird.f32 %v252
    %vm260 = vmor %vm258, %vm259
    %v261 = vsel %vm260, %v252, %v257
    %v262 = vrsqrt.pop %v237
    %v263 = vmul.f32 %v262, %v237
    %v264 = vmul.f32 %v263, %v262
    %v265 = vmul.f32 0.5, %v264
    %v266 = vsub.f32 1.5, %v265
    %v267 = vmul.f32 %v262, %v266
    %vm268 = vweird.f32 %v237
    %vm269 = vweird.f32 %v262
    %vm270 = vmor %vm268, %vm269
    %v271 = vsel %vm270, %v262, %v267
    %v272 = vrsqrt.pop %v238
    %v273 = vmul.f32 %v272, %v238
    %v274 = vmul.f32 %v273, %v272
    %v275 = vmul.f32 0.5, %v274
    %v276 = vsub.f32 1.5, %v275
    %v277 = vmul.f32 %v272, %v276
    %vm278 = vweird.f32 %v238
    %vm279 = vweird.f32 %v272
    %vm280 = vmor %vm278, %vm279
    %v281 = vsel %vm280, %v272, %v277
    %v282 = vrsqrt.pop %v239
    %v283 = vmul.f32 %v282, %v239
    %v284 = vmul.f32 %v283, %v282
    %v285 = vmul.f32 0.5, %v284
    %v286 = vsub.f32 1.5, %v285
    %v287 = vmul.f32 %v282, %v286
    %vm288 = vweird.f32 %v239
    %vm289 = vweird.f32 %v282
    %vm290 = vmor %vm288, %vm289
    %v291 = vsel %vm290, %v282, %v287
    %v292 = vrsqrt.pop %v240
    %v293 = vmul.f32 %v292, %v240
    %v294 = vmul.f32 %v293, %v292
    %v295 = vmul.f32 0.5, %v294
    %v296 = vsub.f32 1.5, %v295
    %v297 = vmul.f32 %v292, %v296
    %vm298 = vweird.f32 %v240
    %vm299 = vweird.f32 %v292
    %vm300 = vmor %vm298, %vm299
    %v301 = vsel %vm300, %v292, %v297
    %v302 = vrsqrt.pop %v241
    %v303 = vmul.f32 %v302, %v241
    %v304 = vmul.f32 %v303, %v302
    %v305 = vmul.f32 0.5, %v304
    %v306 = vsub.f32 1.5, %v305
    %v307 = vmul.f32 %v302, %v306
    %vm308 = vweird.f32 %v241
    %vm309 = vweird.f32 %v302
    %vm310 = vmor %vm308, %vm309
    %v311 = vsel %vm310, %v302, %v307
    %v312 = vrsqrt.pop %v242
    %v313 = vmul.f32 %v312, %v242
    %v314 = vmul.f32 %v313, %v312
    %v315 = vmul.f32 0.5, %v314
    %v316 = vsub.f32 1.5, %v315
    %v317 = vmul.f32 %v312, %v316
    %vm318 = vweird.f32 %v242
    %vm319 = vweird.f32 %v312
    %vm320 = vmor %vm318, %vm319
    %v321 = vsel %vm320, %v312, %v317
    %v322 = vrsqrt.pop %v243
    %v323 = vmul.f32 %v322, %v243
    %v324 = vmul.f32 %v323, %v322
    %v325 = vmul.f32 0.5, %v324
    %v326 = vsub.f32 1.5, %v325
    %v327 = vmul.f32 %v322, %v326
    %vm328 = vweird.f32 %v243
    %vm329 = vweird.f32 %v322
    %vm330 = vmor %vm328, %vm329
    %v331 = vsel %vm330, %v322, %v327
    %v332 = vrsqrt.pop %v244
    %v333 = vmul.f32 %v332, %v244
    %v334 = vmul.f32 %v333, %v332
    %v335 = vmul.f32 0.5, %v334
    %v336 = vsub.f32 1.5, %v335
    %v337 = vmul.f32 %v332, %v336
    %vm338 = vweird.f32 %v244
    %vm339 = vweird.f32 %v332
    %vm340 = vmor %vm338, %vm339
    %v341 = vsel %vm340, %v332, %v337
    %v342 = vrsqrt.pop %v245
    %v343 = vmul.f32 %v342, %v245
    %v344 = vmul.f32 %v343, %v342
    %v345 = vmul.f32 0.5, %v344
    %v346 = vsub.f32 1.5, %v345
    %v347 = vmul.f32 %v342, %v346
    %vm348 = vweird.f32 %v245
    %vm349 = vweird.f32 %v342
    %vm350 = vmor %vm348, %vm349
    %v351 = vsel %vm350, %v342, %v347
    %v352 = vrsqrt.pop %v246
    %v353 = vmul.f32 %v352, %v246
    %v354 = vmul.f32 %v353, %v352
    %v355 = vmul.f32 0.5, %v354
    %v356 = vsub.f32 1.5, %v355
    %v357 = vmul.f32 %v352, %v356
    %vm358 = vweird.f32 %v246
    %vm359 = vweird.f32 %v352
    %vm360 = vmor %vm358, %vm359
    %v361 = vsel %vm360, %v352, %v357
    %v362 = vrsqrt.pop %v247
    %v363 = vmul.f32 %v362, %v247
    %v364 = vmul.f32 %v363, %v362
    %v365 = vmul.f32 0.5, %v364
    %v366 = vsub.f32 1.5, %v365
    %v367 = vmul.f32 %v362, %v366
    %vm368 = vweird.f32 %v247
    %vm369 = vweird.f32 %v362
    %vm370 = vmor %vm368, %vm369
    %v371 = vsel %vm370, %v362, %v367
    %v372 = vrsqrt.pop %v248
    %v373 = vmul.f32 %v372, %v248
    %v374 = vmul.f32 %v373, %v372
    %v375 = vmul.f32 0.5, %v374
    %v376 = vsub.f32 1.5, %v375
    %v377 = vmul.f32 %v372, %v376
    %vm378 = vweird.f32 %v248
    %vm379 = vweird.f32 %v372
    %vm380 = vmor %vm378, %vm379
    %v381 = vsel %vm380, %v372, %v377
    %v382 = vrsqrt.pop %v249
    %v383 = vmul.f32 %v382, %v249
    %v384 = vmul.f32 %v383, %v382
    %v385 = vmul.f32 0.5, %v384
    %v386 = vsub.f32 1.5, %v385
    %v387 = vmul.f32 %v382, %v386
    %vm388 = vweird.f32 %v249
    %vm389 = vweird.f32 %v382
    %vm390 = vmor %vm388, %vm389
    %v391 = vsel %vm390, %v382, %v387
    %v392 = vrsqrt.pop %v250
    %v393 = vmul.f32 %v392, %v250
    %v394 = vmul.f32 %v393, %v392
    %v395 = vmul.f32 0.5, %v394
    %v396 = vsub.f32 1.5, %v395
    %v397 = vmul.f32 %v392, %v396
    %vm398 = vweird.f32 %v250
    %vm399 = vweird.f32 %v392
    %vm400 = vmor %vm398, %vm399
    %v401 = vsel %vm400, %v392, %v397
    %v402 = vrsqrt.pop %v251
    %v403 = vmul.f32 %v402, %v251
    %v404 = vmul.f32 %v403, %v402
    %v405 = vmul.f32 0.5, %v404
    %v406 = vsub.f32 1.5, %v405
    %v407 = vmul.f32 %v402, %v406
    %vm408 = vweird.f32 %v251
    %vm409 = vweird.f32 %v402
    %vm410 = vmor %vm408, %vm409
    %v411 = vsel %vm410, %v402, %v407
    %v412 = vmul.f32 %v140, %v261
    %v413 = vmul.f32 %v141, %v271
    %v414 = vmul.f32 %v142, %v281
    %v415 = vmul.f32 %v143, %v291
    %v416 = vmul.f32 %v144, %v301
    %v417 = vmul.f32 %v145, %v311
    %v418 = vmul.f32 %v146, %v321
    %v419 = vmul.f32 %v147, %v331
    %v420 = vmul.f32 %v148, %v341
    %v421 = vmul.f32 %v149, %v351
    %v422 = vmul.f32 %v150, %v361
    %v423 = vmul.f32 %v151, %v371
    %v424 = vmul.f32 %v152, %v381
    %v425 = vmul.f32 %v153, %v391
    %v426 = vmul.f32 %v154, %v401
    %v427 = vmul.f32 %v155, %v411
    %v428 = vpack.c.bf16 %v413, %v412
    %v429 = vpack.c.bf16 %v415, %v414
    %v430 = vpack.c.bf16 %v417, %v416
    %v431 = vpack.c.bf16 %v419, %v418
    %v432 = vpack.c.bf16 %v421, %v420
    %v433 = vpack.c.bf16 %v423, %v422
    %v434 = vpack.c.bf16 %v425, %v424
    %v435 = vpack.c.bf16 %v427, %v426
    %v436 = vld [vmem:[%s2] sm:$0xf]
    %v437 = vld [vmem:[%s2 + $0x4] sm:$0xf]
    %v438 = vld [vmem:[%s2 + $0x8] sm:$0xf]
    %v439 = vld [vmem:[%s2 + $0xc] sm:$0xf]
    %v440 = vld [vmem:[%s3] sm:$0x1]
    %v442 = vperm.slane %v440, 0
    %v448 = vunpack.c.l.b16 %v436
    %v449 = vunpack.c.l.b16 %v437
    %v450 = vunpack.c.l.b16 %v438
    %v451 = vunpack.c.l.b16 %v439
    %v452 = vpack.c.b16 %v449, %v448
    %v453 = vpack.c.b16 %v451, %v450
    %v457 = vsel %vm68, %v428, 0
    %v460 = vsel %vm68, %v429, 0
    %v463 = vsel %vm68, %v430, 0
    %v466 = vsel %vm68, %v431, 0
    %v469 = vsel %vm68, %v432, 0
    %v472 = vsel %vm68, %v433, 0
    %v475 = vsel %vm68, %v434, 0
    %v478 = vsel %vm68, %v435, 0
    %480 = vmatpush.bf16.msra.mxu0 0
    %481 = vmatpush.bf16.msra.mxu0 0
    %482 = vmatpush.bf16.msra.mxu0 0
    %483 = vmatpush.bf16.msra.mxu0 0
    %484 = vmatpush.bf16.msra.mxu0 0
    %485 = vmatpush.bf16.msra.mxu0 0
    %486 = vmatpush.bf16.msra.mxu0 %v453
    %487 = vmatpush.bf16.msra.mxu0 %v452
    %488 = vmatmul.bf16.gmra.mxu0 %v457
    %v489 = vpop.f32.mrf.mxu0
    %v490 = vadd.f32 %v442, %v489
    %v491 = vpop.f32.mrf.mxu0
    %v492 = vadd.f32 %v442, %v491
    %493 = vmatmul.bf16.gmra.mxu0 %v460
    %v494 = vpop.f32.mrf.mxu0
    %v495 = vadd.f32 %v442, %v494
    %v496 = vpop.f32.mrf.mxu0
    %v497 = vadd.f32 %v442, %v496
    %498 = vmatmul.bf16.gmra.mxu0 %v463
    %v499 = vpop.f32.mrf.mxu0
    %v500 = vadd.f32 %v442, %v499
    %v501 = vpop.f32.mrf.mxu0
    %v502 = vadd.f32 %v442, %v501
    %503 = vmatmul.bf16.gmra.mxu0 %v466
    %v504 = vpop.f32.mrf.mxu0
    %v505 = vadd.f32 %v442, %v504
    %v506 = vpop.f32.mrf.mxu0
    %v507 = vadd.f32 %v442, %v506
    %508 = vmatmul.bf16.gmra.mxu0 %v469
    %v509 = vpop.f32.mrf.mxu0
    %v510 = vadd.f32 %v442, %v509
    %v511 = vpop.f32.mrf.mxu0
    %v512 = vadd.f32 %v442, %v511
    %513 = vmatmul.bf16.gmra.mxu0 %v472
    %v514 = vpop.f32.mrf.mxu0
    %v515 = vadd.f32 %v442, %v514
    %v516 = vpop.f32.mrf.mxu0
    %v517 = vadd.f32 %v442, %v516
    %518 = vmatmul.bf16.gmra.mxu0 %v475
    %v519 = vpop.f32.mrf.mxu0
    %v520 = vadd.f32 %v442, %v519
    %v521 = vpop.f32.mrf.mxu0
    %v522 = vadd.f32 %v442, %v521
    %523 = vmatmul.bf16.gmra.mxu0 %v478
    %v524 = vpop.f32.mrf.mxu0
    %v525 = vadd.f32 %v442, %v524
    %v526 = vpop.f32.mrf.mxu0
    %v527 = vadd.f32 %v442, %v526
    %528 = vdwg.mxu0
    %v529 = vpack.c.bf16 %v492, %v490
    %v530 = vpack.c.bf16 %v497, %v495
    %v531 = vpack.c.bf16 %v502, %v500
    %v532 = vpack.c.bf16 %v507, %v505
    %v533 = vpack.c.bf16 %v512, %v510
    %v534 = vpack.c.bf16 %v517, %v515
    %v535 = vpack.c.bf16 %v522, %v520
    %v536 = vpack.c.bf16 %v527, %v525
    %v537 = vld [vmem:[#allocation2] sm:$0xf]
    %v538 = vld [vmem:[#allocation2 + $0x4] sm:$0xf]
    %v539 = vld [vmem:[#allocation2 + $0x8] sm:$0xf]
    %v540 = vld [vmem:[#allocation2 + $0xc] sm:$0xf]
    %v541 = vld [vmem:[#allocation2 + $0x10] sm:$0xf]
    %v542 = vld [vmem:[#allocation2 + $0x14] sm:$0xf]
    %v543 = vld [vmem:[#allocation2 + $0x18] sm:$0xf]
    %v544 = vld [vmem:[#allocation2 + $0x1c] sm:$0xf]
    %v545 = vld [vmem:[#allocation2 + $0x20] sm:$0xf]
    %v546 = vld [vmem:[#allocation2 + $0x24] sm:$0xf]
    %v547 = vld [vmem:[#allocation2 + $0x28] sm:$0xf]
    %v548 = vld [vmem:[#allocation2 + $0x2c] sm:$0xf]
    %v549 = vld [vmem:[#allocation2 + $0x30] sm:$0xf]
    %v550 = vld [vmem:[#allocation2 + $0x34] sm:$0xf]
    %v551 = vld [vmem:[#allocation2 + $0x38] sm:$0xf]
    %v552 = vld [vmem:[#allocation2 + $0x3c] sm:$0xf]
    %v553 = vunpack.c.l.bf16 %v537
    %v554 = vunpack.c.l.bf16 %v538
    %v555 = vunpack.c.l.bf16 %v539
    %v556 = vunpack.c.l.bf16 %v540
    %v557 = vunpack.c.l.bf16 %v541
    %v558 = vunpack.c.l.bf16 %v542
    %v559 = vunpack.c.l.bf16 %v543
    %v560 = vunpack.c.l.bf16 %v544
    %v561 = vunpack.c.l.bf16 %v545
    %v562 = vunpack.c.l.bf16 %v546
    %v563 = vunpack.c.l.bf16 %v547
    %v564 = vunpack.c.l.bf16 %v548
    %v565 = vunpack.c.l.bf16 %v549
    %v566 = vunpack.c.l.bf16 %v550
    %v567 = vunpack.c.l.bf16 %v551
    %v568 = vunpack.c.l.bf16 %v552
    %577 = vrot.lane.b32.xlu0 %v529, 96
    %v578 = vpop.permute.xlu0 %577
    %579 = vrot.lane.b32.xlu0 %v530, 96
    %v580 = vpop.permute.xlu0 %579
    %581 = vrot.lane.b32.xlu0 %v531, 96
    %v582 = vpop.permute.xlu0 %581
    %583 = vrot.lane.b32.xlu0 %v532, 96
    %v584 = vpop.permute.xlu0 %583
    %585 = vrot.lane.b32.xlu0 %v533, 96
    %v586 = vpop.permute.xlu0 %585
    %587 = vrot.lane.b32.xlu0 %v534, 96
    %v588 = vpop.permute.xlu0 %587
    %589 = vrot.lane.b32.xlu0 %v535, 96
    %v590 = vpop.permute.xlu0 %589
    %591 = vrot.lane.b32.xlu0 %v536, 96
    %v592 = vpop.permute.xlu0 %591
    %vm593 = vcmask 64512
    %v595 = vsel %vm593, %v529, 0
    %v598 = vsel %vm593, %v530, 0
    %v601 = vsel %vm593, %v531, 0
    %v604 = vsel %vm593, %v532, 0
    %v607 = vsel %vm593, %v533, 0
    %v610 = vsel %vm593, %v534, 0
    %v613 = vsel %vm593, %v535, 0
    %v616 = vsel %vm593, %v536, 0
    %v619 = vsel %vm593, %v578, 0
    %v622 = vsel %vm593, %v580, 0
    %v625 = vsel %vm593, %v582, 0
    %v628 = vsel %vm593, %v584, 0
    %v631 = vsel %vm593, %v586, 0
    %v634 = vsel %vm593, %v588, 0
    %v637 = vsel %vm593, %v590, 0
    %v640 = vsel %vm593, %v592, 0
    %642 = vmatpush.bf16.xpose.msra.mxu0 %v640
    %643 = vmatpush.bf16.xpose.msra.mxu0 %v637
    %644 = vmatpush.bf16.xpose.msra.mxu0 %v634
    %645 = vmatpush.bf16.xpose.msra.mxu0 %v631
    %646 = vmatpush.bf16.xpose.msra.mxu0 %v628
    %647 = vmatpush.bf16.xpose.msra.mxu0 %v625
    %648 = vmatpush.bf16.xpose.msra.mxu0 %v622
    %649 = vmatpush.bf16.xpose.msra.mxu0 %v619
    %650 = vmatmul.bf16.gmra.mxu0 %v595
    %v651 = vpop.f32.mrf.mxu0
    %v652 = vadd.f32 %v553, %v651
    %v653 = vpop.f32.mrf.mxu0
    %v654 = vadd.f32 %v554, %v653
    %655 = vmatmul.bf16.gmra.mxu0 %v598
    %v656 = vpop.f32.mrf.mxu0
    %v657 = vadd.f32 %v555, %v656
    %v658 = vpop.f32.mrf.mxu0
    %v659 = vadd.f32 %v556, %v658
    %660 = vmatmul.bf16.gmra.mxu0 %v601
    %v661 = vpop.f32.mrf.mxu0
    %v662 = vadd.f32 %v557, %v661
    %v663 = vpop.f32.mrf.mxu0
    %v664 = vadd.f32 %v558, %v663
    %665 = vmatmul.bf16.gmra.mxu0 %v604
    %v666 = vpop.f32.mrf.mxu0
    %v667 = vadd.f32 %v559, %v666
    %v668 = vpop.f32.mrf.mxu0
    %v669 = vadd.f32 %v560, %v668
    %670 = vmatmul.bf16.gmra.mxu0 %v607
    %v671 = vpop.f32.mrf.mxu0
    %v672 = vadd.f32 %v561, %v671
    %v673 = vpop.f32.mrf.mxu0
    %v674 = vadd.f32 %v562, %v673
    %675 = vmatmul.bf16.gmra.mxu0 %v610
    %v676 = vpop.f32.mrf.mxu0
    %v677 = vadd.f32 %v563, %v676
    %v678 = vpop.f32.mrf.mxu0
    %v679 = vadd.f32 %v564, %v678
    %680 = vmatmul.bf16.gmra.mxu0 %v613
    %v681 = vpop.f32.mrf.mxu0
    %v682 = vadd.f32 %v565, %v681
    %v683 = vpop.f32.mrf.mxu0
    %v684 = vadd.f32 %v566, %v683
    %685 = vmatmul.bf16.gmra.mxu0 %v616
    %v686 = vpop.f32.mrf.mxu0
    %v687 = vadd.f32 %v567, %v686
    %v688 = vpop.f32.mrf.mxu0
    %v689 = vadd.f32 %v568, %v688
    %690 = vdwg.mxu0
    %691 = vmax.xlane.f32.xlu0 %v652
    %v692 = vpop.xlane.xlu0 %691
    %693 = vmax.xlane.f32.xlu0 %v654
    %v694 = vpop.xlane.xlu0 %693
    %695 = vmax.xlane.f32.xlu0 %v657
    %v696 = vpop.xlane.xlu0 %695
    %697 = vmax.xlane.f32.xlu0 %v659
    %v698 = vpop.xlane.xlu0 %697
    %699 = vmax.xlane.f32.xlu0 %v662
    %v700 = vpop.xlane.xlu0 %699
    %701 = vmax.xlane.f32.xlu0 %v664
    %v702 = vpop.xlane.xlu0 %701
    %703 = vmax.xlane.f32.xlu0 %v667
    %v704 = vpop.xlane.xlu0 %703
    %705 = vmax.xlane.f32.xlu0 %v669
    %v706 = vpop.xlane.xlu0 %705
    %707 = vmax.xlane.f32.xlu0 %v672
    %v708 = vpop.xlane.xlu0 %707
    %709 = vmax.xlane.f32.xlu0 %v674
    %v710 = vpop.xlane.xlu0 %709
    %711 = vmax.xlane.f32.xlu0 %v677
    %v712 = vpop.xlane.xlu0 %711
    %713 = vmax.xlane.f32.xlu0 %v679
    %v714 = vpop.xlane.xlu0 %713
    %715 = vmax.xlane.f32.xlu0 %v682
    %v716 = vpop.xlane.xlu0 %715
    %717 = vmax.xlane.f32.xlu0 %v684
    %v718 = vpop.xlane.xlu0 %717
    %719 = vmax.xlane.f32.xlu0 %v687
    %v720 = vpop.xlane.xlu0 %719
    %721 = vmax.xlane.f32.xlu0 %v689
    %v722 = vpop.xlane.xlu0 %721
    %v723 = vsub.f32 %v652, %v692
    %v724 = vsub.f32 %v654, %v694
    %v725 = vsub.f32 %v657, %v696
    %v726 = vsub.f32 %v659, %v698
    %v727 = vsub.f32 %v662, %v700
    %v728 = vsub.f32 %v664, %v702
    %v729 = vsub.f32 %v667, %v704
    %v730 = vsub.f32 %v669, %v706
    %v731 = vsub.f32 %v672, %v708
    %v732 = vsub.f32 %v674, %v710
    %v733 = vsub.f32 %v677, %v712
    %v734 = vsub.f32 %v679, %v714
    %v735 = vsub.f32 %v682, %v716
    %v736 = vsub.f32 %v684, %v718
    %v737 = vsub.f32 %v687, %v720
    %v738 = vsub.f32 %v689, %v722
    %v739 = vmul.f32 %v723, 1.442695
    %v740 = vpow.pop %v739
    %v741 = vmul.f32 %v724, 1.442695
    %v742 = vpow.pop %v741
    %v743 = vmul.f32 %v725, 1.442695
    %v744 = vpow.pop %v743
    %v745 = vmul.f32 %v726, 1.442695
    %v746 = vpow.pop %v745
    %v747 = vmul.f32 %v727, 1.442695
    %v748 = vpow.pop %v747
    %v749 = vmul.f32 %v728, 1.442695
    %v750 = vpow.pop %v749
    %v751 = vmul.f32 %v729, 1.442695
    %v752 = vpow.pop %v751
    %v753 = vmul.f32 %v730, 1.442695
    %v754 = vpow.pop %v753
    %v755 = vmul.f32 %v731, 1.442695
    %v756 = vpow.pop %v755
    %v757 = vmul.f32 %v732, 1.442695
    %v758 = vpow.pop %v757
    %v759 = vmul.f32 %v733, 1.442695
    %v760 = vpow.pop %v759
    %v761 = vmul.f32 %v734, 1.442695
    %v762 = vpow.pop %v761
    %v763 = vmul.f32 %v735, 1.442695
    %v764 = vpow.pop %v763
    %v765 = vmul.f32 %v736, 1.442695
    %v766 = vpow.pop %v765
    %v767 = vmul.f32 %v737, 1.442695
    %v768 = vpow.pop %v767
    %v769 = vmul.f32 %v738, 1.442695
    %v770 = vpow.pop %v769
    %771 = vadd.xlane.f32.xlu0 %v740
    %v772 = vpop.xlane.xlu0 %771
    %773 = vadd.xlane.f32.xlu0 %v742
    %v774 = vpop.xlane.xlu0 %773
    %775 = vadd.xlane.f32.xlu0 %v744
    %v776 = vpop.xlane.xlu0 %775
    %777 = vadd.xlane.f32.xlu0 %v746
    %v778 = vpop.xlane.xlu0 %777
    %779 = vadd.xlane.f32.xlu0 %v748
    %v780 = vpop.xlane.xlu0 %779
    %781 = vadd.xlane.f32.xlu0 %v750
    %v782 = vpop.xlane.xlu0 %781
    %783 = vadd.xlane.f32.xlu0 %v752
    %v784 = vpop.xlane.xlu0 %783
    %785 = vadd.xlane.f32.xlu0 %v754
    %v786 = vpop.xlane.xlu0 %785
    %787 = vadd.xlane.f32.xlu0 %v756
    %v788 = vpop.xlane.xlu0 %787
    %789 = vadd.xlane.f32.xlu0 %v758
    %v790 = vpop.xlane.xlu0 %789
    %791 = vadd.xlane.f32.xlu0 %v760
    %v792 = vpop.xlane.xlu0 %791
    %793 = vadd.xlane.f32.xlu0 %v762
    %v794 = vpop.xlane.xlu0 %793
    %795 = vadd.xlane.f32.xlu0 %v764
    %v796 = vpop.xlane.xlu0 %795
    %797 = vadd.xlane.f32.xlu0 %v766
    %v798 = vpop.xlane.xlu0 %797
    %799 = vadd.xlane.f32.xlu0 %v768
    %v800 = vpop.xlane.xlu0 %799
    %801 = vadd.xlane.f32.xlu0 %v770
    %v802 = vpop.xlane.xlu0 %801
    %v803 = vrcp.pop %v772
    %v804 = vrcp.pop %v774
    %v805 = vrcp.pop %v776
    %v806 = vrcp.pop %v778
    %v807 = vrcp.pop %v780
    %v808 = vrcp.pop %v782
    %v809 = vrcp.pop %v784
    %v810 = vrcp.pop %v786
    %v811 = vrcp.pop %v788
    %v812 = vrcp.pop %v790
    %v813 = vrcp.pop %v792
    %v814 = vrcp.pop %v794
    %v815 = vrcp.pop %v796
    %v816 = vrcp.pop %v798
    %v817 = vrcp.pop %v800
    %v818 = vrcp.pop %v802
    %v819 = vmul.f32 %v740, %v803
    %v820 = vmul.f32 %v742, %v804
    %v821 = vmul.f32 %v744, %v805
    %v822 = vmul.f32 %v746, %v806
    %v823 = vmul.f32 %v748, %v807
    %v824 = vmul.f32 %v750, %v808
    %v825 = vmul.f32 %v752, %v809
    %v826 = vmul.f32 %v754, %v810
    %v827 = vmul.f32 %v756, %v811
    %v828 = vmul.f32 %v758, %v812
    %v829 = vmul.f32 %v760, %v813
    %v830 = vmul.f32 %v762, %v814
    %v831 = vmul.f32 %v764, %v815
    %v832 = vmul.f32 %v766, %v816
    %v833 = vmul.f32 %v768, %v817
    %v834 = vmul.f32 %v770, %v818
    %v835 = vld [vmem:[%s4] sm:$0xf]
    %836 = vrot.lane.b32.xlu0 %v529, 64
    %v837 = vpop.permute.xlu0 %836
    %838 = vrot.lane.b32.xlu0 %v530, 64
    %v839 = vpop.permute.xlu0 %838
    %840 = vrot.lane.b32.xlu0 %v531, 64
    %v841 = vpop.permute.xlu0 %840
    %842 = vrot.lane.b32.xlu0 %v532, 64
    %v843 = vpop.permute.xlu0 %842
    %844 = vrot.lane.b32.xlu0 %v533, 64
    %v845 = vpop.permute.xlu0 %844
    %846 = vrot.lane.b32.xlu0 %v534, 64
    %v847 = vpop.permute.xlu0 %846
    %848 = vrot.lane.b32.xlu0 %v535, 64
    %v849 = vpop.permute.xlu0 %848
    %850 = vrot.lane.b32.xlu0 %v536, 64
    %v851 = vpop.permute.xlu0 %850
    %v853 = vsel %vm593, %v837, 0
    %v856 = vsel %vm593, %v839, 0
    %v859 = vsel %vm593, %v841, 0
    %v862 = vsel %vm593, %v843, 0
    %v865 = vsel %vm593, %v845, 0
    %v868 = vsel %vm593, %v847, 0
    %v871 = vsel %vm593, %v849, 0
    %v874 = vsel %vm593, %v851, 0
    %vm876 = vcmask 1043456
    %v878 = vsel %vm876, %v835, 0
    %880 = vmatpush.bf16.msra.mxu0 0
    %881 = vmatpush.bf16.msra.mxu0 0
    %882 = vmatpush.bf16.msra.mxu0 0
    %883 = vmatpush.bf16.msra.mxu0 0
    %884 = vmatpush.bf16.msra.mxu0 0
    %885 = vmatpush.bf16.msra.mxu0 0
    %886 = vmatpush.bf16.msra.mxu0 0
    %887 = vmatpush.bf16.msra.mxu0 %v878
    %888 = vmatmul.bf16.gmra.mxu0 %v853
    %v889 = vpop.f32.mrf.mxu0
    %v890 = vadd.f32 0.0, %v889
    %v891 = vpop.f32.mrf.mxu0
    %v892 = vadd.f32 0.0, %v891
    %893 = vmatmul.bf16.gmra.mxu0 %v856
    %v894 = vpop.f32.mrf.mxu0
    %v895 = vadd.f32 0.0, %v894
    %v896 = vpop.f32.mrf.mxu0
    %v897 = vadd.f32 0.0, %v896
    %898 = vmatmul.bf16.gmra.mxu0 %v859
    %v899 = vpop.f32.mrf.mxu0
    %v900 = vadd.f32 0.0, %v899
    %v901 = vpop.f32.mrf.mxu0
    %v902 = vadd.f32 0.0, %v901
    %903 = vmatmul.bf16.gmra.mxu0 %v862
    %v904 = vpop.f32.mrf.mxu0
    %v905 = vadd.f32 0.0, %v904
    %v906 = vpop.f32.mrf.mxu0
    %v907 = vadd.f32 0.0, %v906
    %908 = vmatmul.bf16.gmra.mxu0 %v865
    %v909 = vpop.f32.mrf.mxu0
    %v910 = vadd.f32 0.0, %v909
    %v911 = vpop.f32.mrf.mxu0
    %v912 = vadd.f32 0.0, %v911
    %913 = vmatmul.bf16.gmra.mxu0 %v868
    %v914 = vpop.f32.mrf.mxu0
    %v915 = vadd.f32 0.0, %v914
    %v916 = vpop.f32.mrf.mxu0
    %v917 = vadd.f32 0.0, %v916
    %918 = vmatmul.bf16.gmra.mxu0 %v871
    %v919 = vpop.f32.mrf.mxu0
    %v920 = vadd.f32 0.0, %v919
    %v921 = vpop.f32.mrf.mxu0
    %v922 = vadd.f32 0.0, %v921
    %923 = vmatmul.bf16.gmra.mxu0 %v874
    %v924 = vpop.f32.mrf.mxu0
    %v925 = vadd.f32 0.0, %v924
    %v926 = vpop.f32.mrf.mxu0
    %v927 = vadd.f32 0.0, %v926
    %928 = vdwg.mxu0
    %v929 = vpack.c.bf16 %v892, %v890
    %v930 = vpack.c.bf16 %v897, %v895
    %v931 = vpack.c.bf16 %v902, %v900
    %v932 = vpack.c.bf16 %v907, %v905
    %v933 = vpack.c.bf16 %v912, %v910
    %v934 = vpack.c.bf16 %v917, %v915
    %v935 = vpack.c.bf16 %v922, %v920
    %v936 = vpack.c.bf16 %v927, %v925
    %v937 = vpack.c.bf16 %v820, %v819
    %v938 = vpack.c.bf16 %v822, %v821
    %v939 = vpack.c.bf16 %v824, %v823
    %v940 = vpack.c.bf16 %v826, %v825
    %v941 = vpack.c.bf16 %v828, %v827
    %v942 = vpack.c.bf16 %v830, %v829
    %v943 = vpack.c.bf16 %v832, %v831
    %v944 = vpack.c.bf16 %v834, %v833
    %s945 = scalar_lea.vmem [#allocation2], 64
    %v946 = vld [vmem:[%s945] sm:$0xf]
    %v947 = vld [vmem:[%s945 + $0x4] sm:$0xf]
    %v948 = vld [vmem:[%s945 + $0x8] sm:$0xf]
    %v949 = vld [vmem:[%s945 + $0xc] sm:$0xf]
    %v950 = vld [vmem:[%s945 + $0x10] sm:$0xf]
    %v951 = vld [vmem:[%s945 + $0x14] sm:$0xf]
    %v952 = vld [vmem:[%s945 + $0x18] sm:$0xf]
    %v953 = vld [vmem:[%s945 + $0x1c] sm:$0xf]
    %v954 = vld [vmem:[%s945 + $0x20] sm:$0xf]
    %v955 = vld [vmem:[%s945 + $0x24] sm:$0xf]
    %v956 = vld [vmem:[%s945 + $0x28] sm:$0xf]
    %v957 = vld [vmem:[%s945 + $0x2c] sm:$0xf]
    %v958 = vld [vmem:[%s945 + $0x30] sm:$0xf]
    %v959 = vld [vmem:[%s945 + $0x34] sm:$0xf]
    %v960 = vld [vmem:[%s945 + $0x38] sm:$0xf]
    %v961 = vld [vmem:[%s945 + $0x3c] sm:$0xf]
    %v962 = vunpack.c.l.bf16 %v946
    %v963 = vunpack.c.l.bf16 %v947
    %v964 = vunpack.c.l.bf16 %v948
    %v965 = vunpack.c.l.bf16 %v949
    %v966 = vunpack.c.l.bf16 %v950
    %v967 = vunpack.c.l.bf16 %v951
    %v968 = vunpack.c.l.bf16 %v952
    %v969 = vunpack.c.l.bf16 %v953
    %v970 = vunpack.c.l.bf16 %v954
    %v971 = vunpack.c.l.bf16 %v955
    %v972 = vunpack.c.l.bf16 %v956
    %v973 = vunpack.c.l.bf16 %v957
    %v974 = vunpack.c.l.bf16 %v958
    %v975 = vunpack.c.l.bf16 %v959
    %v976 = vunpack.c.l.bf16 %v960
    %v977 = vunpack.c.l.bf16 %v961
    %978 = vrot.lane.b32.xlu0 %v529, 120
    %v979 = vpop.permute.xlu0 %978
    %980 = vrot.lane.b32.xlu0 %v530, 120
    %v981 = vpop.permute.xlu0 %980
    %982 = vrot.lane.b32.xlu0 %v531, 120
    %v983 = vpop.permute.xlu0 %982
    %984 = vrot.lane.b32.xlu0 %v532, 120
    %v985 = vpop.permute.xlu0 %984
    %986 = vrot.lane.b32.xlu0 %v533, 120
    %v987 = vpop.permute.xlu0 %986
    %988 = vrot.lane.b32.xlu0 %v534, 120
    %v989 = vpop.permute.xlu0 %988
    %990 = vrot.lane.b32.xlu0 %v535, 120
    %v991 = vpop.permute.xlu0 %990
    %992 = vrot.lane.b32.xlu0 %v536, 120
    %v993 = vpop.permute.xlu0 %992
    %994 = vrot.lane.b32.xlu0 %v529, 88
    %v995 = vpop.permute.xlu0 %994
    %996 = vrot.lane.b32.xlu0 %v530, 88
    %v997 = vpop.permute.xlu0 %996
    %998 = vrot.lane.b32.xlu0 %v531, 88
    %v999 = vpop.permute.xlu0 %998
    %1000 = vrot.lane.b32.xlu0 %v532, 88
    %v1001 = vpop.permute.xlu0 %1000
    %1002 = vrot.lane.b32.xlu0 %v533, 88
    %v1003 = vpop.permute.xlu0 %1002
    %1004 = vrot.lane.b32.xlu0 %v534, 88
    %v1005 = vpop.permute.xlu0 %1004
    %1006 = vrot.lane.b32.xlu0 %v535, 88
    %v1007 = vpop.permute.xlu0 %1006
    %1008 = vrot.lane.b32.xlu0 %v536, 88
    %v1009 = vpop.permute.xlu0 %1008
    %v1011 = vsel %vm593, %v979, 0
    %v1014 = vsel %vm593, %v981, 0
    %v1017 = vsel %vm593, %v983, 0
    %v1020 = vsel %vm593, %v985, 0
    %v1023 = vsel %vm593, %v987, 0
    %v1026 = vsel %vm593, %v989, 0
    %v1029 = vsel %vm593, %v991, 0
    %v1032 = vsel %vm593, %v993, 0
    %v1035 = vsel %vm593, %v995, 0
    %v1038 = vsel %vm593, %v997, 0
    %v1041 = vsel %vm593, %v999, 0
    %v1044 = vsel %vm593, %v1001, 0
    %v1047 = vsel %vm593, %v1003, 0
    %v1050 = vsel %vm593, %v1005, 0
    %v1053 = vsel %vm593, %v1007, 0
    %v1056 = vsel %vm593, %v1009, 0
    %1058 = vmatpush.bf16.xpose.msra.mxu0 %v1056
    %1059 = vmatpush.bf16.xpose.msra.mxu0 %v1053
    %1060 = vmatpush.bf16.xpose.msra.mxu0 %v1050
    %1061 = vmatpush.bf16.xpose.msra.mxu0 %v1047
    %1062 = vmatpush.bf16.xpose.msra.mxu0 %v1044
    %1063 = vmatpush.bf16.xpose.msra.mxu0 %v1041
    %1064 = vmatpush.bf16.xpose.msra.mxu0 %v1038
    %1065 = vmatpush.bf16.xpose.msra.mxu0 %v1035
    %1066 = vmatmul.bf16.gmra.mxu0 %v1011
    %v1067 = vpop.f32.mrf.mxu0
    %v1068 = vadd.f32 %v962, %v1067
    %v1069 = vpop.f32.mrf.mxu0
    %v1070 = vadd.f32 %v963, %v1069
    %1071 = vmatmul.bf16.gmra.mxu0 %v1014
    %v1072 = vpop.f32.mrf.mxu0
    %v1073 = vadd.f32 %v964, %v1072
    %v1074 = vpop.f32.mrf.mxu0
    %v1075 = vadd.f32 %v965, %v1074
    %1076 = vmatmul.bf16.gmra.mxu0 %v1017
    %v1077 = vpop.f32.mrf.mxu0
    %v1078 = vadd.f32 %v966, %v1077
    %v1079 = vpop.f32.mrf.mxu0
    %v1080 = vadd.f32 %v967, %v1079
    %1081 = vmatmul.bf16.gmra.mxu0 %v1020
    %v1082 = vpop.f32.mrf.mxu0
    %v1083 = vadd.f32 %v968, %v1082
    %v1084 = vpop.f32.mrf.mxu0
    %v1085 = vadd.f32 %v969, %v1084
    %1086 = vmatmul.bf16.gmra.mxu0 %v1023
    %v1087 = vpop.f32.mrf.mxu0
    %v1088 = vadd.f32 %v970, %v1087
    %v1089 = vpop.f32.mrf.mxu0
    %v1090 = vadd.f32 %v971, %v1089
    %1091 = vmatmul.bf16.gmra.mxu0 %v1026
    %v1092 = vpop.f32.mrf.mxu0
    %v1093 = vadd.f32 %v972, %v1092
    %v1094 = vpop.f32.mrf.mxu0
    %v1095 = vadd.f32 %v973, %v1094
    %1096 = vmatmul.bf16.gmra.mxu0 %v1029
    %v1097 = vpop.f32.mrf.mxu0
    %v1098 = vadd.f32 %v974, %v1097
    %v1099 = vpop.f32.mrf.mxu0
    %v1100 = vadd.f32 %v975, %v1099
    %1101 = vmatmul.bf16.gmra.mxu0 %v1032
    %v1102 = vpop.f32.mrf.mxu0
    %v1103 = vadd.f32 %v976, %v1102
    %v1104 = vpop.f32.mrf.mxu0
    %v1105 = vadd.f32 %v977, %v1104
    %1106 = vdwg.mxu0
    %1107 = vmax.xlane.f32.xlu0 %v1068
    %v1108 = vpop.xlane.xlu0 %1107
    %1109 = vmax.xlane.f32.xlu0 %v1070
    %v1110 = vpop.xlane.xlu0 %1109
    %1111 = vmax.xlane.f32.xlu0 %v1073
    %v1112 = vpop.xlane.xlu0 %1111
    %1113 = vmax.xlane.f32.xlu0 %v1075
    %v1114 = vpop.xlane.xlu0 %1113
    %1115 = vmax.xlane.f32.xlu0 %v1078
    %v1116 = vpop.xlane.xlu0 %1115
    %1117 = vmax.xlane.f32.xlu0 %v1080
    %v1118 = vpop.xlane.xlu0 %1117
    %1119 = vmax.xlane.f32.xlu0 %v1083
    %v1120 = vpop.xlane.xlu0 %1119
    %1121 = vmax.xlane.f32.xlu0 %v1085
    %v1122 = vpop.xlane.xlu0 %1121
    %1123 = vmax.xlane.f32.xlu0 %v1088
    %v1124 = vpop.xlane.xlu0 %1123
    %1125 = vmax.xlane.f32.xlu0 %v1090
    %v1126 = vpop.xlane.xlu0 %1125
    %1127 = vmax.xlane.f32.xlu0 %v1093
    %v1128 = vpop.xlane.xlu0 %1127
    %1129 = vmax.xlane.f32.xlu0 %v1095
    %v1130 = vpop.xlane.xlu0 %1129
    %1131 = vmax.xlane.f32.xlu0 %v1098
    %v1132 = vpop.xlane.xlu0 %1131
    %1133 = vmax.xlane.f32.xlu0 %v1100
    %v1134 = vpop.xlane.xlu0 %1133
    %1135 = vmax.xlane.f32.xlu0 %v1103
    %v1136 = vpop.xlane.xlu0 %1135
    %1137 = vmax.xlane.f32.xlu0 %v1105
    %v1138 = vpop.xlane.xlu0 %1137
    %v1139 = vsub.f32 %v1068, %v1108
    %v1140 = vsub.f32 %v1070, %v1110
    %v1141 = vsub.f32 %v1073, %v1112
    %v1142 = vsub.f32 %v1075, %v1114
    %v1143 = vsub.f32 %v1078, %v1116
    %v1144 = vsub.f32 %v1080, %v1118
    %v1145 = vsub.f32 %v1083, %v1120
    %v1146 = vsub.f32 %v1085, %v1122
    %v1147 = vsub.f32 %v1088, %v1124
    %v1148 = vsub.f32 %v1090, %v1126
    %v1149 = vsub.f32 %v1093, %v1128
    %v1150 = vsub.f32 %v1095, %v1130
    %v1151 = vsub.f32 %v1098, %v1132
    %v1152 = vsub.f32 %v1100, %v1134
    %v1153 = vsub.f32 %v1103, %v1136
    %v1154 = vsub.f32 %v1105, %v1138
    %v1155 = vmul.f32 %v1139, 1.442695
    %v1156 = vpow.pop %v1155
    %v1157 = vmul.f32 %v1140, 1.442695
    %v1158 = vpow.pop %v1157
    %v1159 = vmul.f32 %v1141, 1.442695
    %v1160 = vpow.pop %v1159
    %v1161 = vmul.f32 %v1142, 1.442695
    %v1162 = vpow.pop %v1161
    %v1163 = vmul.f32 %v1143, 1.442695
    %v1164 = vpow.pop %v1163
    %v1165 = vmul.f32 %v1144, 1.442695
    %v1166 = vpow.pop %v1165
    %v1167 = vmul.f32 %v1145, 1.442695
    %v1168 = vpow.pop %v1167
    %v1169 = vmul.f32 %v1146, 1.442695
    %v1170 = vpow.pop %v1169
    %v1171 = vmul.f32 %v1147, 1.442695
    %v1172 = vpow.pop %v1171
    %v1173 = vmul.f32 %v1148, 1.442695
    %v1174 = vpow.pop %v1173
    %v1175 = vmul.f32 %v1149, 1.442695
    %v1176 = vpow.pop %v1175
    %v1177 = vmul.f32 %v1150, 1.442695
    %v1178 = vpow.pop %v1177
    %v1179 = vmul.f32 %v1151, 1.442695
    %v1180 = vpow.pop %v1179
    %v1181 = vmul.f32 %v1152, 1.442695
    %v1182 = vpow.pop %v1181
    %v1183 = vmul.f32 %v1153, 1.442695
    %v1184 = vpow.pop %v1183
    %v1185 = vmul.f32 %v1154, 1.442695
    %v1186 = vpow.pop %v1185
    %1187 = vadd.xlane.f32.xlu0 %v1156
    %v1188 = vpop.xlane.xlu0 %1187
    %1189 = vadd.xlane.f32.xlu0 %v1158
    %v1190 = vpop.xlane.xlu0 %1189
    %1191 = vadd.xlane.f32.xlu0 %v1160
    %v1192 = vpop.xlane.xlu0 %1191
    %1193 = vadd.xlane.f32.xlu0 %v1162
    %v1194 = vpop.xlane.xlu0 %1193
    %1195 = vadd.xlane.f32.xlu0 %v1164
    %v1196 = vpop.xlane.xlu0 %1195
    %1197 = vadd.xlane.f32.xlu0 %v1166
    %v1198 = vpop.xlane.xlu0 %1197
    %1199 = vadd.xlane.f32.xlu0 %v1168
    %v1200 = vpop.xlane.xlu0 %1199
    %1201 = vadd.xlane.f32.xlu0 %v1170
    %v1202 = vpop.xlane.xlu0 %1201
    %1203 = vadd.xlane.f32.xlu0 %v1172
    %v1204 = vpop.xlane.xlu0 %1203
    %1205 = vadd.xlane.f32.xlu0 %v1174
    %v1206 = vpop.xlane.xlu0 %1205
    %1207 = vadd.xlane.f32.xlu0 %v1176
    %v1208 = vpop.xlane.xlu0 %1207
    %1209 = vadd.xlane.f32.xlu0 %v1178
    %v1210 = vpop.xlane.xlu0 %1209
    %1211 = vadd.xlane.f32.xlu0 %v1180
    %v1212 = vpop.xlane.xlu0 %1211
    %1213 = vadd.xlane.f32.xlu0 %v1182
    %v1214 = vpop.xlane.xlu0 %1213
    %1215 = vadd.xlane.f32.xlu0 %v1184
    %v1216 = vpop.xlane.xlu0 %1215
    %1217 = vadd.xlane.f32.xlu0 %v1186
    %v1218 = vpop.xlane.xlu0 %1217
    %v1219 = vrcp.pop %v1188
    %v1220 = vrcp.pop %v1190
    %v1221 = vrcp.pop %v1192
    %v1222 = vrcp.pop %v1194
    %v1223 = vrcp.pop %v1196
    %v1224 = vrcp.pop %v1198
    %v1225 = vrcp.pop %v1200
    %v1226 = vrcp.pop %v1202
    %v1227 = vrcp.pop %v1204
    %v1228 = vrcp.pop %v1206
    %v1229 = vrcp.pop %v1208
    %v1230 = vrcp.pop %v1210
    %v1231 = vrcp.pop %v1212
    %v1232 = vrcp.pop %v1214
    %v1233 = vrcp.pop %v1216
    %v1234 = vrcp.pop %v1218
    %v1235 = vmul.f32 %v1156, %v1219
    %v1236 = vmul.f32 %v1158, %v1220
    %v1237 = vmul.f32 %v1160, %v1221
    %v1238 = vmul.f32 %v1162, %v1222
    %v1239 = vmul.f32 %v1164, %v1223
    %v1240 = vmul.f32 %v1166, %v1224
    %v1241 = vmul.f32 %v1168, %v1225
    %v1242 = vmul.f32 %v1170, %v1226
    %v1243 = vmul.f32 %v1172, %v1227
    %v1244 = vmul.f32 %v1174, %v1228
    %v1245 = vmul.f32 %v1176, %v1229
    %v1246 = vmul.f32 %v1178, %v1230
    %v1247 = vmul.f32 %v1180, %v1231
    %v1248 = vmul.f32 %v1182, %v1232
    %v1249 = vmul.f32 %v1184, %v1233
    %v1250 = vmul.f32 %v1186, %v1234
    %v1251 = vld [vmem:[%s4 + $0x4] sm:$0xf]
    %1252 = vrot.lane.b32.xlu0 %v529, 56
    %v1253 = vpop.permute.xlu0 %1252
    %1254 = vrot.lane.b32.xlu0 %v530, 56
    %v1255 = vpop.permute.xlu0 %1254
    %1256 = vrot.lane.b32.xlu0 %v531, 56
    %v1257 = vpop.permute.xlu0 %1256
    %1258 = vrot.lane.b32.xlu0 %v532, 56
    %v1259 = vpop.permute.xlu0 %1258
    %1260 = vrot.lane.b32.xlu0 %v533, 56
    %v1261 = vpop.permute.xlu0 %1260
    %1262 = vrot.lane.b32.xlu0 %v534, 56
    %v1263 = vpop.permute.xlu0 %1262
    %1264 = vrot.lane.b32.xlu0 %v535, 56
    %v1265 = vpop.permute.xlu0 %1264
    %1266 = vrot.lane.b32.xlu0 %v536, 56
    %v1267 = vpop.permute.xlu0 %1266
    %v1269 = vsel %vm593, %v1253, 0
    %v1272 = vsel %vm593, %v1255, 0
    %v1275 = vsel %vm593, %v1257, 0
    %v1278 = vsel %vm593, %v1259, 0
    %v1281 = vsel %vm593, %v1261, 0
    %v1284 = vsel %vm593, %v1263, 0
    %v1287 = vsel %vm593, %v1265, 0
    %v1290 = vsel %vm593, %v1267, 0
    %v1293 = vsel %vm876, %v1251, 0
    %1295 = vmatpush.bf16.msra.mxu0 0
    %1296 = vmatpush.bf16.msra.mxu0 0
    %1297 = vmatpush.bf16.msra.mxu0 0
    %1298 = vmatpush.bf16.msra.mxu0 0
    %1299 = vmatpush.bf16.msra.mxu0 0
    %1300 = vmatpush.bf16.msra.mxu0 0
    %1301 = vmatpush.bf16.msra.mxu0 0
    %1302 = vmatpush.bf16.msra.mxu0 %v1293
    %1303 = vmatmul.bf16.gmra.mxu0 %v1269
    %v1304 = vpop.f32.mrf.mxu0
    %v1305 = vadd.f32 0.0, %v1304
    %v1306 = vpop.f32.mrf.mxu0
    %v1307 = vadd.f32 0.0, %v1306
    %1308 = vmatmul.bf16.gmra.mxu0 %v1272
    %v1309 = vpop.f32.mrf.mxu0
    %v1310 = vadd.f32 0.0, %v1309
    %v1311 = vpop.f32.mrf.mxu0
    %v1312 = vadd.f32 0.0, %v1311
    %1313 = vmatmul.bf16.gmra.mxu0 %v1275
    %v1314 = vpop.f32.mrf.mxu0
    %v1315 = vadd.f32 0.0, %v1314
    %v1316 = vpop.f32.mrf.mxu0
    %v1317 = vadd.f32 0.0, %v1316
    %1318 = vmatmul.bf16.gmra.mxu0 %v1278
    %v1319 = vpop.f32.mrf.mxu0
    %v1320 = vadd.f32 0.0, %v1319
    %v1321 = vpop.f32.mrf.mxu0
    %v1322 = vadd.f32 0.0, %v1321
    %1323 = vmatmul.bf16.gmra.mxu0 %v1281
    %v1324 = vpop.f32.mrf.mxu0
    %v1325 = vadd.f32 0.0, %v1324
    %v1326 = vpop.f32.mrf.mxu0
    %v1327 = vadd.f32 0.0, %v1326
    %1328 = vmatmul.bf16.gmra.mxu0 %v1284
    %v1329 = vpop.f32.mrf.mxu0
    %v1330 = vadd.f32 0.0, %v1329
    %v1331 = vpop.f32.mrf.mxu0
    %v1332 = vadd.f32 0.0, %v1331
    %1333 = vmatmul.bf16.gmra.mxu0 %v1287
    %v1334 = vpop.f32.mrf.mxu0
    %v1335 = vadd.f32 0.0, %v1334
    %v1336 = vpop.f32.mrf.mxu0
    %v1337 = vadd.f32 0.0, %v1336
    %1338 = vmatmul.bf16.gmra.mxu0 %v1290
    %v1339 = vpop.f32.mrf.mxu0
    %v1340 = vadd.f32 0.0, %v1339
    %v1341 = vpop.f32.mrf.mxu0
    %v1342 = vadd.f32 0.0, %v1341
    %1343 = vdwg.mxu0
    %v1344 = vpack.c.bf16 %v1307, %v1305
    %v1345 = vpack.c.bf16 %v1312, %v1310
    %v1346 = vpack.c.bf16 %v1317, %v1315
    %v1347 = vpack.c.bf16 %v1322, %v1320
    %v1348 = vpack.c.bf16 %v1327, %v1325
    %v1349 = vpack.c.bf16 %v1332, %v1330
    %v1350 = vpack.c.bf16 %v1337, %v1335
    %v1351 = vpack.c.bf16 %v1342, %v1340
    %v1352 = vpack.c.bf16 %v1236, %v1235
    %v1353 = vpack.c.bf16 %v1238, %v1237
    %v1354 = vpack.c.bf16 %v1240, %v1239
    %v1355 = vpack.c.bf16 %v1242, %v1241
    %v1356 = vpack.c.bf16 %v1244, %v1243
    %v1357 = vpack.c.bf16 %v1246, %v1245
    %v1358 = vpack.c.bf16 %v1248, %v1247
    %v1359 = vpack.c.bf16 %v1250, %v1249
    %1360 = vmatpush.bf16.msra.mxu0 %v1351
    %1361 = vmatpush.bf16.msra.mxu0 %v1350
    %1362 = vmatpush.bf16.msra.mxu0 %v1349
    %1363 = vmatpush.bf16.msra.mxu0 %v1348
    %1364 = vmatpush.bf16.msra.mxu0 %v1347
    %1365 = vmatpush.bf16.msra.mxu0 %v1346
    %1366 = vmatpush.bf16.msra.mxu0 %v1345
    %1367 = vmatpush.bf16.msra.mxu0 %v1344
    %1368 = vmatmul.bf16.gmra.mxu0 %v1352
    %v1369 = vpop.f32.mrf.mxu0
    %v1370 = vadd.f32 0.0, %v1369
    %v1371 = vpop.f32.mrf.mxu0
    %v1372 = vadd.f32 0.0, %v1371
    %1373 = vmatmul.bf16.gmra.mxu0 %v1353
    %v1374 = vpop.f32.mrf.mxu0
    %v1375 = vadd.f32 0.0, %v1374
    %v1376 = vpop.f32.mrf.mxu0
    %v1377 = vadd.f32 0.0, %v1376
    %1378 = vmatmul.bf16.gmra.mxu0 %v1354
    %v1379 = vpop.f32.mrf.mxu0
    %v1380 = vadd.f32 0.0, %v1379
    %v1381 = vpop.f32.mrf.mxu0
    %v1382 = vadd.f32 0.0, %v1381
    %1383 = vmatmul.bf16.gmra.mxu0 %v1355
    %v1384 = vpop.f32.mrf.mxu0
    %v1385 = vadd.f32 0.0, %v1384
    %v1386 = vpop.f32.mrf.mxu0
    %v1387 = vadd.f32 0.0, %v1386
    %1388 = vmatmul.bf16.gmra.mxu0 %v1356
    %v1389 = vpop.f32.mrf.mxu0
    %v1390 = vadd.f32 0.0, %v1389
    %v1391 = vpop.f32.mrf.mxu0
    %v1392 = vadd.f32 0.0, %v1391
    %1393 = vmatmul.bf16.gmra.mxu0 %v1357
    %v1394 = vpop.f32.mrf.mxu0
    %v1395 = vadd.f32 0.0, %v1394
    %v1396 = vpop.f32.mrf.mxu0
    %v1397 = vadd.f32 0.0, %v1396
    %1398 = vmatmul.bf16.gmra.mxu0 %v1358
    %v1399 = vpop.f32.mrf.mxu0
    %v1400 = vadd.f32 0.0, %v1399
    %v1401 = vpop.f32.mrf.mxu0
    %v1402 = vadd.f32 0.0, %v1401
    %1403 = vmatmul.bf16.gmra.mxu0 %v1359
    %v1404 = vpop.f32.mrf.mxu0
    %v1405 = vadd.f32 0.0, %v1404
    %v1406 = vpop.f32.mrf.mxu0
    %v1407 = vadd.f32 0.0, %v1406
    %1408 = vdwg.mxu0
    %1409 = vmatpush.bf16.msra.mxu0 %v936
    %1410 = vmatpush.bf16.msra.mxu0 %v935
    %1411 = vmatpush.bf16.msra.mxu0 %v934
    %1412 = vmatpush.bf16.msra.mxu0 %v933
    %1413 = vmatpush.bf16.msra.mxu0 %v932
    %1414 = vmatpush.bf16.msra.mxu0 %v931
    %1415 = vmatpush.bf16.msra.mxu0 %v930
    %1416 = vmatpush.bf16.msra.mxu0 %v929
    %1417 = vmatmul.bf16.gmra.mxu0 %v937
    %v1418 = vpop.f32.mrf.mxu0
    %v1419 = vadd.f32 %v1370, %v1418
    %v1420 = vpop.f32.mrf.mxu0
    %v1421 = vadd.f32 %v1372, %v1420
    %1422 = vmatmul.bf16.gmra.mxu0 %v938
    %v1423 = vpop.f32.mrf.mxu0
    %v1424 = vadd.f32 %v1375, %v1423
    %v1425 = vpop.f32.mrf.mxu0
    %v1426 = vadd.f32 %v1377, %v1425
    %1427 = vmatmul.bf16.gmra.mxu0 %v939
    %v1428 = vpop.f32.mrf.mxu0
    %v1429 = vadd.f32 %v1380, %v1428
    %v1430 = vpop.f32.mrf.mxu0
    %v1431 = vadd.f32 %v1382, %v1430
    %1432 = vmatmul.bf16.gmra.mxu0 %v940
    %v1433 = vpop.f32.mrf.mxu0
    %v1434 = vadd.f32 %v1385, %v1433
    %v1435 = vpop.f32.mrf.mxu0
    %v1436 = vadd.f32 %v1387, %v1435
    %1437 = vmatmul.bf16.gmra.mxu0 %v941
    %v1438 = vpop.f32.mrf.mxu0
    %v1439 = vadd.f32 %v1390, %v1438
    %v1440 = vpop.f32.mrf.mxu0
    %v1441 = vadd.f32 %v1392, %v1440
    %1442 = vmatmul.bf16.gmra.mxu0 %v942
    %v1443 = vpop.f32.mrf.mxu0
    %v1444 = vadd.f32 %v1395, %v1443
    %v1445 = vpop.f32.mrf.mxu0
    %v1446 = vadd.f32 %v1397, %v1445
    %1447 = vmatmul.bf16.gmra.mxu0 %v943
    %v1448 = vpop.f32.mrf.mxu0
    %v1449 = vadd.f32 %v1400, %v1448
    %v1450 = vpop.f32.mrf.mxu0
    %v1451 = vadd.f32 %v1402, %v1450
    %1452 = vmatmul.bf16.gmra.mxu0 %v944
    %v1453 = vpop.f32.mrf.mxu0
    %v1454 = vadd.f32 %v1405, %v1453
    %v1455 = vpop.f32.mrf.mxu0
    %v1456 = vadd.f32 %v1407, %v1455
    %1457 = vdwg.mxu0
    %s1458 = scalar_lea.vmem [#allocation2], 128
    %v1459 = vld [vmem:[%s1458] sm:$0xf]
    %v1460 = vld [vmem:[%s1458 + $0x4] sm:$0xf]
    %v1461 = vld [vmem:[%s1458 + $0x8] sm:$0xf]
    %v1462 = vld [vmem:[%s1458 + $0xc] sm:$0xf]
    %v1463 = vld [vmem:[%s1458 + $0x10] sm:$0xf]
    %v1464 = vld [vmem:[%s1458 + $0x14] sm:$0xf]
    %v1465 = vld [vmem:[%s1458 + $0x18] sm:$0xf]
    %v1466 = vld [vmem:[%s1458 + $0x1c] sm:$0xf]
    %v1467 = vld [vmem:[%s1458 + $0x20] sm:$0xf]
    %v1468 = vld [vmem:[%s1458 + $0x24] sm:$0xf]
    %v1469 = vld [vmem:[%s1458 + $0x28] sm:$0xf]
    %v1470 = vld [vmem:[%s1458 + $0x2c] sm:$0xf]
    %v1471 = vld [vmem:[%s1458 + $0x30] sm:$0xf]
    %v1472 = vld [vmem:[%s1458 + $0x34] sm:$0xf]
    %v1473 = vld [vmem:[%s1458 + $0x38] sm:$0xf]
    %v1474 = vld [vmem:[%s1458 + $0x3c] sm:$0xf]
    %v1475 = vunpack.c.l.bf16 %v1459
    %v1476 = vunpack.c.l.bf16 %v1460
    %v1477 = vunpack.c.l.bf16 %v1461
    %v1478 = vunpack.c.l.bf16 %v1462
    %v1479 = vunpack.c.l.bf16 %v1463
    %v1480 = vunpack.c.l.bf16 %v1464
    %v1481 = vunpack.c.l.bf16 %v1465
    %v1482 = vunpack.c.l.bf16 %v1466
    %v1483 = vunpack.c.l.bf16 %v1467
    %v1484 = vunpack.c.l.bf16 %v1468
    %v1485 = vunpack.c.l.bf16 %v1469
    %v1486 = vunpack.c.l.bf16 %v1470
    %v1487 = vunpack.c.l.bf16 %v1471
    %v1488 = vunpack.c.l.bf16 %v1472
    %v1489 = vunpack.c.l.bf16 %v1473
    %v1490 = vunpack.c.l.bf16 %v1474
    %1491 = vrot.lane.b32.xlu0 %v529, 112
    %v1492 = vpop.permute.xlu0 %1491
    %1493 = vrot.lane.b32.xlu0 %v530, 112
    %v1494 = vpop.permute.xlu0 %1493
    %1495 = vrot.lane.b32.xlu0 %v531, 112
    %v1496 = vpop.permute.xlu0 %1495
    %1497 = vrot.lane.b32.xlu0 %v532, 112
    %v1498 = vpop.permute.xlu0 %1497
    %1499 = vrot.lane.b32.xlu0 %v533, 112
    %v1500 = vpop.permute.xlu0 %1499
    %1501 = vrot.lane.b32.xlu0 %v534, 112
    %v1502 = vpop.permute.xlu0 %1501
    %1503 = vrot.lane.b32.xlu0 %v535, 112
    %v1504 = vpop.permute.xlu0 %1503
    %1505 = vrot.lane.b32.xlu0 %v536, 112
    %v1506 = vpop.permute.xlu0 %1505
    %1507 = vrot.lane.b32.xlu0 %v529, 80
    %v1508 = vpop.permute.xlu0 %1507
    %1509 = vrot.lane.b32.xlu0 %v530, 80
    %v1510 = vpop.permute.xlu0 %1509
    %1511 = vrot.lane.b32.xlu0 %v531, 80
    %v1512 = vpop.permute.xlu0 %1511
    %1513 = vrot.lane.b32.xlu0 %v532, 80
    %v1514 = vpop.permute.xlu0 %1513
    %1515 = vrot.lane.b32.xlu0 %v533, 80
    %v1516 = vpop.permute.xlu0 %1515
    %1517 = vrot.lane.b32.xlu0 %v534, 80
    %v1518 = vpop.permute.xlu0 %1517
    %1519 = vrot.lane.b32.xlu0 %v535, 80
    %v1520 = vpop.permute.xlu0 %1519
    %1521 = vrot.lane.b32.xlu0 %v536, 80
    %v1522 = vpop.permute.xlu0 %1521
    %v1524 = vsel %vm593, %v1492, 0
    %v1527 = vsel %vm593, %v1494, 0
    %v1530 = vsel %vm593, %v1496, 0
    %v1533 = vsel %vm593, %v1498, 0
    %v1536 = vsel %vm593, %v1500, 0
    %v1539 = vsel %vm593, %v1502, 0
    %v1542 = vsel %vm593, %v1504, 0
    %v1545 = vsel %vm593, %v1506, 0
    %v1548 = vsel %vm593, %v1508, 0
    %v1551 = vsel %vm593, %v1510, 0
    %v1554 = vsel %vm593, %v1512, 0
    %v1557 = vsel %vm593, %v1514, 0
    %v1560 = vsel %vm593, %v1516, 0
    %v1563 = vsel %vm593, %v1518, 0
    %v1566 = vsel %vm593, %v1520, 0
    %v1569 = vsel %vm593, %v1522, 0
    %1571 = vmatpush.bf16.xpose.msra.mxu0 %v1569
    %1572 = vmatpush.bf16.xpose.msra.mxu0 %v1566
    %1573 = vmatpush.bf16.xpose.msra.mxu0 %v1563
    %1574 = vmatpush.bf16.xpose.msra.mxu0 %v1560
    %1575 = vmatpush.bf16.xpose.msra.mxu0 %v1557
    %1576 = vmatpush.bf16.xpose.msra.mxu0 %v1554
    %1577 = vmatpush.bf16.xpose.msra.mxu0 %v1551
    %1578 = vmatpush.bf16.xpose.msra.mxu0 %v1548
    %1579 = vmatmul.bf16.gmra.mxu0 %v1524
    %v1580 = vpop.f32.mrf.mxu0
    %v1581 = vadd.f32 %v1475, %v1580
    %v1582 = vpop.f32.mrf.mxu0
    %v1583 = vadd.f32 %v1476, %v1582
    %1584 = vmatmul.bf16.gmra.mxu0 %v1527
    %v1585 = vpop.f32.mrf.mxu0
    %v1586 = vadd.f32 %v1477, %v1585
    %v1587 = vpop.f32.mrf.mxu0
    %v1588 = vadd.f32 %v1478, %v1587
    %1589 = vmatmul.bf16.gmra.mxu0 %v1530
    %v1590 = vpop.f32.mrf.mxu0
    %v1591 = vadd.f32 %v1479, %v1590
    %v1592 = vpop.f32.mrf.mxu0
    %v1593 = vadd.f32 %v1480, %v1592
    %1594 = vmatmul.bf16.gmra.mxu0 %v1533
    %v1595 = vpop.f32.mrf.mxu0
    %v1596 = vadd.f32 %v1481, %v1595
    %v1597 = vpop.f32.mrf.mxu0
    %v1598 = vadd.f32 %v1482, %v1597
    %1599 = vmatmul.bf16.gmra.mxu0 %v1536
    %v1600 = vpop.f32.mrf.mxu0
    %v1601 = vadd.f32 %v1483, %v1600
    %v1602 = vpop.f32.mrf.mxu0
    %v1603 = vadd.f32 %v1484, %v1602
    %1604 = vmatmul.bf16.gmra.mxu0 %v1539
    %v1605 = vpop.f32.mrf.mxu0
    %v1606 = vadd.f32 %v1485, %v1605
    %v1607 = vpop.f32.mrf.mxu0
    %v1608 = vadd.f32 %v1486, %v1607
    %1609 = vmatmul.bf16.gmra.mxu0 %v1542
    %v1610 = vpop.f32.mrf.mxu0
    %v1611 = vadd.f32 %v1487, %v1610
    %v1612 = vpop.f32.mrf.mxu0
    %v1613 = vadd.f32 %v1488, %v1612
    %1614 = vmatmul.bf16.gmra.mxu0 %v1545
    %v1615 = vpop.f32.mrf.mxu0
    %v1616 = vadd.f32 %v1489, %v1615
    %v1617 = vpop.f32.mrf.mxu0
    %v1618 = vadd.f32 %v1490, %v1617
    %1619 = vdwg.mxu0
    %1620 = vmax.xlane.f32.xlu0 %v1581
    %v1621 = vpop.xlane.xlu0 %1620
    %1622 = vmax.xlane.f32.xlu0 %v1583
    %v1623 = vpop.xlane.xlu0 %1622
    %1624 = vmax.xlane.f32.xlu0 %v1586
    %v1625 = vpop.xlane.xlu0 %1624
    %1626 = vmax.xlane.f32.xlu0 %v1588
    %v1627 = vpop.xlane.xlu0 %1626
    %1628 = vmax.xlane.f32.xlu0 %v1591
    %v1629 = vpop.xlane.xlu0 %1628
    %1630 = vmax.xlane.f32.xlu0 %v1593
    %v1631 = vpop.xlane.xlu0 %1630
    %1632 = vmax.xlane.f32.xlu0 %v1596
    %v1633 = vpop.xlane.xlu0 %1632
    %1634 = vmax.xlane.f32.xlu0 %v1598
    %v1635 = vpop.xlane.xlu0 %1634
    %1636 = vmax.xlane.f32.xlu0 %v1601
    %v1637 = vpop.xlane.xlu0 %1636
    %1638 = vmax.xlane.f32.xlu0 %v1603
    %v1639 = vpop.xlane.xlu0 %1638
    %1640 = vmax.xlane.f32.xlu0 %v1606
    %v1641 = vpop.xlane.xlu0 %1640
    %1642 = vmax.xlane.f32.xlu0 %v1608
    %v1643 = vpop.xlane.xlu0 %1642
    %1644 = vmax.xlane.f32.xlu0 %v1611
    %v1645 = vpop.xlane.xlu0 %1644
    %1646 = vmax.xlane.f32.xlu0 %v1613
    %v1647 = vpop.xlane.xlu0 %1646
    %1648 = vmax.xlane.f32.xlu0 %v1616
    %v1649 = vpop.xlane.xlu0 %1648
    %1650 = vmax.xlane.f32.xlu0 %v1618
    %v1651 = vpop.xlane.xlu0 %1650
    %v1652 = vsub.f32 %v1581, %v1621
    %v1653 = vsub.f32 %v1583, %v1623
    %v1654 = vsub.f32 %v1586, %v1625
    %v1655 = vsub.f32 %v1588, %v1627
    %v1656 = vsub.f32 %v1591, %v1629
    %v1657 = vsub.f32 %v1593, %v1631
    %v1658 = vsub.f32 %v1596, %v1633
    %v1659 = vsub.f32 %v1598, %v1635
    %v1660 = vsub.f32 %v1601, %v1637
    %v1661 = vsub.f32 %v1603, %v1639
    %v1662 = vsub.f32 %v1606, %v1641
    %v1663 = vsub.f32 %v1608, %v1643
    %v1664 = vsub.f32 %v1611, %v1645
    %v1665 = vsub.f32 %v1613, %v1647
    %v1666 = vsub.f32 %v1616, %v1649
    %v1667 = vsub.f32 %v1618, %v1651
    %v1668 = vmul.f32 %v1652, 1.442695
    %v1669 = vpow.pop %v1668
    %v1670 = vmul.f32 %v1653, 1.442695
    %v1671 = vpow.pop %v1670
    %v1672 = vmul.f32 %v1654, 1.442695
    %v1673 = vpow.pop %v1672
    %v1674 = vmul.f32 %v1655, 1.442695
    %v1675 = vpow.pop %v1674
    %v1676 = vmul.f32 %v1656, 1.442695
    %v1677 = vpow.pop %v1676
    %v1678 = vmul.f32 %v1657, 1.442695
    %v1679 = vpow.pop %v1678
    %v1680 = vmul.f32 %v1658, 1.442695
    %v1681 = vpow.pop %v1680
    %v1682 = vmul.f32 %v1659, 1.442695
    %v1683 = vpow.pop %v1682
    %v1684 = vmul.f32 %v1660, 1.442695
    %v1685 = vpow.pop %v1684
    %v1686 = vmul.f32 %v1661, 1.442695
    %v1687 = vpow.pop %v1686
    %v1688 = vmul.f32 %v1662, 1.442695
    %v1689 = vpow.pop %v1688
    %v1690 = vmul.f32 %v1663, 1.442695
    %v1691 = vpow.pop %v1690
    %v1692 = vmul.f32 %v1664, 1.442695
    %v1693 = vpow.pop %v1692
    %v1694 = vmul.f32 %v1665, 1.442695
    %v1695 = vpow.pop %v1694
    %v1696 = vmul.f32 %v1666, 1.442695
    %v1697 = vpow.pop %v1696
    %v1698 = vmul.f32 %v1667, 1.442695
    %v1699 = vpow.pop %v1698
    %1700 = vadd.xlane.f32.xlu0 %v1669
    %v1701 = vpop.xlane.xlu0 %1700
    %1702 = vadd.xlane.f32.xlu0 %v1671
    %v1703 = vpop.xlane.xlu0 %1702
    %1704 = vadd.xlane.f32.xlu0 %v1673
    %v1705 = vpop.xlane.xlu0 %1704
    %1706 = vadd.xlane.f32.xlu0 %v1675
    %v1707 = vpop.xlane.xlu0 %1706
    %1708 = vadd.xlane.f32.xlu0 %v1677
    %v1709 = vpop.xlane.xlu0 %1708
    %1710 = vadd.xlane.f32.xlu0 %v1679
    %v1711 = vpop.xlane.xlu0 %1710
    %1712 = vadd.xlane.f32.xlu0 %v1681
    %v1713 = vpop.xlane.xlu0 %1712
    %1714 = vadd.xlane.f32.xlu0 %v1683
    %v1715 = vpop.xlane.xlu0 %1714
    %1716 = vadd.xlane.f32.xlu0 %v1685
    %v1717 = vpop.xlane.xlu0 %1716
    %1718 = vadd.xlane.f32.xlu0 %v1687
    %v1719 = vpop.xlane.xlu0 %1718
    %1720 = vadd.xlane.f32.xlu0 %v1689
    %v1721 = vpop.xlane.xlu0 %1720
    %1722 = vadd.xlane.f32.xlu0 %v1691
    %v1723 = vpop.xlane.xlu0 %1722
    %1724 = vadd.xlane.f32.xlu0 %v1693
    %v1725 = vpop.xlane.xlu0 %1724
    %1726 = vadd.xlane.f32.xlu0 %v1695
    %v1727 = vpop.xlane.xlu0 %1726
    %1728 = vadd.xlane.f32.xlu0 %v1697
    %v1729 = vpop.xlane.xlu0 %1728
    %1730 = vadd.xlane.f32.xlu0 %v1699
    %v1731 = vpop.xlane.xlu0 %1730
    %v1732 = vrcp.pop %v1701
    %v1733 = vrcp.pop %v1703
    %v1734 = vrcp.pop %v1705
    %v1735 = vrcp.pop %v1707
    %v1736 = vrcp.pop %v1709
    %v1737 = vrcp.pop %v1711
    %v1738 = vrcp.pop %v1713
    %v1739 = vrcp.pop %v1715
    %v1740 = vrcp.pop %v1717
    %v1741 = vrcp.pop %v1719
    %v1742 = vrcp.pop %v1721
    %v1743 = vrcp.pop %v1723
    %v1744 = vrcp.pop %v1725
    %v1745 = vrcp.pop %v1727
    %v1746 = vrcp.pop %v1729
    %v1747 = vrcp.pop %v1731
    %v1748 = vmul.f32 %v1669, %v1732
    %v1749 = vmul.f32 %v1671, %v1733
    %v1750 = vmul.f32 %v1673, %v1734
    %v1751 = vmul.f32 %v1675, %v1735
    %v1752 = vmul.f32 %v1677, %v1736
    %v1753 = vmul.f32 %v1679, %v1737
    %v1754 = vmul.f32 %v1681, %v1738
    %v1755 = vmul.f32 %v1683, %v1739
    %v1756 = vmul.f32 %v1685, %v1740
    %v1757 = vmul.f32 %v1687, %v1741
    %v1758 = vmul.f32 %v1689, %v1742
    %v1759 = vmul.f32 %v1691, %v1743
    %v1760 = vmul.f32 %v1693, %v1744
    %v1761 = vmul.f32 %v1695, %v1745
    %v1762 = vmul.f32 %v1697, %v1746
    %v1763 = vmul.f32 %v1699, %v1747
    %v1764 = vld [vmem:[%s4 + $0x8] sm:$0xf]
    %1765 = vrot.lane.b32.xlu0 %v529, 48
    %v1766 = vpop.permute.xlu0 %1765
    %1767 = vrot.lane.b32.xlu0 %v530, 48
    %v1768 = vpop.permute.xlu0 %1767
    %1769 = vrot.lane.b32.xlu0 %v531, 48
    %v1770 = vpop.permute.xlu0 %1769
    %1771 = vrot.lane.b32.xlu0 %v532, 48
    %v1772 = vpop.permute.xlu0 %1771
    %1773 = vrot.lane.b32.xlu0 %v533, 48
    %v1774 = vpop.permute.xlu0 %1773
    %1775 = vrot.lane.b32.xlu0 %v534, 48
    %v1776 = vpop.permute.xlu0 %1775
    %1777 = vrot.lane.b32.xlu0 %v535, 48
    %v1778 = vpop.permute.xlu0 %1777
    %1779 = vrot.lane.b32.xlu0 %v536, 48
    %v1780 = vpop.permute.xlu0 %1779
    %v1782 = vsel %vm593, %v1766, 0
    %v1785 = vsel %vm593, %v1768, 0
    %v1788 = vsel %vm593, %v1770, 0
    %v1791 = vsel %vm593, %v1772, 0
    %v1794 = vsel %vm593, %v1774, 0
    %v1797 = vsel %vm593, %v1776, 0
    %v1800 = vsel %vm593, %v1778, 0
    %v1803 = vsel %vm593, %v1780, 0
    %v1806 = vsel %vm876, %v1764, 0
    %1808 = vmatpush.bf16.msra.mxu0 0
    %1809 = vmatpush.bf16.msra.mxu0 0
    %1810 = vmatpush.bf16.msra.mxu0 0
    %1811 = vmatpush.bf16.msra.mxu0 0
    %1812 = vmatpush.bf16.msra.mxu0 0
    %1813 = vmatpush.bf16.msra.mxu0 0
    %1814 = vmatpush.bf16.msra.mxu0 0
    %1815 = vmatpush.bf16.msra.mxu0 %v1806
    %1816 = vmatmul.bf16.gmra.mxu0 %v1782
    %v1817 = vpop.f32.mrf.mxu0
    %v1818 = vadd.f32 0.0, %v1817
    %v1819 = vpop.f32.mrf.mxu0
    %v1820 = vadd.f32 0.0, %v1819
    %1821 = vmatmul.bf16.gmra.mxu0 %v1785
    %v1822 = vpop.f32.mrf.mxu0
    %v1823 = vadd.f32 0.0, %v1822
    %v1824 = vpop.f32.mrf.mxu0
    %v1825 = vadd.f32 0.0, %v1824
    %1826 = vmatmul.bf16.gmra.mxu0 %v1788
    %v1827 = vpop.f32.mrf.mxu0
    %v1828 = vadd.f32 0.0, %v1827
    %v1829 = vpop.f32.mrf.mxu0
    %v1830 = vadd.f32 0.0, %v1829
    %1831 = vmatmul.bf16.gmra.mxu0 %v1791
    %v1832 = vpop.f32.mrf.mxu0
    %v1833 = vadd.f32 0.0, %v1832
    %v1834 = vpop.f32.mrf.mxu0
    %v1835 = vadd.f32 0.0, %v1834
    %1836 = vmatmul.bf16.gmra.mxu0 %v1794
    %v1837 = vpop.f32.mrf.mxu0
    %v1838 = vadd.f32 0.0, %v1837
    %v1839 = vpop.f32.mrf.mxu0
    %v1840 = vadd.f32 0.0, %v1839
    %1841 = vmatmul.bf16.gmra.mxu0 %v1797
    %v1842 = vpop.f32.mrf.mxu0
    %v1843 = vadd.f32 0.0, %v1842
    %v1844 = vpop.f32.mrf.mxu0
    %v1845 = vadd.f32 0.0, %v1844
    %1846 = vmatmul.bf16.gmra.mxu0 %v1800
    %v1847 = vpop.f32.mrf.mxu0
    %v1848 = vadd.f32 0.0, %v1847
    %v1849 = vpop.f32.mrf.mxu0
    %v1850 = vadd.f32 0.0, %v1849
    %1851 = vmatmul.bf16.gmra.mxu0 %v1803
    %v1852 = vpop.f32.mrf.mxu0
    %v1853 = vadd.f32 0.0, %v1852
    %v1854 = vpop.f32.mrf.mxu0
    %v1855 = vadd.f32 0.0, %v1854
    %1856 = vdwg.mxu0
    %v1857 = vpack.c.bf16 %v1820, %v1818
    %v1858 = vpack.c.bf16 %v1825, %v1823
    %v1859 = vpack.c.bf16 %v1830, %v1828
    %v1860 = vpack.c.bf16 %v1835, %v1833
    %v1861 = vpack.c.bf16 %v1840, %v1838
    %v1862 = vpack.c.bf16 %v1845, %v1843
    %v1863 = vpack.c.bf16 %v1850, %v1848
    %v1864 = vpack.c.bf16 %v1855, %v1853
    %v1865 = vpack.c.bf16 %v1749, %v1748
    %v1866 = vpack.c.bf16 %v1751, %v1750
    %v1867 = vpack.c.bf16 %v1753, %v1752
    %v1868 = vpack.c.bf16 %v1755, %v1754
    %v1869 = vpack.c.bf16 %v1757, %v1756
    %v1870 = vpack.c.bf16 %v1759, %v1758
    %v1871 = vpack.c.bf16 %v1761, %v1760
    %v1872 = vpack.c.bf16 %v1763, %v1762
    %1873 = vmatpush.bf16.msra.mxu0 %v1864
    %1874 = vmatpush.bf16.msra.mxu0 %v1863
    %1875 = vmatpush.bf16.msra.mxu0 %v1862
    %1876 = vmatpush.bf16.msra.mxu0 %v1861
    %1877 = vmatpush.bf16.msra.mxu0 %v1860
    %1878 = vmatpush.bf16.msra.mxu0 %v1859
    %1879 = vmatpush.bf16.msra.mxu0 %v1858
    %1880 = vmatpush.bf16.msra.mxu0 %v1857
    %1881 = vmatmul.bf16.gmra.mxu0 %v1865
    %v1882 = vpop.f32.mrf.mxu0
    %v1883 = vadd.f32 0.0, %v1882
    %v1884 = vpop.f32.mrf.mxu0
    %v1885 = vadd.f32 0.0, %v1884
    %1886 = vmatmul.bf16.gmra.mxu0 %v1866
    %v1887 = vpop.f32.mrf.mxu0
    %v1888 = vadd.f32 0.0, %v1887
    %v1889 = vpop.f32.mrf.mxu0
    %v1890 = vadd.f32 0.0, %v1889
    %1891 = vmatmul.bf16.gmra.mxu0 %v1867
    %v1892 = vpop.f32.mrf.mxu0
    %v1893 = vadd.f32 0.0, %v1892
    %v1894 = vpop.f32.mrf.mxu0
    %v1895 = vadd.f32 0.0, %v1894
    %1896 = vmatmul.bf16.gmra.mxu0 %v1868
    %v1897 = vpop.f32.mrf.mxu0
    %v1898 = vadd.f32 0.0, %v1897
    %v1899 = vpop.f32.mrf.mxu0
    %v1900 = vadd.f32 0.0, %v1899
    %1901 = vmatmul.bf16.gmra.mxu0 %v1869
    %v1902 = vpop.f32.mrf.mxu0
    %v1903 = vadd.f32 0.0, %v1902
    %v1904 = vpop.f32.mrf.mxu0
    %v1905 = vadd.f32 0.0, %v1904
    %1906 = vmatmul.bf16.gmra.mxu0 %v1870
    %v1907 = vpop.f32.mrf.mxu0
    %v1908 = vadd.f32 0.0, %v1907
    %v1909 = vpop.f32.mrf.mxu0
    %v1910 = vadd.f32 0.0, %v1909
    %1911 = vmatmul.bf16.gmra.mxu0 %v1871
    %v1912 = vpop.f32.mrf.mxu0
    %v1913 = vadd.f32 0.0, %v1912
    %v1914 = vpop.f32.mrf.mxu0
    %v1915 = vadd.f32 0.0, %v1914
    %1916 = vmatmul.bf16.gmra.mxu0 %v1872
    %v1917 = vpop.f32.mrf.mxu0
    %v1918 = vadd.f32 0.0, %v1917
    %v1919 = vpop.f32.mrf.mxu0
    %v1920 = vadd.f32 0.0, %v1919
    %1921 = vdwg.mxu0
    %v1922 = vadd.f32 %v1419, %v1883
    %v1923 = vadd.f32 %v1421, %v1885
    %v1924 = vadd.f32 %v1424, %v1888
    %v1925 = vadd.f32 %v1426, %v1890
    %v1926 = vadd.f32 %v1429, %v1893
    %v1927 = vadd.f32 %v1431, %v1895
    %v1928 = vadd.f32 %v1434, %v1898
    %v1929 = vadd.f32 %v1436, %v1900
    %v1930 = vadd.f32 %v1439, %v1903
    %v1931 = vadd.f32 %v1441, %v1905
    %v1932 = vadd.f32 %v1444, %v1908
    %v1933 = vadd.f32 %v1446, %v1910
    %v1934 = vadd.f32 %v1449, %v1913
    %v1935 = vadd.f32 %v1451, %v1915
    %v1936 = vadd.f32 %v1454, %v1918
    %v1937 = vadd.f32 %v1456, %v1920
    %s1938 = scalar_lea.vmem [#allocation2], 192
    %v1939 = vld [vmem:[%s1938] sm:$0xf]
    %v1940 = vld [vmem:[%s1938 + $0x4] sm:$0xf]
    %v1941 = vld [vmem:[%s1938 + $0x8] sm:$0xf]
    %v1942 = vld [vmem:[%s1938 + $0xc] sm:$0xf]
    %v1943 = vld [vmem:[%s1938 + $0x10] sm:$0xf]
    %v1944 = vld [vmem:[%s1938 + $0x14] sm:$0xf]
    %v1945 = vld [vmem:[%s1938 + $0x18] sm:$0xf]
    %v1946 = vld [vmem:[%s1938 + $0x1c] sm:$0xf]
    %v1947 = vld [vmem:[%s1938 + $0x20] sm:$0xf]
    %v1948 = vld [vmem:[%s1938 + $0x24] sm:$0xf]
    %v1949 = vld [vmem:[%s1938 + $0x28] sm:$0xf]
    %v1950 = vld [vmem:[%s1938 + $0x2c] sm:$0xf]
    %v1951 = vld [vmem:[%s1938 + $0x30] sm:$0xf]
    %v1952 = vld [vmem:[%s1938 + $0x34] sm:$0xf]
    %v1953 = vld [vmem:[%s1938 + $0x38] sm:$0xf]
    %v1954 = vld [vmem:[%s1938 + $0x3c] sm:$0xf]
    %v1955 = vunpack.c.l.bf16 %v1939
    %v1956 = vunpack.c.l.bf16 %v1940
    %v1957 = vunpack.c.l.bf16 %v1941
    %v1958 = vunpack.c.l.bf16 %v1942
    %v1959 = vunpack.c.l.bf16 %v1943
    %v1960 = vunpack.c.l.bf16 %v1944
    %v1961 = vunpack.c.l.bf16 %v1945
    %v1962 = vunpack.c.l.bf16 %v1946
    %v1963 = vunpack.c.l.bf16 %v1947
    %v1964 = vunpack.c.l.bf16 %v1948
    %v1965 = vunpack.c.l.bf16 %v1949
    %v1966 = vunpack.c.l.bf16 %v1950
    %v1967 = vunpack.c.l.bf16 %v1951
    %v1968 = vunpack.c.l.bf16 %v1952
    %v1969 = vunpack.c.l.bf16 %v1953
    %v1970 = vunpack.c.l.bf16 %v1954
    %1971 = vrot.lane.b32.xlu0 %v529, 104
    %v1972 = vpop.permute.xlu0 %1971
    %1973 = vrot.lane.b32.xlu0 %v530, 104
    %v1974 = vpop.permute.xlu0 %1973
    %1975 = vrot.lane.b32.xlu0 %v531, 104
    %v1976 = vpop.permute.xlu0 %1975
    %1977 = vrot.lane.b32.xlu0 %v532, 104
    %v1978 = vpop.permute.xlu0 %1977
    %1979 = vrot.lane.b32.xlu0 %v533, 104
    %v1980 = vpop.permute.xlu0 %1979
    %1981 = vrot.lane.b32.xlu0 %v534, 104
    %v1982 = vpop.permute.xlu0 %1981
    %1983 = vrot.lane.b32.xlu0 %v535, 104
    %v1984 = vpop.permute.xlu0 %1983
    %1985 = vrot.lane.b32.xlu0 %v536, 104
    %v1986 = vpop.permute.xlu0 %1985
    %1987 = vrot.lane.b32.xlu0 %v529, 72
    %v1988 = vpop.permute.xlu0 %1987
    %1989 = vrot.lane.b32.xlu0 %v530, 72
    %v1990 = vpop.permute.xlu0 %1989
    %1991 = vrot.lane.b32.xlu0 %v531, 72
    %v1992 = vpop.permute.xlu0 %1991
    %1993 = vrot.lane.b32.xlu0 %v532, 72
    %v1994 = vpop.permute.xlu0 %1993
    %1995 = vrot.lane.b32.xlu0 %v533, 72
    %v1996 = vpop.permute.xlu0 %1995
    %1997 = vrot.lane.b32.xlu0 %v534, 72
    %v1998 = vpop.permute.xlu0 %1997
    %1999 = vrot.lane.b32.xlu0 %v535, 72
    %v2000 = vpop.permute.xlu0 %1999
    %2001 = vrot.lane.b32.xlu0 %v536, 72
    %v2002 = vpop.permute.xlu0 %2001
    %v2004 = vsel %vm593, %v1972, 0
    %v2007 = vsel %vm593, %v1974, 0
    %v2010 = vsel %vm593, %v1976, 0
    %v2013 = vsel %vm593, %v1978, 0
    %v2016 = vsel %vm593, %v1980, 0
    %v2019 = vsel %vm593, %v1982, 0
    %v2022 = vsel %vm593, %v1984, 0
    %v2025 = vsel %vm593, %v1986, 0
    %v2028 = vsel %vm593, %v1988, 0
    %v2031 = vsel %vm593, %v1990, 0
    %v2034 = vsel %vm593, %v1992, 0
    %v2037 = vsel %vm593, %v1994, 0
    %v2040 = vsel %vm593, %v1996, 0
    %v2043 = vsel %vm593, %v1998, 0
    %v2046 = vsel %vm593, %v2000, 0
    %v2049 = vsel %vm593, %v2002, 0
    %2051 = vmatpush.bf16.xpose.msra.mxu0 %v2049
    %2052 = vmatpush.bf16.xpose.msra.mxu0 %v2046
    %2053 = vmatpush.bf16.xpose.msra.mxu0 %v2043
    %2054 = vmatpush.bf16.xpose.msra.mxu0 %v2040
    %2055 = vmatpush.bf16.xpose.msra.mxu0 %v2037
    %2056 = vmatpush.bf16.xpose.msra.mxu0 %v2034
    %2057 = vmatpush.bf16.xpose.msra.mxu0 %v2031
    %2058 = vmatpush.bf16.xpose.msra.mxu0 %v2028
    %2059 = vmatmul.bf16.gmra.mxu0 %v2004
    %v2060 = vpop.f32.mrf.mxu0
    %v2061 = vadd.f32 %v1955, %v2060
    %v2062 = vpop.f32.mrf.mxu0
    %v2063 = vadd.f32 %v1956, %v2062
    %2064 = vmatmul.bf16.gmra.mxu0 %v2007
    %v2065 = vpop.f32.mrf.mxu0
    %v2066 = vadd.f32 %v1957, %v2065
    %v2067 = vpop.f32.mrf.mxu0
    %v2068 = vadd.f32 %v1958, %v2067
    %2069 = vmatmul.bf16.gmra.mxu0 %v2010
    %v2070 = vpop.f32.mrf.mxu0
    %v2071 = vadd.f32 %v1959, %v2070
    %v2072 = vpop.f32.mrf.mxu0
    %v2073 = vadd.f32 %v1960, %v2072
    %2074 = vmatmul.bf16.gmra.mxu0 %v2013
    %v2075 = vpop.f32.mrf.mxu0
    %v2076 = vadd.f32 %v1961, %v2075
    %v2077 = vpop.f32.mrf.mxu0
    %v2078 = vadd.f32 %v1962, %v2077
    %2079 = vmatmul.bf16.gmra.mxu0 %v2016
    %v2080 = vpop.f32.mrf.mxu0
    %v2081 = vadd.f32 %v1963, %v2080
    %v2082 = vpop.f32.mrf.mxu0
    %v2083 = vadd.f32 %v1964, %v2082
    %2084 = vmatmul.bf16.gmra.mxu0 %v2019
    %v2085 = vpop.f32.mrf.mxu0
    %v2086 = vadd.f32 %v1965, %v2085
    %v2087 = vpop.f32.mrf.mxu0
    %v2088 = vadd.f32 %v1966, %v2087
    %2089 = vmatmul.bf16.gmra.mxu0 %v2022
    %v2090 = vpop.f32.mrf.mxu0
    %v2091 = vadd.f32 %v1967, %v2090
    %v2092 = vpop.f32.mrf.mxu0
    %v2093 = vadd.f32 %v1968, %v2092
    %2094 = vmatmul.bf16.gmra.mxu0 %v2025
    %v2095 = vpop.f32.mrf.mxu0
    %v2096 = vadd.f32 %v1969, %v2095
    %v2097 = vpop.f32.mrf.mxu0
    %v2098 = vadd.f32 %v1970, %v2097
    %2099 = vdwg.mxu0
    %2100 = vmax.xlane.f32.xlu0 %v2061
    %v2101 = vpop.xlane.xlu0 %2100
    %2102 = vmax.xlane.f32.xlu0 %v2063
    %v2103 = vpop.xlane.xlu0 %2102
    %2104 = vmax.xlane.f32.xlu0 %v2066
    %v2105 = vpop.xlane.xlu0 %2104
    %2106 = vmax.xlane.f32.xlu0 %v2068
    %v2107 = vpop.xlane.xlu0 %2106
    %2108 = vmax.xlane.f32.xlu0 %v2071
    %v2109 = vpop.xlane.xlu0 %2108
    %2110 = vmax.xlane.f32.xlu0 %v2073
    %v2111 = vpop.xlane.xlu0 %2110
    %2112 = vmax.xlane.f32.xlu0 %v2076
    %v2113 = vpop.xlane.xlu0 %2112
    %2114 = vmax.xlane.f32.xlu0 %v2078
    %v2115 = vpop.xlane.xlu0 %2114
    %2116 = vmax.xlane.f32.xlu0 %v2081
    %v2117 = vpop.xlane.xlu0 %2116
    %2118 = vmax.xlane.f32.xlu0 %v2083
    %v2119 = vpop.xlane.xlu0 %2118
    %2120 = vmax.xlane.f32.xlu0 %v2086
    %v2121 = vpop.xlane.xlu0 %2120
    %2122 = vmax.xlane.f32.xlu0 %v2088
    %v2123 = vpop.xlane.xlu0 %2122
    %2124 = vmax.xlane.f32.xlu0 %v2091
    %v2125 = vpop.xlane.xlu0 %2124
    %2126 = vmax.xlane.f32.xlu0 %v2093
    %v2127 = vpop.xlane.xlu0 %2126
    %2128 = vmax.xlane.f32.xlu0 %v2096
    %v2129 = vpop.xlane.xlu0 %2128
    %2130 = vmax.xlane.f32.xlu0 %v2098
    %v2131 = vpop.xlane.xlu0 %2130
    %v2132 = vsub.f32 %v2061, %v2101
    %v2133 = vsub.f32 %v2063, %v2103
    %v2134 = vsub.f32 %v2066, %v2105
    %v2135 = vsub.f32 %v2068, %v2107
    %v2136 = vsub.f32 %v2071, %v2109
    %v2137 = vsub.f32 %v2073, %v2111
    %v2138 = vsub.f32 %v2076, %v2113
    %v2139 = vsub.f32 %v2078, %v2115
    %v2140 = vsub.f32 %v2081, %v2117
    %v2141 = vsub.f32 %v2083, %v2119
    %v2142 = vsub.f32 %v2086, %v2121
    %v2143 = vsub.f32 %v2088, %v2123
    %v2144 = vsub.f32 %v2091, %v2125
    %v2145 = vsub.f32 %v2093, %v2127
    %v2146 = vsub.f32 %v2096, %v2129
    %v2147 = vsub.f32 %v2098, %v2131
    %v2148 = vmul.f32 %v2132, 1.442695
    %v2149 = vpow.pop %v2148
    %v2150 = vmul.f32 %v2133, 1.442695
    %v2151 = vpow.pop %v2150
    %v2152 = vmul.f32 %v2134, 1.442695
    %v2153 = vpow.pop %v2152
    %v2154 = vmul.f32 %v2135, 1.442695
    %v2155 = vpow.pop %v2154
    %v2156 = vmul.f32 %v2136, 1.442695
    %v2157 = vpow.pop %v2156
    %v2158 = vmul.f32 %v2137, 1.442695
    %v2159 = vpow.pop %v2158
    %v2160 = vmul.f32 %v2138, 1.442695
    %v2161 = vpow.pop %v2160
    %v2162 = vmul.f32 %v2139, 1.442695
    %v2163 = vpow.pop %v2162
    %v2164 = vmul.f32 %v2140, 1.442695
    %v2165 = vpow.pop %v2164
    %v2166 = vmul.f32 %v2141, 1.442695
    %v2167 = vpow.pop %v2166
    %v2168 = vmul.f32 %v2142, 1.442695
    %v2169 = vpow.pop %v2168
    %v2170 = vmul.f32 %v2143, 1.442695
    %v2171 = vpow.pop %v2170
    %v2172 = vmul.f32 %v2144, 1.442695
    %v2173 = vpow.pop %v2172
    %v2174 = vmul.f32 %v2145, 1.442695
    %v2175 = vpow.pop %v2174
    %v2176 = vmul.f32 %v2146, 1.442695
    %v2177 = vpow.pop %v2176
    %v2178 = vmul.f32 %v2147, 1.442695
    %v2179 = vpow.pop %v2178
    %2180 = vadd.xlane.f32.xlu0 %v2149
    %v2181 = vpop.xlane.xlu0 %2180
    %2182 = vadd.xlane.f32.xlu0 %v2151
    %v2183 = vpop.xlane.xlu0 %2182
    %2184 = vadd.xlane.f32.xlu0 %v2153
    %v2185 = vpop.xlane.xlu0 %2184
    %2186 = vadd.xlane.f32.xlu0 %v2155
    %v2187 = vpop.xlane.xlu0 %2186
    %2188 = vadd.xlane.f32.xlu0 %v2157
    %v2189 = vpop.xlane.xlu0 %2188
    %2190 = vadd.xlane.f32.xlu0 %v2159
    %v2191 = vpop.xlane.xlu0 %2190
    %2192 = vadd.xlane.f32.xlu0 %v2161
    %v2193 = vpop.xlane.xlu0 %2192
    %2194 = vadd.xlane.f32.xlu0 %v2163
    %v2195 = vpop.xlane.xlu0 %2194
    %2196 = vadd.xlane.f32.xlu0 %v2165
    %v2197 = vpop.xlane.xlu0 %2196
    %2198 = vadd.xlane.f32.xlu0 %v2167
    %v2199 = vpop.xlane.xlu0 %2198
    %2200 = vadd.xlane.f32.xlu0 %v2169
    %v2201 = vpop.xlane.xlu0 %2200
    %2202 = vadd.xlane.f32.xlu0 %v2171
    %v2203 = vpop.xlane.xlu0 %2202
    %2204 = vadd.xlane.f32.xlu0 %v2173
    %v2205 = vpop.xlane.xlu0 %2204
    %2206 = vadd.xlane.f32.xlu0 %v2175
    %v2207 = vpop.xlane.xlu0 %2206
    %2208 = vadd.xlane.f32.xlu0 %v2177
    %v2209 = vpop.xlane.xlu0 %2208
    %2210 = vadd.xlane.f32.xlu0 %v2179
    %v2211 = vpop.xlane.xlu0 %2210
    %v2212 = vrcp.pop %v2181
    %v2213 = vrcp.pop %v2183
    %v2214 = vrcp.pop %v2185
    %v2215 = vrcp.pop %v2187
    %v2216 = vrcp.pop %v2189
    %v2217 = vrcp.pop %v2191
    %v2218 = vrcp.pop %v2193
    %v2219 = vrcp.pop %v2195
    %v2220 = vrcp.pop %v2197
    %v2221 = vrcp.pop %v2199
    %v2222 = vrcp.pop %v2201
    %v2223 = vrcp.pop %v2203
    %v2224 = vrcp.pop %v2205
    %v2225 = vrcp.pop %v2207
    %v2226 = vrcp.pop %v2209
    %v2227 = vrcp.pop %v2211
    %v2228 = vmul.f32 %v2149, %v2212
    %v2229 = vmul.f32 %v2151, %v2213
    %v2230 = vmul.f32 %v2153, %v2214
    %v2231 = vmul.f32 %v2155, %v2215
    %v2232 = vmul.f32 %v2157, %v2216
    %v2233 = vmul.f32 %v2159, %v2217
    %v2234 = vmul.f32 %v2161, %v2218
    %v2235 = vmul.f32 %v2163, %v2219
    %v2236 = vmul.f32 %v2165, %v2220
    %v2237 = vmul.f32 %v2167, %v2221
    %v2238 = vmul.f32 %v2169, %v2222
    %v2239 = vmul.f32 %v2171, %v2223
    %v2240 = vmul.f32 %v2173, %v2224
    %v2241 = vmul.f32 %v2175, %v2225
    %v2242 = vmul.f32 %v2177, %v2226
    %v2243 = vmul.f32 %v2179, %v2227
    %v2244 = vld [vmem:[%s4 + $0xc] sm:$0xf]
    %2245 = vrot.lane.b32.xlu0 %v529, 40
    %v2246 = vpop.permute.xlu0 %2245
    %2247 = vrot.lane.b32.xlu0 %v530, 40
    %v2248 = vpop.permute.xlu0 %2247
    %2249 = vrot.lane.b32.xlu0 %v531, 40
    %v2250 = vpop.permute.xlu0 %2249
    %2251 = vrot.lane.b32.xlu0 %v532, 40
    %v2252 = vpop.permute.xlu0 %2251
    %2253 = vrot.lane.b32.xlu0 %v533, 40
    %v2254 = vpop.permute.xlu0 %2253
    %2255 = vrot.lane.b32.xlu0 %v534, 40
    %v2256 = vpop.permute.xlu0 %2255
    %2257 = vrot.lane.b32.xlu0 %v535, 40
    %v2258 = vpop.permute.xlu0 %2257
    %2259 = vrot.lane.b32.xlu0 %v536, 40
    %v2260 = vpop.permute.xlu0 %2259
    %v2262 = vsel %vm593, %v2246, 0
    %v2265 = vsel %vm593, %v2248, 0
    %v2268 = vsel %vm593, %v2250, 0
    %v2271 = vsel %vm593, %v2252, 0
    %v2274 = vsel %vm593, %v2254, 0
    %v2277 = vsel %vm593, %v2256, 0
    %v2280 = vsel %vm593, %v2258, 0
    %v2283 = vsel %vm593, %v2260, 0
    %v2286 = vsel %vm876, %v2244, 0
    %2288 = vmatpush.bf16.msra.mxu0 0
    %2289 = vmatpush.bf16.msra.mxu0 0
    %2290 = vmatpush.bf16.msra.mxu0 0
    %2291 = vmatpush.bf16.msra.mxu0 0
    %2292 = vmatpush.bf16.msra.mxu0 0
    %2293 = vmatpush.bf16.msra.mxu0 0
    %2294 = vmatpush.bf16.msra.mxu0 0
    %2295 = vmatpush.bf16.msra.mxu0 %v2286
    %2296 = vmatmul.bf16.gmra.mxu0 %v2262
    %v2297 = vpop.f32.mrf.mxu0
    %v2298 = vadd.f32 0.0, %v2297
    %v2299 = vpop.f32.mrf.mxu0
    %v2300 = vadd.f32 0.0, %v2299
    %2301 = vmatmul.bf16.gmra.mxu0 %v2265
    %v2302 = vpop.f32.mrf.mxu0
    %v2303 = vadd.f32 0.0, %v2302
    %v2304 = vpop.f32.mrf.mxu0
    %v2305 = vadd.f32 0.0, %v2304
    %2306 = vmatmul.bf16.gmra.mxu0 %v2268
    %v2307 = vpop.f32.mrf.mxu0
    %v2308 = vadd.f32 0.0, %v2307
    %v2309 = vpop.f32.mrf.mxu0
    %v2310 = vadd.f32 0.0, %v2309
    %2311 = vmatmul.bf16.gmra.mxu0 %v2271
    %v2312 = vpop.f32.mrf.mxu0
    %v2313 = vadd.f32 0.0, %v2312
    %v2314 = vpop.f32.mrf.mxu0
    %v2315 = vadd.f32 0.0, %v2314
    %2316 = vmatmul.bf16.gmra.mxu0 %v2274
    %v2317 = vpop.f32.mrf.mxu0
    %v2318 = vadd.f32 0.0, %v2317
    %v2319 = vpop.f32.mrf.mxu0
    %v2320 = vadd.f32 0.0, %v2319
    %2321 = vmatmul.bf16.gmra.mxu0 %v2277
    %v2322 = vpop.f32.mrf.mxu0
    %v2323 = vadd.f32 0.0, %v2322
    %v2324 = vpop.f32.mrf.mxu0
    %v2325 = vadd.f32 0.0, %v2324
    %2326 = vmatmul.bf16.gmra.mxu0 %v2280
    %v2327 = vpop.f32.mrf.mxu0
    %v2328 = vadd.f32 0.0, %v2327
    %v2329 = vpop.f32.mrf.mxu0
    %v2330 = vadd.f32 0.0, %v2329
    %2331 = vmatmul.bf16.gmra.mxu0 %v2283
    %v2332 = vpop.f32.mrf.mxu0
    %v2333 = vadd.f32 0.0, %v2332
    %v2334 = vpop.f32.mrf.mxu0
    %v2335 = vadd.f32 0.0, %v2334
    %2336 = vdwg.mxu0
    %v2337 = vpack.c.bf16 %v2300, %v2298
    %v2338 = vpack.c.bf16 %v2305, %v2303
    %v2339 = vpack.c.bf16 %v2310, %v2308
    %v2340 = vpack.c.bf16 %v2315, %v2313
    %v2341 = vpack.c.bf16 %v2320, %v2318
    %v2342 = vpack.c.bf16 %v2325, %v2323
    %v2343 = vpack.c.bf16 %v2330, %v2328
    %v2344 = vpack.c.bf16 %v2335, %v2333
    %v2345 = vpack.c.bf16 %v2229, %v2228
    %v2346 = vpack.c.bf16 %v2231, %v2230
    %v2347 = vpack.c.bf16 %v2233, %v2232
    %v2348 = vpack.c.bf16 %v2235, %v2234
    %v2349 = vpack.c.bf16 %v2237, %v2236
    %v2350 = vpack.c.bf16 %v2239, %v2238
    %v2351 = vpack.c.bf16 %v2241, %v2240
    %v2352 = vpack.c.bf16 %v2243, %v2242
    %2353 = vmatpush.bf16.msra.mxu0 %v2344
    %2354 = vmatpush.bf16.msra.mxu0 %v2343
    %2355 = vmatpush.bf16.msra.mxu0 %v2342
    %2356 = vmatpush.bf16.msra.mxu0 %v2341
    %2357 = vmatpush.bf16.msra.mxu0 %v2340
    %2358 = vmatpush.bf16.msra.mxu0 %v2339
    %2359 = vmatpush.bf16.msra.mxu0 %v2338
    %2360 = vmatpush.bf16.msra.mxu0 %v2337
    %2361 = vmatmul.bf16.gmra.mxu0 %v2345
    %v2362 = vpop.f32.mrf.mxu0
    %v2363 = vadd.f32 0.0, %v2362
    %v2364 = vpop.f32.mrf.mxu0
    %v2365 = vadd.f32 0.0, %v2364
    %2366 = vmatmul.bf16.gmra.mxu0 %v2346
    %v2367 = vpop.f32.mrf.mxu0
    %v2368 = vadd.f32 0.0, %v2367
    %v2369 = vpop.f32.mrf.mxu0
    %v2370 = vadd.f32 0.0, %v2369
    %2371 = vmatmul.bf16.gmra.mxu0 %v2347
    %v2372 = vpop.f32.mrf.mxu0
    %v2373 = vadd.f32 0.0, %v2372
    %v2374 = vpop.f32.mrf.mxu0
    %v2375 = vadd.f32 0.0, %v2374
    %2376 = vmatmul.bf16.gmra.mxu0 %v2348
    %v2377 = vpop.f32.mrf.mxu0
    %v2378 = vadd.f32 0.0, %v2377
    %v2379 = vpop.f32.mrf.mxu0
    %v2380 = vadd.f32 0.0, %v2379
    %2381 = vmatmul.bf16.gmra.mxu0 %v2349
    %v2382 = vpop.f32.mrf.mxu0
    %v2383 = vadd.f32 0.0, %v2382
    %v2384 = vpop.f32.mrf.mxu0
    %v2385 = vadd.f32 0.0, %v2384
    %2386 = vmatmul.bf16.gmra.mxu0 %v2350
    %v2387 = vpop.f32.mrf.mxu0
    %v2388 = vadd.f32 0.0, %v2387
    %v2389 = vpop.f32.mrf.mxu0
    %v2390 = vadd.f32 0.0, %v2389
    %2391 = vmatmul.bf16.gmra.mxu0 %v2351
    %v2392 = vpop.f32.mrf.mxu0
    %v2393 = vadd.f32 0.0, %v2392
    %v2394 = vpop.f32.mrf.mxu0
    %v2395 = vadd.f32 0.0, %v2394
    %2396 = vmatmul.bf16.gmra.mxu0 %v2352
    %v2397 = vpop.f32.mrf.mxu0
    %v2398 = vadd.f32 0.0, %v2397
    %v2399 = vpop.f32.mrf.mxu0
    %v2400 = vadd.f32 0.0, %v2399
    %2401 = vdwg.mxu0
    %v2402 = vadd.f32 %v1922, %v2363
    %v2403 = vadd.f32 %v1923, %v2365
    %v2404 = vadd.f32 %v1924, %v2368
    %v2405 = vadd.f32 %v1925, %v2370
    %v2406 = vadd.f32 %v1926, %v2373
    %v2407 = vadd.f32 %v1927, %v2375
    %v2408 = vadd.f32 %v1928, %v2378
    %v2409 = vadd.f32 %v1929, %v2380
    %v2410 = vadd.f32 %v1930, %v2383
    %v2411 = vadd.f32 %v1931, %v2385
    %v2412 = vadd.f32 %v1932, %v2388
    %v2413 = vadd.f32 %v1933, %v2390
    %v2414 = vadd.f32 %v1934, %v2393
    %v2415 = vadd.f32 %v1935, %v2395
    %v2416 = vadd.f32 %v1936, %v2398
    %v2417 = vadd.f32 %v1937, %v2400
    %v2418 = vadd.f32 %v52, %v2402
    %v2419 = vadd.f32 %v53, %v2403
    %v2420 = vadd.f32 %v54, %v2404
    %v2421 = vadd.f32 %v55, %v2405
    %v2422 = vadd.f32 %v56, %v2406
    %v2423 = vadd.f32 %v57, %v2407
    %v2424 = vadd.f32 %v58, %v2408
    %v2425 = vadd.f32 %v59, %v2409
    %v2426 = vadd.f32 %v60, %v2410
    %v2427 = vadd.f32 %v61, %v2411
    %v2428 = vadd.f32 %v62, %v2412
    %v2429 = vadd.f32 %v63, %v2413
    %v2430 = vadd.f32 %v64, %v2414
    %v2431 = vadd.f32 %v65, %v2415
    %v2432 = vadd.f32 %v66, %v2416
    %v2433 = vadd.f32 %v67, %v2417
    %v2434 = vld [vmem:[%s5] sm:$0x1]
    %v2436 = vperm.slane %v2434, 0
    %v2438 = vadd.f32 %v2418, %v2436
    %v2439 = vadd.f32 %v2419, %v2436
    %v2440 = vadd.f32 %v2420, %v2436
    %v2441 = vadd.f32 %v2421, %v2436
    %v2442 = vadd.f32 %v2422, %v2436
    %v2443 = vadd.f32 %v2423, %v2436
    %v2444 = vadd.f32 %v2424, %v2436
    %v2445 = vadd.f32 %v2425, %v2436
    %v2446 = vadd.f32 %v2426, %v2436
    %v2447 = vadd.f32 %v2427, %v2436
    %v2448 = vadd.f32 %v2428, %v2436
    %v2449 = vadd.f32 %v2429, %v2436
    %v2450 = vadd.f32 %v2430, %v2436
    %v2451 = vadd.f32 %v2431, %v2436
    %v2452 = vadd.f32 %v2432, %v2436
    %v2453 = vadd.f32 %v2433, %v2436
    %v2454 = vsel %vm68, %v2438, 0.0
    %2455 = vadd.xlane.f32.xlu0 %v2454
    %v2456 = vpop.xlane.xlu0 %2455
    %v2457 = vsel %vm68, %v2439, 0.0
    %2458 = vadd.xlane.f32.xlu0 %v2457
    %v2459 = vpop.xlane.xlu0 %2458
    %v2460 = vsel %vm68, %v2440, 0.0
    %2461 = vadd.xlane.f32.xlu0 %v2460
    %v2462 = vpop.xlane.xlu0 %2461
    %v2463 = vsel %vm68, %v2441, 0.0
    %2464 = vadd.xlane.f32.xlu0 %v2463
    %v2465 = vpop.xlane.xlu0 %2464
    %v2466 = vsel %vm68, %v2442, 0.0
    %2467 = vadd.xlane.f32.xlu0 %v2466
    %v2468 = vpop.xlane.xlu0 %2467
    %v2469 = vsel %vm68, %v2443, 0.0
    %2470 = vadd.xlane.f32.xlu0 %v2469
    %v2471 = vpop.xlane.xlu0 %2470
    %v2472 = vsel %vm68, %v2444, 0.0
    %2473 = vadd.xlane.f32.xlu0 %v2472
    %v2474 = vpop.xlane.xlu0 %2473
    %v2475 = vsel %vm68, %v2445, 0.0
    %2476 = vadd.xlane.f32.xlu0 %v2475
    %v2477 = vpop.xlane.xlu0 %2476
    %v2478 = vsel %vm68, %v2446, 0.0
    %2479 = vadd.xlane.f32.xlu0 %v2478
    %v2480 = vpop.xlane.xlu0 %2479
    %v2481 = vsel %vm68, %v2447, 0.0
    %2482 = vadd.xlane.f32.xlu0 %v2481
    %v2483 = vpop.xlane.xlu0 %2482
    %v2484 = vsel %vm68, %v2448, 0.0
    %2485 = vadd.xlane.f32.xlu0 %v2484
    %v2486 = vpop.xlane.xlu0 %2485
    %v2487 = vsel %vm68, %v2449, 0.0
    %2488 = vadd.xlane.f32.xlu0 %v2487
    %v2489 = vpop.xlane.xlu0 %2488
    %v2490 = vsel %vm68, %v2450, 0.0
    %2491 = vadd.xlane.f32.xlu0 %v2490
    %v2492 = vpop.xlane.xlu0 %2491
    %v2493 = vsel %vm68, %v2451, 0.0
    %2494 = vadd.xlane.f32.xlu0 %v2493
    %v2495 = vpop.xlane.xlu0 %2494
    %v2496 = vsel %vm68, %v2452, 0.0
    %2497 = vadd.xlane.f32.xlu0 %v2496
    %v2498 = vpop.xlane.xlu0 %2497
    %v2499 = vsel %vm68, %v2453, 0.0
    %2500 = vadd.xlane.f32.xlu0 %v2499
    %v2501 = vpop.xlane.xlu0 %2500
    %v2502 = vmul.f32 %v2456, %v123
    %v2503 = vmul.f32 %v2459, %v123
    %v2504 = vmul.f32 %v2462, %v123
    %v2505 = vmul.f32 %v2465, %v123
    %v2506 = vmul.f32 %v2468, %v123
    %v2507 = vmul.f32 %v2471, %v123
    %v2508 = vmul.f32 %v2474, %v123
    %v2509 = vmul.f32 %v2477, %v123
    %v2510 = vmul.f32 %v2480, %v123
    %v2511 = vmul.f32 %v2483, %v123
    %v2512 = vmul.f32 %v2486, %v123
    %v2513 = vmul.f32 %v2489, %v123
    %v2514 = vmul.f32 %v2492, %v123
    %v2515 = vmul.f32 %v2495, %v123
    %v2516 = vmul.f32 %v2498, %v123
    %v2517 = vmul.f32 %v2501, %v123
    %v2518 = vsub.f32 %v2438, %v2502
    %v2519 = vsub.f32 %v2439, %v2503
    %v2520 = vsub.f32 %v2440, %v2504
    %v2521 = vsub.f32 %v2441, %v2505
    %v2522 = vsub.f32 %v2442, %v2506
    %v2523 = vsub.f32 %v2443, %v2507
    %v2524 = vsub.f32 %v2444, %v2508
    %v2525 = vsub.f32 %v2445, %v2509
    %v2526 = vsub.f32 %v2446, %v2510
    %v2527 = vsub.f32 %v2447, %v2511
    %v2528 = vsub.f32 %v2448, %v2512
    %v2529 = vsub.f32 %v2449, %v2513
    %v2530 = vsub.f32 %v2450, %v2514
    %v2531 = vsub.f32 %v2451, %v2515
    %v2532 = vsub.f32 %v2452, %v2516
    %v2533 = vsub.f32 %v2453, %v2517
    %v2534 = vmul.f32 %v2518, %v2518
    %v2535 = vmul.f32 %v2519, %v2519
    %v2536 = vmul.f32 %v2520, %v2520
    %v2537 = vmul.f32 %v2521, %v2521
    %v2538 = vmul.f32 %v2522, %v2522
    %v2539 = vmul.f32 %v2523, %v2523
    %v2540 = vmul.f32 %v2524, %v2524
    %v2541 = vmul.f32 %v2525, %v2525
    %v2542 = vmul.f32 %v2526, %v2526
    %v2543 = vmul.f32 %v2527, %v2527
    %v2544 = vmul.f32 %v2528, %v2528
    %v2545 = vmul.f32 %v2529, %v2529
    %v2546 = vmul.f32 %v2530, %v2530
    %v2547 = vmul.f32 %v2531, %v2531
    %v2548 = vmul.f32 %v2532, %v2532
    %v2549 = vmul.f32 %v2533, %v2533
    %v2550 = vsel %vm68, %v2534, 0.0
    %2551 = vadd.xlane.f32.xlu0 %v2550
    %v2552 = vpop.xlane.xlu0 %2551
    %v2553 = vsel %vm68, %v2535, 0.0
    %2554 = vadd.xlane.f32.xlu0 %v2553
    %v2555 = vpop.xlane.xlu0 %2554
    %v2556 = vsel %vm68, %v2536, 0.0
    %2557 = vadd.xlane.f32.xlu0 %v2556
    %v2558 = vpop.xlane.xlu0 %2557
    %v2559 = vsel %vm68, %v2537, 0.0
    %2560 = vadd.xlane.f32.xlu0 %v2559
    %v2561 = vpop.xlane.xlu0 %2560
    %v2562 = vsel %vm68, %v2538, 0.0
    %2563 = vadd.xlane.f32.xlu0 %v2562
    %v2564 = vpop.xlane.xlu0 %2563
    %v2565 = vsel %vm68, %v2539, 0.0
    %2566 = vadd.xlane.f32.xlu0 %v2565
    %v2567 = vpop.xlane.xlu0 %2566
    %v2568 = vsel %vm68, %v2540, 0.0
    %2569 = vadd.xlane.f32.xlu0 %v2568
    %v2570 = vpop.xlane.xlu0 %2569
    %v2571 = vsel %vm68, %v2541, 0.0
    %2572 = vadd.xlane.f32.xlu0 %v2571
    %v2573 = vpop.xlane.xlu0 %2572
    %v2574 = vsel %vm68, %v2542, 0.0
    %2575 = vadd.xlane.f32.xlu0 %v2574
    %v2576 = vpop.xlane.xlu0 %2575
    %v2577 = vsel %vm68, %v2543, 0.0
    %2578 = vadd.xlane.f32.xlu0 %v2577
    %v2579 = vpop.xlane.xlu0 %2578
    %v2580 = vsel %vm68, %v2544, 0.0
    %2581 = vadd.xlane.f32.xlu0 %v2580
    %v2582 = vpop.xlane.xlu0 %2581
    %v2583 = vsel %vm68, %v2545, 0.0
    %2584 = vadd.xlane.f32.xlu0 %v2583
    %v2585 = vpop.xlane.xlu0 %2584
    %v2586 = vsel %vm68, %v2546, 0.0
    %2587 = vadd.xlane.f32.xlu0 %v2586
    %v2588 = vpop.xlane.xlu0 %2587
    %v2589 = vsel %vm68, %v2547, 0.0
    %2590 = vadd.xlane.f32.xlu0 %v2589
    %v2591 = vpop.xlane.xlu0 %2590
    %v2592 = vsel %vm68, %v2548, 0.0
    %2593 = vadd.xlane.f32.xlu0 %v2592
    %v2594 = vpop.xlane.xlu0 %2593
    %v2595 = vsel %vm68, %v2549, 0.0
    %2596 = vadd.xlane.f32.xlu0 %v2595
    %v2597 = vpop.xlane.xlu0 %2596
    %v2598 = vmul.f32 %v2552, %v123
    %v2599 = vmul.f32 %v2555, %v123
    %v2600 = vmul.f32 %v2558, %v123
    %v2601 = vmul.f32 %v2561, %v123
    %v2602 = vmul.f32 %v2564, %v123
    %v2603 = vmul.f32 %v2567, %v123
    %v2604 = vmul.f32 %v2570, %v123
    %v2605 = vmul.f32 %v2573, %v123
    %v2606 = vmul.f32 %v2576, %v123
    %v2607 = vmul.f32 %v2579, %v123
    %v2608 = vmul.f32 %v2582, %v123
    %v2609 = vmul.f32 %v2585, %v123
    %v2610 = vmul.f32 %v2588, %v123
    %v2611 = vmul.f32 %v2591, %v123
    %v2612 = vmul.f32 %v2594, %v123
    %v2613 = vmul.f32 %v2597, %v123
    %v2614 = vadd.f32 %v2598, 1e-05
    %v2615 = vadd.f32 %v2599, 1e-05
    %v2616 = vadd.f32 %v2600, 1e-05
    %v2617 = vadd.f32 %v2601, 1e-05
    %v2618 = vadd.f32 %v2602, 1e-05
    %v2619 = vadd.f32 %v2603, 1e-05
    %v2620 = vadd.f32 %v2604, 1e-05
    %v2621 = vadd.f32 %v2605, 1e-05
    %v2622 = vadd.f32 %v2606, 1e-05
    %v2623 = vadd.f32 %v2607, 1e-05
    %v2624 = vadd.f32 %v2608, 1e-05
    %v2625 = vadd.f32 %v2609, 1e-05
    %v2626 = vadd.f32 %v2610, 1e-05
    %v2627 = vadd.f32 %v2611, 1e-05
    %v2628 = vadd.f32 %v2612, 1e-05
    %v2629 = vadd.f32 %v2613, 1e-05
    %v2630 = vrsqrt.pop %v2614
    %v2631 = vmul.f32 %v2630, %v2614
    %v2632 = vmul.f32 %v2631, %v2630
    %v2633 = vmul.f32 0.5, %v2632
    %v2634 = vsub.f32 1.5, %v2633
    %v2635 = vmul.f32 %v2630, %v2634
    %vm2636 = vweird.f32 %v2614
    %vm2637 = vweird.f32 %v2630
    %vm2638 = vmor %vm2636, %vm2637
    %v2639 = vsel %vm2638, %v2630, %v2635
    %v2640 = vrsqrt.pop %v2615
    %v2641 = vmul.f32 %v2640, %v2615
    %v2642 = vmul.f32 %v2641, %v2640
    %v2643 = vmul.f32 0.5, %v2642
    %v2644 = vsub.f32 1.5, %v2643
    %v2645 = vmul.f32 %v2640, %v2644
    %vm2646 = vweird.f32 %v2615
    %vm2647 = vweird.f32 %v2640
    %vm2648 = vmor %vm2646, %vm2647
    %v2649 = vsel %vm2648, %v2640, %v2645
    %v2650 = vrsqrt.pop %v2616
    %v2651 = vmul.f32 %v2650, %v2616
    %v2652 = vmul.f32 %v2651, %v2650
    %v2653 = vmul.f32 0.5, %v2652
    %v2654 = vsub.f32 1.5, %v2653
    %v2655 = vmul.f32 %v2650, %v2654
    %vm2656 = vweird.f32 %v2616
    %vm2657 = vweird.f32 %v2650
    %vm2658 = vmor %vm2656, %vm2657
    %v2659 = vsel %vm2658, %v2650, %v2655
    %v2660 = vrsqrt.pop %v2617
    %v2661 = vmul.f32 %v2660, %v2617
    %v2662 = vmul.f32 %v2661, %v2660
    %v2663 = vmul.f32 0.5, %v2662
    %v2664 = vsub.f32 1.5, %v2663
    %v2665 = vmul.f32 %v2660, %v2664
    %vm2666 = vweird.f32 %v2617
    %vm2667 = vweird.f32 %v2660
    %vm2668 = vmor %vm2666, %vm2667
    %v2669 = vsel %vm2668, %v2660, %v2665
    %v2670 = vrsqrt.pop %v2618
    %v2671 = vmul.f32 %v2670, %v2618
    %v2672 = vmul.f32 %v2671, %v2670
    %v2673 = vmul.f32 0.5, %v2672
    %v2674 = vsub.f32 1.5, %v2673
    %v2675 = vmul.f32 %v2670, %v2674
    %vm2676 = vweird.f32 %v2618
    %vm2677 = vweird.f32 %v2670
    %vm2678 = vmor %vm2676, %vm2677
    %v2679 = vsel %vm2678, %v2670, %v2675
    %v2680 = vrsqrt.pop %v2619
    %v2681 = vmul.f32 %v2680, %v2619
    %v2682 = vmul.f32 %v2681, %v2680
    %v2683 = vmul.f32 0.5, %v2682
    %v2684 = vsub.f32 1.5, %v2683
    %v2685 = vmul.f32 %v2680, %v2684
    %vm2686 = vweird.f32 %v2619
    %vm2687 = vweird.f32 %v2680
    %vm2688 = vmor %vm2686, %vm2687
    %v2689 = vsel %vm2688, %v2680, %v2685
    %v2690 = vrsqrt.pop %v2620
    %v2691 = vmul.f32 %v2690, %v2620
    %v2692 = vmul.f32 %v2691, %v2690
    %v2693 = vmul.f32 0.5, %v2692
    %v2694 = vsub.f32 1.5, %v2693
    %v2695 = vmul.f32 %v2690, %v2694
    %vm2696 = vweird.f32 %v2620
    %vm2697 = vweird.f32 %v2690
    %vm2698 = vmor %vm2696, %vm2697
    %v2699 = vsel %vm2698, %v2690, %v2695
    %v2700 = vrsqrt.pop %v2621
    %v2701 = vmul.f32 %v2700, %v2621
    %v2702 = vmul.f32 %v2701, %v2700
    %v2703 = vmul.f32 0.5, %v2702
    %v2704 = vsub.f32 1.5, %v2703
    %v2705 = vmul.f32 %v2700, %v2704
    %vm2706 = vweird.f32 %v2621
    %vm2707 = vweird.f32 %v2700
    %vm2708 = vmor %vm2706, %vm2707
    %v2709 = vsel %vm2708, %v2700, %v2705
    %v2710 = vrsqrt.pop %v2622
    %v2711 = vmul.f32 %v2710, %v2622
    %v2712 = vmul.f32 %v2711, %v2710
    %v2713 = vmul.f32 0.5, %v2712
    %v2714 = vsub.f32 1.5, %v2713
    %v2715 = vmul.f32 %v2710, %v2714
    %vm2716 = vweird.f32 %v2622
    %vm2717 = vweird.f32 %v2710
    %vm2718 = vmor %vm2716, %vm2717
    %v2719 = vsel %vm2718, %v2710, %v2715
    %v2720 = vrsqrt.pop %v2623
    %v2721 = vmul.f32 %v2720, %v2623
    %v2722 = vmul.f32 %v2721, %v2720
    %v2723 = vmul.f32 0.5, %v2722
    %v2724 = vsub.f32 1.5, %v2723
    %v2725 = vmul.f32 %v2720, %v2724
    %vm2726 = vweird.f32 %v2623
    %vm2727 = vweird.f32 %v2720
    %vm2728 = vmor %vm2726, %vm2727
    %v2729 = vsel %vm2728, %v2720, %v2725
    %v2730 = vrsqrt.pop %v2624
    %v2731 = vmul.f32 %v2730, %v2624
    %v2732 = vmul.f32 %v2731, %v2730
    %v2733 = vmul.f32 0.5, %v2732
    %v2734 = vsub.f32 1.5, %v2733
    %v2735 = vmul.f32 %v2730, %v2734
    %vm2736 = vweird.f32 %v2624
    %vm2737 = vweird.f32 %v2730
    %vm2738 = vmor %vm2736, %vm2737
    %v2739 = vsel %vm2738, %v2730, %v2735
    %v2740 = vrsqrt.pop %v2625
    %v2741 = vmul.f32 %v2740, %v2625
    %v2742 = vmul.f32 %v2741, %v2740
    %v2743 = vmul.f32 0.5, %v2742
    %v2744 = vsub.f32 1.5, %v2743
    %v2745 = vmul.f32 %v2740, %v2744
    %vm2746 = vweird.f32 %v2625
    %vm2747 = vweird.f32 %v2740
    %vm2748 = vmor %vm2746, %vm2747
    %v2749 = vsel %vm2748, %v2740, %v2745
    %v2750 = vrsqrt.pop %v2626
    %v2751 = vmul.f32 %v2750, %v2626
    %v2752 = vmul.f32 %v2751, %v2750
    %v2753 = vmul.f32 0.5, %v2752
    %v2754 = vsub.f32 1.5, %v2753
    %v2755 = vmul.f32 %v2750, %v2754
    %vm2756 = vweird.f32 %v2626
    %vm2757 = vweird.f32 %v2750
    %vm2758 = vmor %vm2756, %vm2757
    %v2759 = vsel %vm2758, %v2750, %v2755
    %v2760 = vrsqrt.pop %v2627
    %v2761 = vmul.f32 %v2760, %v2627
    %v2762 = vmul.f32 %v2761, %v2760
    %v2763 = vmul.f32 0.5, %v2762
    %v2764 = vsub.f32 1.5, %v2763
    %v2765 = vmul.f32 %v2760, %v2764
    %vm2766 = vweird.f32 %v2627
    %vm2767 = vweird.f32 %v2760
    %vm2768 = vmor %vm2766, %vm2767
    %v2769 = vsel %vm2768, %v2760, %v2765
    %v2770 = vrsqrt.pop %v2628
    %v2771 = vmul.f32 %v2770, %v2628
    %v2772 = vmul.f32 %v2771, %v2770
    %v2773 = vmul.f32 0.5, %v2772
    %v2774 = vsub.f32 1.5, %v2773
    %v2775 = vmul.f32 %v2770, %v2774
    %vm2776 = vweird.f32 %v2628
    %vm2777 = vweird.f32 %v2770
    %vm2778 = vmor %vm2776, %vm2777
    %v2779 = vsel %vm2778, %v2770, %v2775
    %v2780 = vrsqrt.pop %v2629
    %v2781 = vmul.f32 %v2780, %v2629
    %v2782 = vmul.f32 %v2781, %v2780
    %v2783 = vmul.f32 0.5, %v2782
    %v2784 = vsub.f32 1.5, %v2783
    %v2785 = vmul.f32 %v2780, %v2784
    %vm2786 = vweird.f32 %v2629
    %vm2787 = vweird.f32 %v2780
    %vm2788 = vmor %vm2786, %vm2787
    %v2789 = vsel %vm2788, %v2780, %v2785
    %v2790 = vmul.f32 %v2518, %v2639
    %v2791 = vmul.f32 %v2519, %v2649
    %v2792 = vmul.f32 %v2520, %v2659
    %v2793 = vmul.f32 %v2521, %v2669
    %v2794 = vmul.f32 %v2522, %v2679
    %v2795 = vmul.f32 %v2523, %v2689
    %v2796 = vmul.f32 %v2524, %v2699
    %v2797 = vmul.f32 %v2525, %v2709
    %v2798 = vmul.f32 %v2526, %v2719
    %v2799 = vmul.f32 %v2527, %v2729
    %v2800 = vmul.f32 %v2528, %v2739
    %v2801 = vmul.f32 %v2529, %v2749
    %v2802 = vmul.f32 %v2530, %v2759
    %v2803 = vmul.f32 %v2531, %v2769
    %v2804 = vmul.f32 %v2532, %v2779
    %v2805 = vmul.f32 %v2533, %v2789
    %v2806 = vpack.c.bf16 %v2791, %v2790
    %v2807 = vpack.c.bf16 %v2793, %v2792
    %v2808 = vpack.c.bf16 %v2795, %v2794
    %v2809 = vpack.c.bf16 %v2797, %v2796
    %v2810 = vpack.c.bf16 %v2799, %v2798
    %v2811 = vpack.c.bf16 %v2801, %v2800
    %v2812 = vpack.c.bf16 %v2803, %v2802
    %v2813 = vpack.c.bf16 %v2805, %v2804
    %v2814 = vld [vmem:[%s6] sm:$0xf]
    %v2815 = vld [vmem:[%s6 + $0x4] sm:$0xf]
    %v2816 = vld [vmem:[%s6 + $0x8] sm:$0xf]
    %v2817 = vld [vmem:[%s6 + $0xc] sm:$0xf]
    %v2818 = vld [vmem:[%s7] sm:$0x1]
    %v2820 = vperm.slane %v2818, 0
    %v2826 = vunpack.c.l.b16 %v2814
    %v2827 = vunpack.c.l.b16 %v2815
    %v2828 = vunpack.c.l.b16 %v2816
    %v2829 = vunpack.c.l.b16 %v2817
    %v2830 = vpack.c.b16 %v2827, %v2826
    %v2831 = vpack.c.b16 %v2829, %v2828
    %v2835 = vsel %vm68, %v2806, 0
    %v2838 = vsel %vm68, %v2807, 0
    %v2841 = vsel %vm68, %v2808, 0
    %v2844 = vsel %vm68, %v2809, 0
    %v2847 = vsel %vm68, %v2810, 0
    %v2850 = vsel %vm68, %v2811, 0
    %v2853 = vsel %vm68, %v2812, 0
    %v2856 = vsel %vm68, %v2813, 0
    %2858 = vmatpush.bf16.msra.mxu0 0
    %2859 = vmatpush.bf16.msra.mxu0 0
    %2860 = vmatpush.bf16.msra.mxu0 0
    %2861 = vmatpush.bf16.msra.mxu0 0
    %2862 = vmatpush.bf16.msra.mxu0 0
    %2863 = vmatpush.bf16.msra.mxu0 0
    %2864 = vmatpush.bf16.msra.mxu0 %v2831
    %2865 = vmatpush.bf16.msra.mxu0 %v2830
    %2866 = vmatmul.bf16.gmra.mxu0 %v2835
    %v2867 = vpop.f32.mrf.mxu0
    %v2868 = vadd.f32 %v2820, %v2867
    %v2869 = vpop.f32.mrf.mxu0
    %v2870 = vadd.f32 %v2820, %v2869
    %2871 = vmatmul.bf16.gmra.mxu0 %v2838
    %v2872 = vpop.f32.mrf.mxu0
    %v2873 = vadd.f32 %v2820, %v2872
    %v2874 = vpop.f32.mrf.mxu0
    %v2875 = vadd.f32 %v2820, %v2874
    %2876 = vmatmul.bf16.gmra.mxu0 %v2841
    %v2877 = vpop.f32.mrf.mxu0
    %v2878 = vadd.f32 %v2820, %v2877
    %v2879 = vpop.f32.mrf.mxu0
    %v2880 = vadd.f32 %v2820, %v2879
    %2881 = vmatmul.bf16.gmra.mxu0 %v2844
    %v2882 = vpop.f32.mrf.mxu0
    %v2883 = vadd.f32 %v2820, %v2882
    %v2884 = vpop.f32.mrf.mxu0
    %v2885 = vadd.f32 %v2820, %v2884
    %2886 = vmatmul.bf16.gmra.mxu0 %v2847
    %v2887 = vpop.f32.mrf.mxu0
    %v2888 = vadd.f32 %v2820, %v2887
    %v2889 = vpop.f32.mrf.mxu0
    %v2890 = vadd.f32 %v2820, %v2889
    %2891 = vmatmul.bf16.gmra.mxu0 %v2850
    %v2892 = vpop.f32.mrf.mxu0
    %v2893 = vadd.f32 %v2820, %v2892
    %v2894 = vpop.f32.mrf.mxu0
    %v2895 = vadd.f32 %v2820, %v2894
    %2896 = vmatmul.bf16.gmra.mxu0 %v2853
    %v2897 = vpop.f32.mrf.mxu0
    %v2898 = vadd.f32 %v2820, %v2897
    %v2899 = vpop.f32.mrf.mxu0
    %v2900 = vadd.f32 %v2820, %v2899
    %2901 = vmatmul.bf16.gmra.mxu0 %v2856
    %v2902 = vpop.f32.mrf.mxu0
    %v2903 = vadd.f32 %v2820, %v2902
    %v2904 = vpop.f32.mrf.mxu0
    %v2905 = vadd.f32 %v2820, %v2904
    %2906 = vdwg.mxu0
    %v2907 = vmul.f32 %v2868, %v2868
    %v2908 = vmul.f32 %v2870, %v2870
    %v2909 = vmul.f32 %v2873, %v2873
    %v2910 = vmul.f32 %v2875, %v2875
    %v2911 = vmul.f32 %v2878, %v2878
    %v2912 = vmul.f32 %v2880, %v2880
    %v2913 = vmul.f32 %v2883, %v2883
    %v2914 = vmul.f32 %v2885, %v2885
    %v2915 = vmul.f32 %v2888, %v2888
    %v2916 = vmul.f32 %v2890, %v2890
    %v2917 = vmul.f32 %v2893, %v2893
    %v2918 = vmul.f32 %v2895, %v2895
    %v2919 = vmul.f32 %v2898, %v2898
    %v2920 = vmul.f32 %v2900, %v2900
    %v2921 = vmul.f32 %v2903, %v2903
    %v2922 = vmul.f32 %v2905, %v2905
    %v2923 = vmul.f32 %v2868, %v2907
    %v2924 = vmul.f32 %v2870, %v2908
    %v2925 = vmul.f32 %v2873, %v2909
    %v2926 = vmul.f32 %v2875, %v2910
    %v2927 = vmul.f32 %v2878, %v2911
    %v2928 = vmul.f32 %v2880, %v2912
    %v2929 = vmul.f32 %v2883, %v2913
    %v2930 = vmul.f32 %v2885, %v2914
    %v2931 = vmul.f32 %v2888, %v2915
    %v2932 = vmul.f32 %v2890, %v2916
    %v2933 = vmul.f32 %v2893, %v2917
    %v2934 = vmul.f32 %v2895, %v2918
    %v2935 = vmul.f32 %v2898, %v2919
    %v2936 = vmul.f32 %v2900, %v2920
    %v2937 = vmul.f32 %v2903, %v2921
    %v2938 = vmul.f32 %v2905, %v2922
    %v2939 = vmul.f32 %v2923, 0.044715
    %v2940 = vmul.f32 %v2924, 0.044715
    %v2941 = vmul.f32 %v2925, 0.044715
    %v2942 = vmul.f32 %v2926, 0.044715
    %v2943 = vmul.f32 %v2927, 0.044715
    %v2944 = vmul.f32 %v2928, 0.044715
    %v2945 = vmul.f32 %v2929, 0.044715
    %v2946 = vmul.f32 %v2930, 0.044715
    %v2947 = vmul.f32 %v2931, 0.044715
    %v2948 = vmul.f32 %v2932, 0.044715
    %v2949 = vmul.f32 %v2933, 0.044715
    %v2950 = vmul.f32 %v2934, 0.044715
    %v2951 = vmul.f32 %v2935, 0.044715
    %v2952 = vmul.f32 %v2936, 0.044715
    %v2953 = vmul.f32 %v2937, 0.044715
    %v2954 = vmul.f32 %v2938, 0.044715
    %v2955 = vadd.f32 %v2868, %v2939
    %v2956 = vadd.f32 %v2870, %v2940
    %v2957 = vadd.f32 %v2873, %v2941
    %v2958 = vadd.f32 %v2875, %v2942
    %v2959 = vadd.f32 %v2878, %v2943
    %v2960 = vadd.f32 %v2880, %v2944
    %v2961 = vadd.f32 %v2883, %v2945
    %v2962 = vadd.f32 %v2885, %v2946
    %v2963 = vadd.f32 %v2888, %v2947
    %v2964 = vadd.f32 %v2890, %v2948
    %v2965 = vadd.f32 %v2893, %v2949
    %v2966 = vadd.f32 %v2895, %v2950
    %v2967 = vadd.f32 %v2898, %v2951
    %v2968 = vadd.f32 %v2900, %v2952
    %v2969 = vadd.f32 %v2903, %v2953
    %v2970 = vadd.f32 %v2905, %v2954
    %v2971 = vmul.f32 %v2955, 0.7978846
    %v2972 = vmul.f32 %v2956, 0.7978846
    %v2973 = vmul.f32 %v2957, 0.7978846
    %v2974 = vmul.f32 %v2958, 0.7978846
    %v2975 = vmul.f32 %v2959, 0.7978846
    %v2976 = vmul.f32 %v2960, 0.7978846
    %v2977 = vmul.f32 %v2961, 0.7978846
    %v2978 = vmul.f32 %v2962, 0.7978846
    %v2979 = vmul.f32 %v2963, 0.7978846
    %v2980 = vmul.f32 %v2964, 0.7978846
    %v2981 = vmul.f32 %v2965, 0.7978846
    %v2982 = vmul.f32 %v2966, 0.7978846
    %v2983 = vmul.f32 %v2967, 0.7978846
    %v2984 = vmul.f32 %v2968, 0.7978846
    %v2985 = vmul.f32 %v2969, 0.7978846
    %v2986 = vmul.f32 %v2970, 0.7978846
    %v2987 = vtanh.pop %v2971
    %v2988 = vtanh.pop %v2972
    %v2989 = vtanh.pop %v2973
    %v2990 = vtanh.pop %v2974
    %v2991 = vtanh.pop %v2975
    %v2992 = vtanh.pop %v2976
    %v2993 = vtanh.pop %v2977
    %v2994 = vtanh.pop %v2978
    %v2995 = vtanh.pop %v2979
    %v2996 = vtanh.pop %v2980
    %v2997 = vtanh.pop %v2981
    %v2998 = vtanh.pop %v2982
    %v2999 = vtanh.pop %v2983
    %v3000 = vtanh.pop %v2984
    %v3001 = vtanh.pop %v2985
    %v3002 = vtanh.pop %v2986
    %v3003 = vadd.f32 %v2987, 1.0
    %v3004 = vadd.f32 %v2988, 1.0
    %v3005 = vadd.f32 %v2989, 1.0
    %v3006 = vadd.f32 %v2990, 1.0
    %v3007 = vadd.f32 %v2991, 1.0
    %v3008 = vadd.f32 %v2992, 1.0
    %v3009 = vadd.f32 %v2993, 1.0
    %v3010 = vadd.f32 %v2994, 1.0
    %v3011 = vadd.f32 %v2995, 1.0
    %v3012 = vadd.f32 %v2996, 1.0
    %v3013 = vadd.f32 %v2997, 1.0
    %v3014 = vadd.f32 %v2998, 1.0
    %v3015 = vadd.f32 %v2999, 1.0
    %v3016 = vadd.f32 %v3000, 1.0
    %v3017 = vadd.f32 %v3001, 1.0
    %v3018 = vadd.f32 %v3002, 1.0
    %v3019 = vmul.f32 %v3003, 0.5
    %v3020 = vmul.f32 %v3004, 0.5
    %v3021 = vmul.f32 %v3005, 0.5
    %v3022 = vmul.f32 %v3006, 0.5
    %v3023 = vmul.f32 %v3007, 0.5
    %v3024 = vmul.f32 %v3008, 0.5
    %v3025 = vmul.f32 %v3009, 0.5
    %v3026 = vmul.f32 %v3010, 0.5
    %v3027 = vmul.f32 %v3011, 0.5
    %v3028 = vmul.f32 %v3012, 0.5
    %v3029 = vmul.f32 %v3013, 0.5
    %v3030 = vmul.f32 %v3014, 0.5
    %v3031 = vmul.f32 %v3015, 0.5
    %v3032 = vmul.f32 %v3016, 0.5
    %v3033 = vmul.f32 %v3017, 0.5
    %v3034 = vmul.f32 %v3018, 0.5
    %v3035 = vmul.f32 %v2868, %v3019
    %v3036 = vmul.f32 %v2870, %v3020
    %v3037 = vmul.f32 %v2873, %v3021
    %v3038 = vmul.f32 %v2875, %v3022
    %v3039 = vmul.f32 %v2878, %v3023
    %v3040 = vmul.f32 %v2880, %v3024
    %v3041 = vmul.f32 %v2883, %v3025
    %v3042 = vmul.f32 %v2885, %v3026
    %v3043 = vmul.f32 %v2888, %v3027
    %v3044 = vmul.f32 %v2890, %v3028
    %v3045 = vmul.f32 %v2893, %v3029
    %v3046 = vmul.f32 %v2895, %v3030
    %v3047 = vmul.f32 %v2898, %v3031
    %v3048 = vmul.f32 %v2900, %v3032
    %v3049 = vmul.f32 %v2903, %v3033
    %v3050 = vmul.f32 %v2905, %v3034
    %v3051 = vpack.c.bf16 %v3036, %v3035
    %v3052 = vpack.c.bf16 %v3038, %v3037
    %v3053 = vpack.c.bf16 %v3040, %v3039
    %v3054 = vpack.c.bf16 %v3042, %v3041
    %v3055 = vpack.c.bf16 %v3044, %v3043
    %v3056 = vpack.c.bf16 %v3046, %v3045
    %v3057 = vpack.c.bf16 %v3048, %v3047
    %v3058 = vpack.c.bf16 %v3050, %v3049
    %v3059 = vld [vmem:[%s8] sm:$0xf]
    %v3060 = vld [vmem:[%s8 + $0x4] sm:$0xf]
    %v3061 = vld [vmem:[%s8 + $0x8] sm:$0xf]
    %v3062 = vld [vmem:[%s8 + $0xc] sm:$0xf]
    %v3063 = vld [vmem:[%s8 + $0x10] sm:$0xf]
    %v3064 = vld [vmem:[%s8 + $0x14] sm:$0xf]
    %v3065 = vld [vmem:[%s8 + $0x18] sm:$0xf]
    %v3066 = vld [vmem:[%s8 + $0x1c] sm:$0xf]
    %v3067 = vld [vmem:[%s8 + $0x20] sm:$0xf]
    %v3068 = vld [vmem:[%s8 + $0x24] sm:$0xf]
    %v3069 = vld [vmem:[%s8 + $0x28] sm:$0xf]
    %v3070 = vld [vmem:[%s8 + $0x2c] sm:$0xf]
    %v3071 = vld [vmem:[%s8 + $0x30] sm:$0xf]
    %v3072 = vld [vmem:[%s8 + $0x34] sm:$0xf]
    %v3073 = vld [vmem:[%s8 + $0x38] sm:$0xf]
    %v3074 = vld [vmem:[%s8 + $0x3c] sm:$0xf]
    %v3075 = vld [vmem:[%s9] sm:$0x1]
    %v3077 = vperm.slane %v3075, 0
    %v3095 = vunpack.c.l.b16 %v3059
    %v3096 = vunpack.c.l.b16 %v3060
    %v3097 = vunpack.c.l.b16 %v3061
    %v3098 = vunpack.c.l.b16 %v3062
    %v3099 = vunpack.c.l.b16 %v3063
    %v3100 = vunpack.c.l.b16 %v3064
    %v3101 = vunpack.c.l.b16 %v3065
    %v3102 = vunpack.c.l.b16 %v3066
    %v3103 = vunpack.c.l.b16 %v3067
    %v3104 = vunpack.c.l.b16 %v3068
    %v3105 = vunpack.c.l.b16 %v3069
    %v3106 = vunpack.c.l.b16 %v3070
    %v3107 = vunpack.c.l.b16 %v3071
    %v3108 = vunpack.c.l.b16 %v3072
    %v3109 = vunpack.c.l.b16 %v3073
    %v3110 = vunpack.c.l.b16 %v3074
    %v3111 = vpack.c.b16 %v3096, %v3095
    %v3112 = vpack.c.b16 %v3098, %v3097
    %v3113 = vpack.c.b16 %v3100, %v3099
    %v3114 = vpack.c.b16 %v3102, %v3101
    %v3115 = vpack.c.b16 %v3104, %v3103
    %v3116 = vpack.c.b16 %v3106, %v3105
    %v3117 = vpack.c.b16 %v3108, %v3107
    %v3118 = vpack.c.b16 %v3110, %v3109
    %3127 = vmatpush.bf16.msra.mxu0 %v3118
    %3128 = vmatpush.bf16.msra.mxu0 %v3117
    %3129 = vmatpush.bf16.msra.mxu0 %v3116
    %3130 = vmatpush.bf16.msra.mxu0 %v3115
    %3131 = vmatpush.bf16.msra.mxu0 %v3114
    %3132 = vmatpush.bf16.msra.mxu0 %v3113
    %3133 = vmatpush.bf16.msra.mxu0 %v3112
    %3134 = vmatpush.bf16.msra.mxu0 %v3111
    %3135 = vmatmul.bf16.gmra.mxu0 %v3051
    %v3136 = vpop.f32.mrf.mxu0
    %v3137 = vadd.f32 %v3077, %v3136
    %v3138 = vpop.f32.mrf.mxu0
    %v3139 = vadd.f32 %v3077, %v3138
    %3140 = vmatmul.bf16.gmra.mxu0 %v3052
    %v3141 = vpop.f32.mrf.mxu0
    %v3142 = vadd.f32 %v3077, %v3141
    %v3143 = vpop.f32.mrf.mxu0
    %v3144 = vadd.f32 %v3077, %v3143
    %3145 = vmatmul.bf16.gmra.mxu0 %v3053
    %v3146 = vpop.f32.mrf.mxu0
    %v3147 = vadd.f32 %v3077, %v3146
    %v3148 = vpop.f32.mrf.mxu0
    %v3149 = vadd.f32 %v3077, %v3148
    %3150 = vmatmul.bf16.gmra.mxu0 %v3054
    %v3151 = vpop.f32.mrf.mxu0
    %v3152 = vadd.f32 %v3077, %v3151
    %v3153 = vpop.f32.mrf.mxu0
    %v3154 = vadd.f32 %v3077, %v3153
    %3155 = vmatmul.bf16.gmra.mxu0 %v3055
    %v3156 = vpop.f32.mrf.mxu0
    %v3157 = vadd.f32 %v3077, %v3156
    %v3158 = vpop.f32.mrf.mxu0
    %v3159 = vadd.f32 %v3077, %v3158
    %3160 = vmatmul.bf16.gmra.mxu0 %v3056
    %v3161 = vpop.f32.mrf.mxu0
    %v3162 = vadd.f32 %v3077, %v3161
    %v3163 = vpop.f32.mrf.mxu0
    %v3164 = vadd.f32 %v3077, %v3163
    %3165 = vmatmul.bf16.gmra.mxu0 %v3057
    %v3166 = vpop.f32.mrf.mxu0
    %v3167 = vadd.f32 %v3077, %v3166
    %v3168 = vpop.f32.mrf.mxu0
    %v3169 = vadd.f32 %v3077, %v3168
    %3170 = vmatmul.bf16.gmra.mxu0 %v3058
    %v3171 = vpop.f32.mrf.mxu0
    %v3172 = vadd.f32 %v3077, %v3171
    %v3173 = vpop.f32.mrf.mxu0
    %v3174 = vadd.f32 %v3077, %v3173
    %3175 = vdwg.mxu0
    %v3176 = vadd.f32 %v2438, %v3137
    %v3177 = vadd.f32 %v2439, %v3139
    %v3178 = vadd.f32 %v2440, %v3142
    %v3179 = vadd.f32 %v2441, %v3144
    %v3180 = vadd.f32 %v2442, %v3147
    %v3181 = vadd.f32 %v2443, %v3149
    %v3182 = vadd.f32 %v2444, %v3152
    %v3183 = vadd.f32 %v2445, %v3154
    %v3184 = vadd.f32 %v2446, %v3157
    %v3185 = vadd.f32 %v2447, %v3159
    %v3186 = vadd.f32 %v2448, %v3162
    %v3187 = vadd.f32 %v2449, %v3164
    %v3188 = vadd.f32 %v2450, %v3167
    %v3189 = vadd.f32 %v2451, %v3169
    %v3190 = vadd.f32 %v2452, %v3172
    %v3191 = vadd.f32 %v2453, %v3174
    %3192 = vst.msk [vmem:[%s10] sm:$0xff] %vm68, %v3176
    %3193 = vst.msk [vmem:[%s10 + $0x8] sm:$0xff] %vm68, %v3177
    %3194 = vst.msk [vmem:[%s10 + $0x10] sm:$0xff] %vm68, %v3178
    %3195 = vst.msk [vmem:[%s10 + $0x18] sm:$0xff] %vm68, %v3179
    %3196 = vst.msk [vmem:[%s10 + $0x20] sm:$0xff] %vm68, %v3180
    %3197 = vst.msk [vmem:[%s10 + $0x28] sm:$0xff] %vm68, %v3181
    %3198 = vst.msk [vmem:[%s10 + $0x30] sm:$0xff] %vm68, %v3182
    %3199 = vst.msk [vmem:[%s10 + $0x38] sm:$0xff] %vm68, %v3183
    %3200 = vst.msk [vmem:[%s10 + $0x40] sm:$0xff] %vm68, %v3184
    %3201 = vst.msk [vmem:[%s10 + $0x48] sm:$0xff] %vm68, %v3185
    %3202 = vst.msk [vmem:[%s10 + $0x50] sm:$0xff] %vm68, %v3186
    %3203 = vst.msk [vmem:[%s10 + $0x58] sm:$0xff] %vm68, %v3187
    %3204 = vst.msk [vmem:[%s10 + $0x60] sm:$0xff] %vm68, %v3188
    %3205 = vst.msk [vmem:[%s10 + $0x68] sm:$0xff] %vm68, %v3189
    %3206 = vst.msk [vmem:[%s10 + $0x70] sm:$0xff] %vm68, %v3190
    %3207 = vst.msk [vmem:[%s10 + $0x78] sm:$0xff] %vm68, %v3191
    // Predicated region
    $region46: #{tpu_custom_call.1} parent=1 // pred_check
      _
    $region47: #{tpu_custom_call.1} parent=1 // pred_check_branch
      %3209 = sbr.rel (0) target = $region49
    $region48: #{tpu_custom_call.1} parent=1 // pred_region
      _
    $region49: #{tpu_custom_call.1} parent=1 // pred_fallthru
      _
    // Predicated region
    $region50: #{tpu_custom_call.1} parent=1 // pred_check
      _
    $region51: #{tpu_custom_call.1} parent=1 // pred_check_branch
      %3211 = sbr.rel (0) target = $region53
    $region52: #{tpu_custom_call.1} parent=1 // pred_region
      _
    $region53: #{tpu_custom_call.1} parent=1 // pred_fallthru
      _
    %3212 = vsyncpa [#allocation3], 1

</llo_original>
